<compile_context>
chip_gen: v7x
topology: tpu7x:2x2x1
jax: 0.10.0
libtpu: 0.0.40
codegen_flags: <defaults>
</compile_context>

<pallas_src>
import functools

import jax
import jax.numpy as jnp
from jax import lax
from jax.experimental import pallas as pl
from jax.experimental.pallas import tpu as pltpu

IN_FEATURES = 130
K_MXU = 128                 # MXU part of layer-1 K; last 2 columns go to the VPU
H1, H2, H3, OUT = 60, 30, 10, 2


def _round_up(n, m):
    return ((n + m - 1) // m) * m


def mlp_kernel(x_ref, w1a_ref, w1b_ref, w2_ref, b2_ref, w3_ref, b3_ref,
               w4_ref, b4_ref, o_ref, *, precision):
    cdt = w1a_ref.dtype                       # MXU operand dtype (bf16 default)

    # ---- hidden1: Linear(130 -> 60, bias=False) + ReLU ---------------------
    # MXU handles the first 128 K-columns; the remaining 2 columns are a
    # rank-2 correction done in f32 on the VPU (idle VALU slots).
    h = jnp.dot(x_ref[:, :K_MXU].astype(cdt), w1a_ref[...],
                preferred_element_type=jnp.float32, precision=precision)
    h += x_ref[:, K_MXU:K_MXU + 1].astype(jnp.float32) * w1b_ref[0:1, :]
    h += x_ref[:, K_MXU + 1:K_MXU + 2].astype(jnp.float32) * w1b_ref[1:2, :]
    h = jnp.maximum(h, 0.0)

    # ---- hidden2: Linear(60 -> 30) + ReLU ----------------------------------
    h = jnp.dot(h.astype(cdt), w2_ref[...],
                preferred_element_type=jnp.float32, precision=precision)
    h = jnp.maximum(h + b2_ref[...], 0.0)

    # ---- hidden3: Linear(30 -> 10) + ReLU ----------------------------------
    h = jnp.dot(h.astype(cdt), w3_ref[...],
                preferred_element_type=jnp.float32, precision=precision)
    h = jnp.maximum(h + b3_ref[...], 0.0)

    # ---- hidden4: Linear(10 -> 2) + Sigmoid, computed transposed -----------
    # (2,10) contracted with (tb,10) -> (2, tb): lane-dense store (tb is a
    # multiple of 128) instead of a 2-lane masked vst.
    out = lax.dot_general(w4_ref[...], h.astype(cdt),
                          dimension_numbers=(((1,), (1,)), ((), ())),
                          preferred_element_type=jnp.float32,
                          precision=precision)
    out = out + b4_ref[...]                   # b4 is (2, 1) -> lane broadcast
    o_ref[...] = jax.nn.sigmoid(out).astype(o_ref.dtype)


def prepare_params(params, weight_dtype=jnp.bfloat16):
    """One-time conversion from PyTorch (out, in) layout to kernel layout."""
    w1 = jnp.asarray(params["w1"], jnp.float32).T                      # (130, 60)
    return {
        "w1a": w1[:K_MXU, :].astype(weight_dtype),                     # (128, 60) MXU
        "w1b": w1[K_MXU:, :],                                          # (2, 60) VPU, f32
        "w2": jnp.asarray(params["w2"], jnp.float32).T.astype(weight_dtype),  # (60, 30)
        "b2": jnp.asarray(params["b2"], jnp.float32).reshape(1, H2),
        "w3": jnp.asarray(params["w3"], jnp.float32).T.astype(weight_dtype),  # (30, 10)
        "b3": jnp.asarray(params["b3"], jnp.float32).reshape(1, H3),
        "w4": jnp.asarray(params["w4"], jnp.float32).astype(weight_dtype),    # (2, 10)
        "b4": jnp.asarray(params["b4"], jnp.float32).reshape(OUT, 1),
    }


def _vmem_padded_bytes(rows, cols, dtype):
    itemsize = jnp.dtype(dtype).itemsize
    sub = max(1, 32 // itemsize)              # f32 -> 8 sublanes, bf16 -> 16
    return _round_up(rows, sub) * _round_up(cols, 128) * itemsize


def my_mlp_forward(x, kparams, *, tile_b=2048, precision=None):
    """x: (B, 130) f32 or bf16 (left untouched in HBM).  Returns (B, 2) f32."""
    B, F = x.shape
    assert F == IN_FEATURES
    w_dtype = kparams["w1a"].dtype
    if precision is None:
        # f32 MXU operands need explicit precision (default decomposes to a
        # single lossy bf16 pass); bf16 operands are single-pass regardless.
        precision = (lax.Precision.HIGHEST if w_dtype == jnp.float32
                     else lax.Precision.DEFAULT)

    # Batch tile: multiple of 128 (lane-dense transposed output), large enough
    # to amortise per-step pipeline overhead, capped to ceil(B/2) so the grid
    # has >= 2 steps and the "parallel" axis can use both v7x TensorCores.
    tile_b = max(128, _round_up(tile_b, 128))
    tb = min(tile_b, _round_up(pl.cdiv(B, 2), 128))
    grid = (pl.cdiv(B, tb),)

    x_itemsize = jnp.dtype(x.dtype).itemsize
    weights_vmem = sum(_vmem_padded_bytes(v.shape[0], v.shape[1], v.dtype)
                       for v in kparams.values())
    x_tile = _vmem_padded_bytes(tb, IN_FEATURES, x.dtype)      # 130 -> 256 lanes
    out_tile = _vmem_padded_bytes(OUT, tb, jnp.float32)
    interm = 6 * tb * 128 * 4                 # f32/bf16 activations + temps
    vmem_limit = int(min(2 * (x_tile + out_tile) + 2 * weights_vmem
                         + interm + (2 << 20),
                         60 << 20))           # headroom vs v7x's 64 MiB physical

    cost = pl.CostEstimate(
        flops=2 * B * (IN_FEATURES * H1 + H1 * H2 + H2 * H3 + H3 * OUT),
        transcendentals=2 * B * OUT,          # sigmoid = exp + reciprocal
        bytes_accessed=B * IN_FEATURES * x_itemsize
        + sum(int(v.size) * v.dtype.itemsize for v in kparams.values())
        + B * OUT * 4,
    )

    in_specs = [
        # x: streamed (tb, 130) blocks; trailing partial block handled by Pallas.
        pl.BlockSpec((tb, IN_FEATURES), lambda i: (i, 0)),
        # Weights / biases: constant index_map -> fetched once, stay resident.
        pl.BlockSpec((K_MXU, H1), lambda i: (0, 0)),
        pl.BlockSpec((2, H1), lambda i: (0, 0)),
        pl.BlockSpec((H1, H2), lambda i: (0, 0)),
        pl.BlockSpec((1, H2), lambda i: (0, 0)),
        pl.BlockSpec((H2, H3), lambda i: (0, 0)),
        pl.BlockSpec((1, H3), lambda i: (0, 0)),
        pl.BlockSpec((OUT, H3), lambda i: (0, 0)),
        pl.BlockSpec((OUT, 1), lambda i: (0, 0)),
    ]

    out_t = pl.pallas_call(
        functools.partial(mlp_kernel, precision=precision),
        out_shape=jax.ShapeDtypeStruct((OUT, B), jnp.float32),
        grid=grid,
        in_specs=in_specs,
        out_specs=pl.BlockSpec((OUT, tb), lambda i: (0, i)),
        compiler_params=pltpu.CompilerParams(
            dimension_semantics=("parallel",),
            vmem_limit_bytes=vmem_limit),
        cost_estimate=cost,
    )(x, kparams["w1a"], kparams["w1b"], kparams["w2"], kparams["b2"],
      kparams["w3"], kparams["b3"], kparams["w4"], kparams["b4"])

    # (2, B) -> (B, 2); the tiny transpose is plain XLA outside the kernel.
    return out_t.T


def init_params(key):
    """Deterministic init matching myMLP.__init__ shapes (PyTorch (out,in) layout)."""
    ks = jax.random.split(key, 7)

    def u(k, shape, fan_in):
        bound = 1.0 / jnp.sqrt(fan_in)
        return jax.random.uniform(k, shape, jnp.float32, -bound, bound)

    return {
        "w1": u(ks[0], (H1, IN_FEATURES), IN_FEATURES),   # Linear(130, 60, bias=False)
        "w2": u(ks[1], (H2, H1), H1),                     # Linear(60, 30)
        "b2": u(ks[2], (H2,), H1),
        "w3": u(ks[3], (H3, H2), H2),                     # Linear(30, 10)
        "b3": u(ks[4], (H3,), H2),
        "w4": u(ks[5], (OUT, H3), H3),                    # Linear(10, 2)
        "b4": u(ks[6], (OUT,), H3),
    }


def reference_forward(x, p):
    """Pure-JAX reference mirroring the PyTorch forward (f32, HIGHEST precision)."""
    hp = lax.Precision.HIGHEST
    x = x.astype(jnp.float32)
    h = jnp.maximum(jnp.dot(x, p["w1"].T, precision=hp), 0.0)
    h = jnp.maximum(jnp.dot(h, p["w2"].T, precision=hp) + p["b2"], 0.0)
    h = jnp.maximum(jnp.dot(h, p["w3"].T, precision=hp) + p["b3"], 0.0)
    h = jnp.dot(h, p["w4"].T, precision=hp) + p["b4"]
    return jax.nn.sigmoid(h)


if __name__ == "__main__":
    key = jax.random.PRNGKey(0)
    k_param, k_x = jax.random.split(key)
    params = init_params(k_param)

    # f32-operand path (HIGHEST precision): B=200 -> tb=128, grid=(2,) with a
    # partial trailing block (128 + 72 rows), no wrapper pad/astype copies.
    B1 = 200
    x1 = jax.random.normal(jax.random.fold_in(k_x, 0), (B1, IN_FEATURES), jnp.float32)
    kp_f32 = prepare_params(params, jnp.float32)
    out1 = jax.block_until_ready(my_mlp_forward(x1, kp_f32))
    ref1 = reference_forward(x1, params)
    assert out1.shape == (B1, OUT)
    assert jnp.allclose(out1, ref1, atol=1e-5, rtol=1e-5), "f32 mismatch vs reference"

    # Default bf16 MXU-operand path (f32 accumulation, f32 biases, f32 rank-2
    # layer-1 correction).  Activations are quantized to bf16 between layers,
    # so tolerance is looser than the f32 path.
    B2 = 384
    x2 = jax.random.normal(jax.random.fold_in(k_x, 1), (B2, IN_FEATURES), jnp.float32)
    kp_bf16 = prepare_params(params)                      # bf16 by default
    out2 = jax.block_until_ready(my_mlp_forward(x2, kp_bf16))
    ref2 = reference_forward(x2, params)
    assert out2.shape == (B2, OUT)
    assert jnp.allclose(out2, ref2, atol=2e-2), "bf16 mismatch vs f32 reference"

    print("KERNEL_OK")
</pallas_src>

<mosaic_0001>
module attributes {stable_mosaic.version = 11 : i64} {
  func.func @mlp_kernel(%arg0: i32, %arg1: memref<128x130xf32, #tpu.memory_space<vmem>>, %arg2: memref<128x60xf32, #tpu.memory_space<vmem>>, %arg3: memref<2x60xf32, #tpu.memory_space<vmem>>, %arg4: memref<60x30xf32, #tpu.memory_space<vmem>>, %arg5: memref<1x30xf32, #tpu.memory_space<vmem>>, %arg6: memref<30x10xf32, #tpu.memory_space<vmem>>, %arg7: memref<1x10xf32, #tpu.memory_space<vmem>>, %arg8: memref<2x10xf32, #tpu.memory_space<vmem>>, %arg9: memref<2x1xf32, #tpu.memory_space<vmem>>, %arg10: memref<2x128xf32, #tpu.memory_space<vmem>>) attributes {dimension_semantics = [#tpu.dimension_semantics<parallel>], iteration_bounds = array<i64: 2>, scalar_prefetch = 0 : i64, scratch_operands = 0 : i64, tpu.core_type = #tpu.core_type<tc>, window_params = [{transform_indices = @transform_0, window_bounds = array<i64: 128, 130>}, {pipeline_mode = #tpu.pipeline_mode<synchronous>, transform_indices = @transform_1, window_bounds = array<i64: 128, 60>}, {pipeline_mode = #tpu.pipeline_mode<synchronous>, transform_indices = @transform_2, window_bounds = array<i64: 2, 60>}, {pipeline_mode = #tpu.pipeline_mode<synchronous>, transform_indices = @transform_3, window_bounds = array<i64: 60, 30>}, {pipeline_mode = #tpu.pipeline_mode<synchronous>, transform_indices = @transform_4, window_bounds = array<i64: 1, 30>}, {pipeline_mode = #tpu.pipeline_mode<synchronous>, transform_indices = @transform_5, window_bounds = array<i64: 30, 10>}, {pipeline_mode = #tpu.pipeline_mode<synchronous>, transform_indices = @transform_6, window_bounds = array<i64: 1, 10>}, {pipeline_mode = #tpu.pipeline_mode<synchronous>, transform_indices = @transform_7, window_bounds = array<i64: 2, 10>}, {pipeline_mode = #tpu.pipeline_mode<synchronous>, transform_indices = @transform_8, window_bounds = array<i64: 2, 1>}, {transform_indices = @transform_9, window_bounds = array<i64: 2, 128>}]} {
    %c0 = arith.constant 0 : index
    %c0_0 = arith.constant 0 : index
    %0 = vector.load %arg1[%c0, %c0_0] : memref<128x130xf32, #tpu.memory_space<vmem>>, vector<128x128xf32>
    %c0_1 = arith.constant 0 : index
    %c0_2 = arith.constant 0 : index
    %1 = vector.load %arg2[%c0_1, %c0_2] : memref<128x60xf32, #tpu.memory_space<vmem>>, vector<128x60xf32>
    %cst = arith.constant dense<0.000000e+00> : vector<128x60xf32>
    %2 = tpu.matmul %0, %1, %cst {dimension_numbers = #tpu.dot_dimension_numbers<[1], [0], [0], [1], [0, 0, 1, 1], [], []>, precision = #tpu.contract_precision<fp32>} : vector<128x128xf32>, vector<128x60xf32>, vector<128x60xf32> -> vector<128x60xf32>
    %c0_3 = arith.constant 0 : index
    %c128 = arith.constant 128 : index
    %3 = vector.load %arg1[%c0_3, %c128] : memref<128x130xf32, #tpu.memory_space<vmem>>, vector<128x1xf32>
    %c0_4 = arith.constant 0 : index
    %c0_5 = arith.constant 0 : index
    %4 = vector.load %arg3[%c0_4, %c0_5] : memref<2x60xf32, #tpu.memory_space<vmem>>, vector<1x60xf32>
    %5 = vector.broadcast %3 : vector<128x1xf32> to vector<128x60xf32>
    %6 = vector.broadcast %4 : vector<1x60xf32> to vector<128x60xf32>
    %7 = arith.mulf %5, %6 : vector<128x60xf32>
    %8 = arith.addf %2, %7 : vector<128x60xf32>
    %c0_6 = arith.constant 0 : index
    %c129 = arith.constant 129 : index
    %9 = vector.load %arg1[%c0_6, %c129] : memref<128x130xf32, #tpu.memory_space<vmem>>, vector<128x1xf32>
    %c1 = arith.constant 1 : index
    %c0_7 = arith.constant 0 : index
    %10 = vector.load %arg3[%c1, %c0_7] : memref<2x60xf32, #tpu.memory_space<vmem>>, vector<1x60xf32>
    %11 = vector.broadcast %9 : vector<128x1xf32> to vector<128x60xf32>
    %12 = vector.broadcast %10 : vector<1x60xf32> to vector<128x60xf32>
    %13 = arith.mulf %11, %12 : vector<128x60xf32>
    %14 = arith.addf %8, %13 : vector<128x60xf32>
    %cst_8 = arith.constant 0.000000e+00 : f32
    %15 = vector.broadcast %cst_8 : f32 to vector<128x60xf32>
    %16 = arith.maximumf %14, %15 : vector<128x60xf32>
    %c0_9 = arith.constant 0 : index
    %c0_10 = arith.constant 0 : index
    %17 = vector.load %arg4[%c0_9, %c0_10] : memref<60x30xf32, #tpu.memory_space<vmem>>, vector<60x30xf32>
    %cst_11 = arith.constant dense<0.000000e+00> : vector<128x30xf32>
    %18 = tpu.matmul %16, %17, %cst_11 {dimension_numbers = #tpu.dot_dimension_numbers<[1], [0], [0], [1], [0, 0, 1, 1], [], []>, precision = #tpu.contract_precision<fp32>} : vector<128x60xf32>, vector<60x30xf32>, vector<128x30xf32> -> vector<128x30xf32>
    %c0_12 = arith.constant 0 : index
    %c0_13 = arith.constant 0 : index
    %19 = vector.load %arg5[%c0_12, %c0_13] : memref<1x30xf32, #tpu.memory_space<vmem>>, vector<1x30xf32>
    %20 = vector.broadcast %19 : vector<1x30xf32> to vector<128x30xf32>
    %21 = arith.addf %18, %20 : vector<128x30xf32>
    %cst_14 = arith.constant 0.000000e+00 : f32
    %22 = vector.broadcast %cst_14 : f32 to vector<128x30xf32>
    %23 = arith.maximumf %21, %22 : vector<128x30xf32>
    %c0_15 = arith.constant 0 : index
    %c0_16 = arith.constant 0 : index
    %24 = vector.load %arg6[%c0_15, %c0_16] : memref<30x10xf32, #tpu.memory_space<vmem>>, vector<30x10xf32>
    %cst_17 = arith.constant dense<0.000000e+00> : vector<128x10xf32>
    %25 = tpu.matmul %23, %24, %cst_17 {dimension_numbers = #tpu.dot_dimension_numbers<[1], [0], [0], [1], [0, 0, 1, 1], [], []>, precision = #tpu.contract_precision<fp32>} : vector<128x30xf32>, vector<30x10xf32>, vector<128x10xf32> -> vector<128x10xf32>
    %c0_18 = arith.constant 0 : index
    %c0_19 = arith.constant 0 : index
    %26 = vector.load %arg7[%c0_18, %c0_19] : memref<1x10xf32, #tpu.memory_space<vmem>>, vector<1x10xf32>
    %27 = vector.broadcast %26 : vector<1x10xf32> to vector<128x10xf32>
    %28 = arith.addf %25, %27 : vector<128x10xf32>
    %cst_20 = arith.constant 0.000000e+00 : f32
    %29 = vector.broadcast %cst_20 : f32 to vector<128x10xf32>
    %30 = arith.maximumf %28, %29 : vector<128x10xf32>
    %c0_21 = arith.constant 0 : index
    %c0_22 = arith.constant 0 : index
    %31 = vector.load %arg8[%c0_21, %c0_22] : memref<2x10xf32, #tpu.memory_space<vmem>>, vector<2x10xf32>
    %cst_23 = arith.constant dense<0.000000e+00> : vector<2x128xf32>
    %32 = tpu.matmul %31, %30, %cst_23 {dimension_numbers = #tpu.dot_dimension_numbers<[1], [1], [0], [0], [0, 0, 1, 0], [], []>, precision = #tpu.contract_precision<fp32>} : vector<2x10xf32>, vector<128x10xf32>, vector<2x128xf32> -> vector<2x128xf32>
    %c0_24 = arith.constant 0 : index
    %c0_25 = arith.constant 0 : index
    %33 = vector.load %arg9[%c0_24, %c0_25] : memref<2x1xf32, #tpu.memory_space<vmem>>, vector<2x1xf32>
    %34 = vector.broadcast %33 : vector<2x1xf32> to vector<2x128xf32>
    %35 = arith.addf %32, %34 : vector<2x128xf32>
    %36 = arith.negf %35 : vector<2x128xf32>
    %37 = math.exp %36 : vector<2x128xf32>
    %cst_26 = arith.constant 1.000000e+00 : f32
    %38 = vector.broadcast %cst_26 : f32 to vector<2x128xf32>
    %39 = arith.addf %38, %37 : vector<2x128xf32>
    %40 = arith.divf %38, %39 : vector<2x128xf32>
    %c0_27 = arith.constant 0 : index
    %c0_28 = arith.constant 0 : index
    %41 = vector.load %arg10[%c0_27, %c0_28] : memref<2x128xf32, #tpu.memory_space<vmem>>, vector<2x128xf32>
    tpu.vector_store %arg10[%c0_27, %c0_28], %40 {strides = array<i32>} : memref<2x128xf32, #tpu.memory_space<vmem>>, vector<2x128xf32>,
    return
  }
  func.func @transform_0(%arg0: i32) -> (i32, i32) {
    %c0_i32 = arith.constant 0 : i32
    %c0_i32_0 = arith.constant 0 : i32
    return %arg0, %c0_i32 : i32, i32
  }
  func.func @transform_1(%arg0: i32) -> (i32, i32) {
    %c0_i32 = arith.constant 0 : i32
    %c0_i32_0 = arith.constant 0 : i32
    %c0_i32_1 = arith.constant 0 : i32
    return %c0_i32, %c0_i32_0 : i32, i32
  }
  func.func @transform_2(%arg0: i32) -> (i32, i32) {
    %c0_i32 = arith.constant 0 : i32
    %c0_i32_0 = arith.constant 0 : i32
    %c0_i32_1 = arith.constant 0 : i32
    return %c0_i32, %c0_i32_0 : i32, i32
  }
  func.func @transform_3(%arg0: i32) -> (i32, i32) {
    %c0_i32 = arith.constant 0 : i32
    %c0_i32_0 = arith.constant 0 : i32
    %c0_i32_1 = arith.constant 0 : i32
    return %c0_i32, %c0_i32_0 : i32, i32
  }
  func.func @transform_4(%arg0: i32) -> (i32, i32) {
    %c0_i32 = arith.constant 0 : i32
    %c0_i32_0 = arith.constant 0 : i32
    %c0_i32_1 = arith.constant 0 : i32
    return %c0_i32, %c0_i32_0 : i32, i32
  }
  func.func @transform_5(%arg0: i32) -> (i32, i32) {
    %c0_i32 = arith.constant 0 : i32
    %c0_i32_0 = arith.constant 0 : i32
    %c0_i32_1 = arith.constant 0 : i32
    return %c0_i32, %c0_i32_0 : i32, i32
  }
  func.func @transform_6(%arg0: i32) -> (i32, i32) {
    %c0_i32 = arith.constant 0 : i32
    %c0_i32_0 = arith.constant 0 : i32
    %c0_i32_1 = arith.constant 0 : i32
    return %c0_i32, %c0_i32_0 : i32, i32
  }
  func.func @transform_7(%arg0: i32) -> (i32, i32) {
    %c0_i32 = arith.constant 0 : i32
    %c0_i32_0 = arith.constant 0 : i32
    %c0_i32_1 = arith.constant 0 : i32
    return %c0_i32, %c0_i32_0 : i32, i32
  }
  func.func @transform_8(%arg0: i32) -> (i32, i32) {
    %c0_i32 = arith.constant 0 : i32
    %c0_i32_0 = arith.constant 0 : i32
    %c0_i32_1 = arith.constant 0 : i32
    return %c0_i32, %c0_i32_0 : i32, i32
  }
  func.func @transform_9(%arg0: i32) -> (i32, i32) {
    %c0_i32 = arith.constant 0 : i32
    %c0_i32_0 = arith.constant 0 : i32
    return %c0_i32, %arg0 : i32, i32
  }
}

</mosaic_0001>

<llo_original>
// kernel: tpu_custom_call.1
$region0: #{tpu_custom_call.1}
  #allocation0 [shape = 'u32[]', space=smem, size = 0x4, offset = 0x4, fixed_abs, tag = 'smem constant byte address 0x4 - core index']
  #allocation1 [shape = 'u32[144,128]{1,0:T(1,128)}', space=vmem, size = 0x12000, scoped, tag = 'internal scratch']
  %s0 = inlined_call_operand.vmem [shape: f32[200,130], index: 0, kind: input, shape index: {}]
  %s1 = inlined_call_operand.vmem [shape: f32[128,60], index: 1, kind: input, shape index: {}]
  %s2 = inlined_call_operand.vmem [shape: f32[2,60], index: 2, kind: input, shape index: {}]
  %s3 = inlined_call_operand.vmem [shape: f32[60,30], index: 3, kind: input, shape index: {}]
  %s4 = inlined_call_operand.vmem [shape: f32[1,30], index: 4, kind: input, shape index: {}]
  %s5 = inlined_call_operand.vmem [shape: f32[30,10], index: 5, kind: input, shape index: {}]
  %s6 = inlined_call_operand.vmem [shape: f32[1,10], index: 6, kind: input, shape index: {}]
  %s7 = inlined_call_operand.vmem [shape: f32[2,10], index: 7, kind: input, shape index: {}]
  %s8 = inlined_call_operand.vmem [shape: f32[2,1], index: 8, kind: input, shape index: {}]
  %s9 = inlined_call_operand.hbm [shape: f32[2,200], index: 9, kind: output, shape index: {}]
  %s10 = sld [smem:[#allocation0]]
  $region69: #{tpu_custom_call.1} parent=0
    _
  %s12 = ssub.s32 1, %s10
  %s13 = scalar_select 0, %s12, %s10
  $region1: #{tpu_custom_call.1} parent=0
    #allocation2 [shape = 'u8[2048]{0}', space=vmem, size = 0x800, scoped, tag = 'output window, operand 0']
    #allocation3 [shape = 's32[2]{0}', space=sflag, size = 0x8, scoped, tag = 'scoped memory for tpu_custom_call.1']
    %14 = vsyncpa [#allocation3], 0
    %s15 = scalar_lea.sflag [#allocation3], 1
    %16 = vsyncpa %s15, 0
    loop: start=0, step=1, limit=4
    $region2: #{tpu_custom_call.1} parent=1 // loop_pre_header
      _
    $region3: #{tpu_custom_call.1} parent=1 // loop_header
      %s18 = sphi 0, %s22
      %p19 = scmp.ge.s32.totalorder %s18, 4
      %s28 = sphi 0, %s30
      %s31 = sphi 0, %s28
      %s32 = sphi 0, %s31
      %s48 = sphi 0, %s32
      %s52 = sphi 0, %s52
      %s54 = sphi 0, %s52
      %s55 = sphi 0, %s54
      %s69 = sphi 0, %s55
      %s73 = sphi 0, %s73
      %s75 = sphi 0, %s73
      %s76 = sphi 0, %s75
      %s90 = sphi 0, %s76
      %s94 = sphi 0, %s94
      %s96 = sphi 0, %s94
      %s97 = sphi 0, %s96
      %s111 = sphi 0, %s97
      %s115 = sphi 0, %s115
      %s117 = sphi 0, %s115
      %s118 = sphi 0, %s117
      %s132 = sphi 0, %s118
      %s136 = sphi 0, %s136
      %s138 = sphi 0, %s136
      %s139 = sphi 0, %s138
      %s153 = sphi 0, %s139
      %s157 = sphi 0, %s157
      %s159 = sphi 0, %s157
      %s160 = sphi 0, %s159
      %s174 = sphi 0, %s160
      %s178 = sphi 0, %s178
      %s180 = sphi 0, %s178
      %s181 = sphi 0, %s180
      %s195 = sphi 0, %s181
      %s199 = sphi 0, %s199
      %s201 = sphi 0, %s199
      %s202 = sphi 0, %s201
      %s216 = sphi 0, %s202
      %s222 = sphi 0, %s224
      %s225 = sphi 0, %s222
      %s226 = sphi 0, %s225
      %s242 = sphi 0, %s226
    $region4: #{tpu_custom_call.1} parent=1 // loop_header_branch
      %21 = sbr.rel (%p19) target = $region8
    $region5: #{tpu_custom_call.1} parent=1 // loop_body
      %s23 = ssub.s32 %s18, 1
      %s24 = ssub.s32 %s18, 2
      %s25 = sadd.s32 %s18, 1
      %s26 = ssub.s32 %s18, %s25
      %p27 = scmp.eq.s32.totalorder %s26, 0
      %s29 = sadd.s32 %s28, 1
      %s30 = scalar_select %p27, %s28, %s29
      %p33 = pneg %p27
      %p34 = scmp.eq.s32.totalorder %s18, 1
      %p35 = por %p33, %p34
      %p36 = scmp.ne.s32.totalorder %s28, %s31
      %p37 = scmp.eq.s32.totalorder %s18, 0
      %p38 = por %p36, %p37
      %p39 = scmp.ne.s32.totalorder %s28, %s31
      %p40 = scmp.eq.s32.totalorder %s23, 1
      %p41 = por %p39, %p40
      %p42 = scmp.ne.s32.totalorder %s31, %s32
      %p43 = scmp.eq.s32.totalorder %s23, 0
      %p44 = por %p42, %p43
      %p45 = scmp.ne.s32.totalorder %s31, %s32
      %p46 = scmp.eq.s32.totalorder %s24, 1
      %p47 = por %p45, %p46
      %p49 = scmp.ne.s32.totalorder %s32, %s48
      %p50 = scmp.eq.s32.totalorder %s24, 0
      %p51 = por %p49, %p50
      %s53 = sadd.s32 %s52, 1
      %p56 = scmp.eq.s32.totalorder %s18, 1
      %p57 = scmp.ne.s32.totalorder %s52, %s54
      %p58 = scmp.eq.s32.totalorder %s18, 0
      %p59 = por %p57, %p58
      %p60 = scmp.ne.s32.totalorder %s52, %s54
      %p61 = scmp.eq.s32.totalorder %s23, 1
      %p62 = por %p60, %p61
      %p63 = scmp.ne.s32.totalorder %s54, %s55
      %p64 = scmp.eq.s32.totalorder %s23, 0
      %p65 = por %p63, %p64
      %p66 = scmp.ne.s32.totalorder %s54, %s55
      %p67 = scmp.eq.s32.totalorder %s24, 1
      %p68 = por %p66, %p67
      %p70 = scmp.ne.s32.totalorder %s55, %s69
      %p71 = scmp.eq.s32.totalorder %s24, 0
      %p72 = por %p70, %p71
      %s74 = sadd.s32 %s73, 1
      %p77 = scmp.eq.s32.totalorder %s18, 1
      %p78 = scmp.ne.s32.totalorder %s73, %s75
      %p79 = scmp.eq.s32.totalorder %s18, 0
      %p80 = por %p78, %p79
      %p81 = scmp.ne.s32.totalorder %s73, %s75
      %p82 = scmp.eq.s32.totalorder %s23, 1
      %p83 = por %p81, %p82
      %p84 = scmp.ne.s32.totalorder %s75, %s76
      %p85 = scmp.eq.s32.totalorder %s23, 0
      %p86 = por %p84, %p85
      %p87 = scmp.ne.s32.totalorder %s75, %s76
      %p88 = scmp.eq.s32.totalorder %s24, 1
      %p89 = por %p87, %p88
      %p91 = scmp.ne.s32.totalorder %s76, %s90
      %p92 = scmp.eq.s32.totalorder %s24, 0
      %p93 = por %p91, %p92
      %s95 = sadd.s32 %s94, 1
      %p98 = scmp.eq.s32.totalorder %s18, 1
      %p99 = scmp.ne.s32.totalorder %s94, %s96
      %p100 = scmp.eq.s32.totalorder %s18, 0
      %p101 = por %p99, %p100
      %p102 = scmp.ne.s32.totalorder %s94, %s96
      %p103 = scmp.eq.s32.totalorder %s23, 1
      %p104 = por %p102, %p103
      %p105 = scmp.ne.s32.totalorder %s96, %s97
      %p106 = scmp.eq.s32.totalorder %s23, 0
      %p107 = por %p105, %p106
      %p108 = scmp.ne.s32.totalorder %s96, %s97
      %p109 = scmp.eq.s32.totalorder %s24, 1
      %p110 = por %p108, %p109
      %p112 = scmp.ne.s32.totalorder %s97, %s111
      %p113 = scmp.eq.s32.totalorder %s24, 0
      %p114 = por %p112, %p113
      %s116 = sadd.s32 %s115, 1
      %p119 = scmp.eq.s32.totalorder %s18, 1
      %p120 = scmp.ne.s32.totalorder %s115, %s117
      %p121 = scmp.eq.s32.totalorder %s18, 0
      %p122 = por %p120, %p121
      %p123 = scmp.ne.s32.totalorder %s115, %s117
      %p124 = scmp.eq.s32.totalorder %s23, 1
      %p125 = por %p123, %p124
      %p126 = scmp.ne.s32.totalorder %s117, %s118
      %p127 = scmp.eq.s32.totalorder %s23, 0
      %p128 = por %p126, %p127
      %p129 = scmp.ne.s32.totalorder %s117, %s118
      %p130 = scmp.eq.s32.totalorder %s24, 1
      %p131 = por %p129, %p130
      %p133 = scmp.ne.s32.totalorder %s118, %s132
      %p134 = scmp.eq.s32.totalorder %s24, 0
      %p135 = por %p133, %p134
      %s137 = sadd.s32 %s136, 1
      %p140 = scmp.eq.s32.totalorder %s18, 1
      %p141 = scmp.ne.s32.totalorder %s136, %s138
      %p142 = scmp.eq.s32.totalorder %s18, 0
      %p143 = por %p141, %p142
      %p144 = scmp.ne.s32.totalorder %s136, %s138
      %p145 = scmp.eq.s32.totalorder %s23, 1
      %p146 = por %p144, %p145
      %p147 = scmp.ne.s32.totalorder %s138, %s139
      %p148 = scmp.eq.s32.totalorder %s23, 0
      %p149 = por %p147, %p148
      %p150 = scmp.ne.s32.totalorder %s138, %s139
      %p151 = scmp.eq.s32.totalorder %s24, 1
      %p152 = por %p150, %p151
      %p154 = scmp.ne.s32.totalorder %s139, %s153
      %p155 = scmp.eq.s32.totalorder %s24, 0
      %p156 = por %p154, %p155
      %s158 = sadd.s32 %s157, 1
      %p161 = scmp.eq.s32.totalorder %s18, 1
      %p162 = scmp.ne.s32.totalorder %s157, %s159
      %p163 = scmp.eq.s32.totalorder %s18, 0
      %p164 = por %p162, %p163
      %p165 = scmp.ne.s32.totalorder %s157, %s159
      %p166 = scmp.eq.s32.totalorder %s23, 1
      %p167 = por %p165, %p166
      %p168 = scmp.ne.s32.totalorder %s159, %s160
      %p169 = scmp.eq.s32.totalorder %s23, 0
      %p170 = por %p168, %p169
      %p171 = scmp.ne.s32.totalorder %s159, %s160
      %p172 = scmp.eq.s32.totalorder %s24, 1
      %p173 = por %p171, %p172
      %p175 = scmp.ne.s32.totalorder %s160, %s174
      %p176 = scmp.eq.s32.totalorder %s24, 0
      %p177 = por %p175, %p176
      %s179 = sadd.s32 %s178, 1
      %p182 = scmp.eq.s32.totalorder %s18, 1
      %p183 = scmp.ne.s32.totalorder %s178, %s180
      %p184 = scmp.eq.s32.totalorder %s18, 0
      %p185 = por %p183, %p184
      %p186 = scmp.ne.s32.totalorder %s178, %s180
      %p187 = scmp.eq.s32.totalorder %s23, 1
      %p188 = por %p186, %p187
      %p189 = scmp.ne.s32.totalorder %s180, %s181
      %p190 = scmp.eq.s32.totalorder %s23, 0
      %p191 = por %p189, %p190
      %p192 = scmp.ne.s32.totalorder %s180, %s181
      %p193 = scmp.eq.s32.totalorder %s24, 1
      %p194 = por %p192, %p193
      %p196 = scmp.ne.s32.totalorder %s181, %s195
      %p197 = scmp.eq.s32.totalorder %s24, 0
      %p198 = por %p196, %p197
      %s200 = sadd.s32 %s199, 1
      %p203 = scmp.eq.s32.totalorder %s18, 1
      %p204 = scmp.ne.s32.totalorder %s199, %s201
      %p205 = scmp.eq.s32.totalorder %s18, 0
      %p206 = por %p204, %p205
      %p207 = scmp.ne.s32.totalorder %s199, %s201
      %p208 = scmp.eq.s32.totalorder %s23, 1
      %p209 = por %p207, %p208
      %p210 = scmp.ne.s32.totalorder %s201, %s202
      %p211 = scmp.eq.s32.totalorder %s23, 0
      %p212 = por %p210, %p211
      %p213 = scmp.ne.s32.totalorder %s201, %s202
      %p214 = scmp.eq.s32.totalorder %s24, 1
      %p215 = por %p213, %p214
      %p217 = scmp.ne.s32.totalorder %s202, %s216
      %p218 = scmp.eq.s32.totalorder %s24, 0
      %p219 = por %p217, %p218
      %s220 = ssub.s32 %s18, %s25
      %p221 = scmp.eq.s32.totalorder %s220, 0
      %s223 = sadd.s32 %s222, 1
      %s224 = scalar_select %p221, %s222, %s223
      %p227 = pneg %p221
      %p228 = scmp.eq.s32.totalorder %s18, 1
      %p229 = por %p227, %p228
      %p230 = scmp.ne.s32.totalorder %s222, %s225
      %p231 = scmp.eq.s32.totalorder %s18, 0
      %p232 = por %p230, %p231
      %p233 = scmp.ne.s32.totalorder %s222, %s225
      %p234 = scmp.eq.s32.totalorder %s23, 1
      %p235 = por %p233, %p234
      %p236 = scmp.ne.s32.totalorder %s225, %s226
      %p237 = scmp.eq.s32.totalorder %s23, 0
      %p238 = por %p236, %p237
      %p239 = scmp.ne.s32.totalorder %s225, %s226
      %p240 = scmp.eq.s32.totalorder %s24, 1
      %p241 = por %p239, %p240
      %p243 = scmp.ne.s32.totalorder %s226, %s242
      %p244 = scmp.eq.s32.totalorder %s24, 0
      %p245 = por %p243, %p244
      %p246 = scmp.le.s32.totalorder 1, %s18
      %p247 = scmp.lt.s32.totalorder %s18, 3
      %p248 = pnand %p246, %p247
      %p249 = pneg %p248
      // Predicated region
      $region9: #{tpu_custom_call.1} parent=5 // pred_check
        _
      $region10: #{tpu_custom_call.1} parent=5 // pred_check_branch
        %251 = sbr.rel (%p248) target = $region12
      $region11: #{tpu_custom_call.1} parent=5 // pred_region
        %s252 = ssub.s32 %s18, 1
        // Predicated region
        $region13: #{tpu_custom_call.1} parent=11 // pred_check
          %p253 = pneg %p65
        $region14: #{tpu_custom_call.1} parent=11 // pred_check_branch
          %255 = sbr.rel (%p253) target = $region16
        $region15: #{tpu_custom_call.1} parent=11 // pred_region
          _
        $region16: #{tpu_custom_call.1} parent=11 // pred_fallthru
          _
        // Predicated region
        $region17: #{tpu_custom_call.1} parent=11 // pred_check
          %p256 = pneg %p86
        $region18: #{tpu_custom_call.1} parent=11 // pred_check_branch
          %258 = sbr.rel (%p256) target = $region20
        $region19: #{tpu_custom_call.1} parent=11 // pred_region
          _
        $region20: #{tpu_custom_call.1} parent=11 // pred_fallthru
          _
        // Predicated region
        $region21: #{tpu_custom_call.1} parent=11 // pred_check
          %p259 = pneg %p107
        $region22: #{tpu_custom_call.1} parent=11 // pred_check_branch
          %261 = sbr.rel (%p259) target = $region24
        $region23: #{tpu_custom_call.1} parent=11 // pred_region
          _
        $region24: #{tpu_custom_call.1} parent=11 // pred_fallthru
          _
        // Predicated region
        $region25: #{tpu_custom_call.1} parent=11 // pred_check
          %p262 = pneg %p128
        $region26: #{tpu_custom_call.1} parent=11 // pred_check_branch
          %264 = sbr.rel (%p262) target = $region28
        $region27: #{tpu_custom_call.1} parent=11 // pred_region
          _
        $region28: #{tpu_custom_call.1} parent=11 // pred_fallthru
          _
        // Predicated region
        $region29: #{tpu_custom_call.1} parent=11 // pred_check
          %p265 = pneg %p149
        $region30: #{tpu_custom_call.1} parent=11 // pred_check_branch
          %267 = sbr.rel (%p265) target = $region32
        $region31: #{tpu_custom_call.1} parent=11 // pred_region
          _
        $region32: #{tpu_custom_call.1} parent=11 // pred_fallthru
          _
        // Predicated region
        $region33: #{tpu_custom_call.1} parent=11 // pred_check
          %p268 = pneg %p170
        $region34: #{tpu_custom_call.1} parent=11 // pred_check_branch
          %270 = sbr.rel (%p268) target = $region36
        $region35: #{tpu_custom_call.1} parent=11 // pred_region
          _
        $region36: #{tpu_custom_call.1} parent=11 // pred_fallthru
          _
        // Predicated region
        $region37: #{tpu_custom_call.1} parent=11 // pred_check
          %p271 = pneg %p191
        $region38: #{tpu_custom_call.1} parent=11 // pred_check_branch
          %273 = sbr.rel (%p271) target = $region40
        $region39: #{tpu_custom_call.1} parent=11 // pred_region
          _
        $region40: #{tpu_custom_call.1} parent=11 // pred_fallthru
          _
        // Predicated region
        $region41: #{tpu_custom_call.1} parent=11 // pred_check
          %p274 = pneg %p212
        $region42: #{tpu_custom_call.1} parent=11 // pred_check_branch
          %276 = sbr.rel (%p274) target = $region44
        $region43: #{tpu_custom_call.1} parent=11 // pred_region
          _
        $region44: #{tpu_custom_call.1} parent=11 // pred_fallthru
          _
      $region12: #{tpu_custom_call.1} parent=5 // pred_fallthru
        _
      %p277 = scmp.lt.s32.totalorder %s18, 2
      // Predicated region
      $region45: #{tpu_custom_call.1} parent=5 // pred_check
        %p278 = pneg %p277
      $region46: #{tpu_custom_call.1} parent=5 // pred_check_branch
        %280 = sbr.rel (%p278) target = $region48
      $region47: #{tpu_custom_call.1} parent=5 // pred_region
        // Predicated region
        $region49: #{tpu_custom_call.1} parent=47 // pred_check
          %p281 = pneg %p38
        $region50: #{tpu_custom_call.1} parent=47 // pred_check_branch
          %283 = sbr.rel (%p281) target = $region52
        $region51: #{tpu_custom_call.1} parent=47 // pred_region
          %s284 = smul.u32 16, %s18
          %s285 = ssub.s32 25, %s284
          %p286 = scmp.lt.s32.totalorder %s285, 16
          %s287 = scalar_select %p286, %s285, 16
          %s288 = smul.u32 128, %s287
          %s289 = smul.u32 %s288, 2
          %p290 = scmp.lt.s32.totalorder %s284, 24
          %s291 = scalar_select %p290, %s284, 24
          %s292 = smul.addr %s291, 2
          %s293 = smul.addr %s292, 8
          %s294 = scalar_lea.vmem %s0, %s293
          %s295 = smul.u32 16, %s18
          %s296 = ssub.s32 25, %s295
          %p297 = scmp.lt.s32.totalorder %s296, 16
          %s298 = scalar_select %p297, %s296, 16
          %s299 = smul.u32 128, %s298
          %s300 = smul.u32 %s299, 2
        $region52: #{tpu_custom_call.1} parent=47 // pred_fallthru
          _
      $region48: #{tpu_custom_call.1} parent=5 // pred_fallthru
        _
      %p301 = scmp.le.s32.totalorder 1, %s18
      %p302 = scmp.lt.s32.totalorder %s18, 3
      %p303 = pnand %p301, %p302
      %p304 = pneg %p303
      // Predicated region
      $region53: #{tpu_custom_call.1} parent=5 // pred_check
        _
      $region54: #{tpu_custom_call.1} parent=5 // pred_check_branch
        %306 = sbr.rel (%p303) target = $region56
      $region55: #{tpu_custom_call.1} parent=5 // pred_region
        %s307 = ssub.s32 %s18, 1
        %s308 = smul.u32 16, %s23
        %s309 = ssub.s32 25, %s308
        %p310 = scmp.lt.s32.totalorder %s309, 16
        %s311 = scalar_select %p310, %s309, 16
        %s312 = smul.u32 128, %s311
        %s313 = smul.u32 %s312, 2
        %p314 = scmp.lt.s32.totalorder %s308, 24
        %s315 = scalar_select %p314, %s308, 24
        %s316 = smul.addr %s315, 2
        %s317 = smul.addr %s316, 8
        %s318 = scalar_lea.vmem %s0, %s317
        %p319 = pneg %p44
        %p320 = pneg %p41
        %p321 = pneg %p65
        %p322 = pneg %p62
        %p323 = pneg %p86
        %p324 = pneg %p83
        %p325 = pneg %p107
        %p326 = pneg %p104
        %p327 = pneg %p128
        %p328 = pneg %p125
        %p329 = pneg %p149
        %p330 = pneg %p146
        %p331 = pneg %p170
        %p332 = pneg %p167
        %p333 = pneg %p191
        %p334 = pneg %p188
        %p335 = pneg %p212
        %p336 = pneg %p209
        %p337 = pneg %p238
        %p338 = pneg %p235
        %s339 = sand.u32 %s225, 1
        %s340 = scalar_lea.sflag [#allocation3], %s339
        %s341 = sand.u32 %s225, 1
        %s342 = smul.addr %s341, 2
        %s343 = scalar_lea.vmem [#allocation2], %s342
        %s344 = smul.u32 16, %s23
        %s345 = ssub.s32 25, %s344
        %p346 = scmp.lt.s32.totalorder %s345, 16
        %s347 = scalar_select %p346, %s345, 16
        %s348 = smul.u32 128, %s347
        %s349 = smul.u32 %s348, 2
        %p350 = scmp.lt.s32.totalorder %s344, 24
        %s351 = scalar_select %p350, %s344, 24
        %s352 = smul.addr %s351, 2
        %s353 = smul.addr %s352, 8
        %s354 = scalar_lea.vmem %s0, %s353
        %s355 = smul.u32 16, %s23
        %s356 = ssub.s32 25, %s355
        %p357 = scmp.lt.s32.totalorder %s356, 16
        %s358 = scalar_select %p357, %s356, 16
        %s359 = smul.u32 128, %s358
        %s360 = smul.u32 %s359, 2
        %v361 = vld [vmem:[%s354] sm:$0xff]
        %v362 = vld [vmem:[%s354 + $0x10] sm:$0xff]
        %v363 = vld [vmem:[%s354 + $0x20] sm:$0xff]
        %v364 = vld [vmem:[%s354 + $0x30] sm:$0xff]
        %v365 = vld [vmem:[%s354 + $0x40] sm:$0xff]
        %v366 = vld [vmem:[%s354 + $0x50] sm:$0xff]
        %v367 = vld [vmem:[%s354 + $0x60] sm:$0xff]
        %v368 = vld [vmem:[%s354 + $0x70] sm:$0xff]
        %v369 = vld [vmem:[%s354 + $0x80] sm:$0xff]
        %v370 = vld [vmem:[%s354 + $0x90] sm:$0xff]
        %v371 = vld [vmem:[%s354 + $0xa0] sm:$0xff]
        %v372 = vld [vmem:[%s354 + $0xb0] sm:$0xff]
        %v373 = vld [vmem:[%s354 + $0xc0] sm:$0xff]
        %v374 = vld [vmem:[%s354 + $0xd0] sm:$0xff]
        %v375 = vld [vmem:[%s354 + $0xe0] sm:$0xff]
        %v376 = vld [vmem:[%s354 + $0xf0] sm:$0xff]
        %v377 = vld [vmem:[%s1] sm:$0xff]
        %v378 = vld [vmem:[%s1 + $0x8] sm:$0xff]
        %v379 = vld [vmem:[%s1 + $0x10] sm:$0xff]
        %v380 = vld [vmem:[%s1 + $0x18] sm:$0xff]
        %v381 = vld [vmem:[%s1 + $0x20] sm:$0xff]
        %v382 = vld [vmem:[%s1 + $0x28] sm:$0xff]
        %v383 = vld [vmem:[%s1 + $0x30] sm:$0xff]
        %v384 = vld [vmem:[%s1 + $0x38] sm:$0xff]
        %v385 = vld [vmem:[%s1 + $0x40] sm:$0xff]
        %v386 = vld [vmem:[%s1 + $0x48] sm:$0xff]
        %v387 = vld [vmem:[%s1 + $0x50] sm:$0xff]
        %v388 = vld [vmem:[%s1 + $0x58] sm:$0xff]
        %v389 = vld [vmem:[%s1 + $0x60] sm:$0xff]
        %v390 = vld [vmem:[%s1 + $0x68] sm:$0xff]
        %v391 = vld [vmem:[%s1 + $0x70] sm:$0xff]
        %v392 = vld [vmem:[%s1 + $0x78] sm:$0xff]
        %v393 = vld [vmem:[%s354 + $0x8] sm:$0xff]
        %v394 = vld [vmem:[%s354 + $0x18] sm:$0xff]
        %v395 = vld [vmem:[%s354 + $0x28] sm:$0xff]
        %v396 = vld [vmem:[%s354 + $0x38] sm:$0xff]
        %v397 = vld [vmem:[%s354 + $0x48] sm:$0xff]
        %v398 = vld [vmem:[%s354 + $0x58] sm:$0xff]
        %v399 = vld [vmem:[%s354 + $0x68] sm:$0xff]
        %v400 = vld [vmem:[%s354 + $0x78] sm:$0xff]
        %v401 = vld [vmem:[%s354 + $0x88] sm:$0xff]
        %v402 = vld [vmem:[%s354 + $0x98] sm:$0xff]
        %v403 = vld [vmem:[%s354 + $0xa8] sm:$0xff]
        %v404 = vld [vmem:[%s354 + $0xb8] sm:$0xff]
        %v405 = vld [vmem:[%s354 + $0xc8] sm:$0xff]
        %v406 = vld [vmem:[%s354 + $0xd8] sm:$0xff]
        %v407 = vld [vmem:[%s354 + $0xe8] sm:$0xff]
        %v408 = vld [vmem:[%s354 + $0xf8] sm:$0xff]
        %v409 = vld [vmem:[%s2] sm:$0x1]
        %411 = vset.pattern.permute.xlu0 0
        %412 = vperm.xlu0 %411, %v393
        %v413 = vpop.permute.xlu0 %412
        %416 = vset.pattern.permute.xlu0 0
        %417 = vperm.xlu0 %416, %v394
        %v418 = vpop.permute.xlu0 %417
        %421 = vset.pattern.permute.xlu0 0
        %422 = vperm.xlu0 %421, %v395
        %v423 = vpop.permute.xlu0 %422
        %426 = vset.pattern.permute.xlu0 0
        %427 = vperm.xlu0 %426, %v396
        %v428 = vpop.permute.xlu0 %427
        %431 = vset.pattern.permute.xlu0 0
        %432 = vperm.xlu0 %431, %v397
        %v433 = vpop.permute.xlu0 %432
        %436 = vset.pattern.permute.xlu0 0
        %437 = vperm.xlu0 %436, %v398
        %v438 = vpop.permute.xlu0 %437
        %441 = vset.pattern.permute.xlu0 0
        %442 = vperm.xlu0 %441, %v399
        %v443 = vpop.permute.xlu0 %442
        %446 = vset.pattern.permute.xlu0 0
        %447 = vperm.xlu0 %446, %v400
        %v448 = vpop.permute.xlu0 %447
        %451 = vset.pattern.permute.xlu0 0
        %452 = vperm.xlu0 %451, %v401
        %v453 = vpop.permute.xlu0 %452
        %456 = vset.pattern.permute.xlu0 0
        %457 = vperm.xlu0 %456, %v402
        %v458 = vpop.permute.xlu0 %457
        %461 = vset.pattern.permute.xlu0 0
        %462 = vperm.xlu0 %461, %v403
        %v463 = vpop.permute.xlu0 %462
        %466 = vset.pattern.permute.xlu0 0
        %467 = vperm.xlu0 %466, %v404
        %v468 = vpop.permute.xlu0 %467
        %471 = vset.pattern.permute.xlu0 0
        %472 = vperm.xlu0 %471, %v405
        %v473 = vpop.permute.xlu0 %472
        %476 = vset.pattern.permute.xlu0 0
        %477 = vperm.xlu0 %476, %v406
        %v478 = vpop.permute.xlu0 %477
        %481 = vset.pattern.permute.xlu0 0
        %482 = vperm.xlu0 %481, %v407
        %v483 = vpop.permute.xlu0 %482
        %486 = vset.pattern.permute.xlu0 0
        %487 = vperm.xlu0 %486, %v408
        %v488 = vpop.permute.xlu0 %487
        %v490 = vlaneseq
        %v491 = vshrl.u32 %v490, 7
        %v492 = vsub.s32 0, %v491
        %v493 = vrot.slane %v409, %v492
        %v494 = vmul.f32 %v413, %v493
        %v495 = vmul.f32 %v418, %v493
        %v496 = vmul.f32 %v423, %v493
        %v497 = vmul.f32 %v428, %v493
        %v498 = vmul.f32 %v433, %v493
        %v499 = vmul.f32 %v438, %v493
        %v500 = vmul.f32 %v443, %v493
        %v501 = vmul.f32 %v448, %v493
        %v502 = vmul.f32 %v453, %v493
        %v503 = vmul.f32 %v458, %v493
        %v504 = vmul.f32 %v463, %v493
        %v505 = vmul.f32 %v468, %v493
        %v506 = vmul.f32 %v473, %v493
        %v507 = vmul.f32 %v478, %v493
        %v508 = vmul.f32 %v483, %v493
        %v509 = vmul.f32 %v488, %v493
        %510 = vmatprep.subr.mxu0 0.0
        %v511 = vand.u32 %v377, 4294901760
        %512 = vmatpush1.msra.mxu0 %v511
        %513 = vmatprep.subr.mxu0 0.0
        %v514 = vand.u32 %v378, 4294901760
        %515 = vmatpush1.msra.mxu0 %v514
        %516 = vmatprep.subr.mxu0 0.0
        %v517 = vand.u32 %v379, 4294901760
        %518 = vmatpush1.msra.mxu0 %v517
        %519 = vmatprep.subr.mxu0 0.0
        %v520 = vand.u32 %v380, 4294901760
        %521 = vmatpush1.msra.mxu0 %v520
        %522 = vmatprep.subr.mxu0 0.0
        %v523 = vand.u32 %v381, 4294901760
        %524 = vmatpush1.msra.mxu0 %v523
        %525 = vmatprep.subr.mxu0 0.0
        %v526 = vand.u32 %v382, 4294901760
        %527 = vmatpush1.msra.mxu0 %v526
        %528 = vmatprep.subr.mxu0 0.0
        %v529 = vand.u32 %v383, 4294901760
        %530 = vmatpush1.msra.mxu0 %v529
        %531 = vmatprep.subr.mxu0 0.0
        %v532 = vand.u32 %v384, 4294901760
        %533 = vmatpush1.msra.mxu0 %v532
        %534 = vmatprep.subr.mxu0 0.0
        %v535 = vand.u32 %v385, 4294901760
        %536 = vmatpush1.msra.mxu0 %v535
        %537 = vmatprep.subr.mxu0 0.0
        %v538 = vand.u32 %v386, 4294901760
        %539 = vmatpush1.msra.mxu0 %v538
        %540 = vmatprep.subr.mxu0 0.0
        %v541 = vand.u32 %v387, 4294901760
        %542 = vmatpush1.msra.mxu0 %v541
        %543 = vmatprep.subr.mxu0 0.0
        %v544 = vand.u32 %v388, 4294901760
        %545 = vmatpush1.msra.mxu0 %v544
        %546 = vmatprep.subr.mxu0 0.0
        %v547 = vand.u32 %v389, 4294901760
        %548 = vmatpush1.msra.mxu0 %v547
        %549 = vmatprep.subr.mxu0 0.0
        %v550 = vand.u32 %v390, 4294901760
        %551 = vmatpush1.msra.mxu0 %v550
        %552 = vmatprep.subr.mxu0 0.0
        %v553 = vand.u32 %v391, 4294901760
        %554 = vmatpush1.msra.mxu0 %v553
        %555 = vmatprep.subr.mxu0 0.0
        %v556 = vand.u32 %v392, 4294901760
        %557 = vmatpush1.msra.mxu0 %v556
        %558 = vmatprep.subr.mxu0 0.0
        %559 = vmatpush1.msra.mxu0 0.0
        %560 = vmatprep.subr.mxu0 0.0
        %561 = vmatpush1.msra.mxu0 0.0
        %562 = vmatprep.subr.mxu0 0.0
        %563 = vmatpush1.msra.mxu0 0.0
        %564 = vmatprep.subr.mxu0 0.0
        %565 = vmatpush1.msra.mxu0 0.0
        %566 = vmatprep.subr.mxu0 0.0
        %567 = vmatpush1.msra.mxu0 0.0
        %568 = vmatprep.subr.mxu0 0.0
        %569 = vmatpush1.msra.mxu0 0.0
        %570 = vmatprep.subr.mxu0 0.0
        %571 = vmatpush1.msra.mxu0 0.0
        %572 = vmatprep.subr.mxu0 0.0
        %573 = vmatpush1.msra.mxu0 0.0
        %574 = vmatprep.subr.mxu0 0.0
        %575 = vmatpush1.msra.mxu0 0.0
        %576 = vmatprep.subr.mxu0 0.0
        %577 = vmatpush1.msra.mxu0 0.0
        %578 = vmatprep.subr.mxu0 0.0
        %579 = vmatpush1.msra.mxu0 0.0
        %580 = vmatprep.subr.mxu0 0.0
        %581 = vmatpush1.msra.mxu0 0.0
        %582 = vmatprep.subr.mxu0 0.0
        %583 = vmatpush1.msra.mxu0 0.0
        %584 = vmatprep.subr.mxu0 0.0
        %585 = vmatpush1.msra.mxu0 0.0
        %586 = vmatprep.subr.mxu0 0.0
        %587 = vmatpush1.msra.mxu0 0.0
        %588 = vmatprep.subr.mxu0 0.0
        %589 = vmatpush1.msra.mxu0 0.0
        %590 = vmatprep.mubr.f32.mxu0 0.0
        %v591 = vand.u32 %v361, 4294901760
        %v592 = vsub.f32 %v361, %v591
        %v593 = vand.u32 %v592, 4294901760
        %v594 = vsub.f32 %v592, %v593
        %v595 = vand.u32 %v594, 4294901760
        %596 = vmatmul.mubr.f32.gmra.mrb[0].mxu0 %v595
        %v597 = vpop.f32.mrb[0].mxu0
        %v598 = vadd.f32 %v494, %v597
        %v599 = vpop.f32.mrb[0].mxu0
        %600 = vmatprep.mubr.f32.mxu0 0.0
        %v601 = vand.u32 %v362, 4294901760
        %v602 = vsub.f32 %v362, %v601
        %v603 = vand.u32 %v602, 4294901760
        %v604 = vsub.f32 %v602, %v603
        %v605 = vand.u32 %v604, 4294901760
        %606 = vmatmul.mubr.f32.gmra.mrb[0].mxu0 %v605
        %v607 = vpop.f32.mrb[0].mxu0
        %v608 = vadd.f32 %v495, %v607
        %v609 = vpop.f32.mrb[0].mxu0
        %610 = vmatprep.mubr.f32.mxu0 0.0
        %v611 = vand.u32 %v363, 4294901760
        %v612 = vsub.f32 %v363, %v611
        %v613 = vand.u32 %v612, 4294901760
        %v614 = vsub.f32 %v612, %v613
        %v615 = vand.u32 %v614, 4294901760
        %616 = vmatmul.mubr.f32.gmra.mrb[0].mxu0 %v615
        %v617 = vpop.f32.mrb[0].mxu0
        %v618 = vadd.f32 %v496, %v617
        %v619 = vpop.f32.mrb[0].mxu0
        %620 = vmatprep.mubr.f32.mxu0 0.0
        %v621 = vand.u32 %v364, 4294901760
        %v622 = vsub.f32 %v364, %v621
        %v623 = vand.u32 %v622, 4294901760
        %v624 = vsub.f32 %v622, %v623
        %v625 = vand.u32 %v624, 4294901760
        %626 = vmatmul.mubr.f32.gmra.mrb[0].mxu0 %v625
        %v627 = vpop.f32.mrb[0].mxu0
        %v628 = vadd.f32 %v497, %v627
        %v629 = vpop.f32.mrb[0].mxu0
        %630 = vmatprep.mubr.f32.mxu0 0.0
        %v631 = vand.u32 %v365, 4294901760
        %v632 = vsub.f32 %v365, %v631
        %v633 = vand.u32 %v632, 4294901760
        %v634 = vsub.f32 %v632, %v633
        %v635 = vand.u32 %v634, 4294901760
        %636 = vmatmul.mubr.f32.gmra.mrb[0].mxu0 %v635
        %v637 = vpop.f32.mrb[0].mxu0
        %v638 = vadd.f32 %v498, %v637
        %v639 = vpop.f32.mrb[0].mxu0
        %640 = vmatprep.mubr.f32.mxu0 0.0
        %v641 = vand.u32 %v366, 4294901760
        %v642 = vsub.f32 %v366, %v641
        %v643 = vand.u32 %v642, 4294901760
        %v644 = vsub.f32 %v642, %v643
        %v645 = vand.u32 %v644, 4294901760
        %646 = vmatmul.mubr.f32.gmra.mrb[0].mxu0 %v645
        %v647 = vpop.f32.mrb[0].mxu0
        %v648 = vadd.f32 %v499, %v647
        %v649 = vpop.f32.mrb[0].mxu0
        %650 = vmatprep.mubr.f32.mxu0 0.0
        %v651 = vand.u32 %v367, 4294901760
        %v652 = vsub.f32 %v367, %v651
        %v653 = vand.u32 %v652, 4294901760
        %v654 = vsub.f32 %v652, %v653
        %v655 = vand.u32 %v654, 4294901760
        %656 = vmatmul.mubr.f32.gmra.mrb[0].mxu0 %v655
        %v657 = vpop.f32.mrb[0].mxu0
        %v658 = vadd.f32 %v500, %v657
        %v659 = vpop.f32.mrb[0].mxu0
        %660 = vmatprep.mubr.f32.mxu0 0.0
        %v661 = vand.u32 %v368, 4294901760
        %v662 = vsub.f32 %v368, %v661
        %v663 = vand.u32 %v662, 4294901760
        %v664 = vsub.f32 %v662, %v663
        %v665 = vand.u32 %v664, 4294901760
        %666 = vmatmul.mubr.f32.gmra.mrb[0].mxu0 %v665
        %v667 = vpop.f32.mrb[0].mxu0
        %v668 = vadd.f32 %v501, %v667
        %v669 = vpop.f32.mrb[0].mxu0
        %670 = vmatprep.mubr.f32.mxu0 0.0
        %v671 = vand.u32 %v369, 4294901760
        %v672 = vsub.f32 %v369, %v671
        %v673 = vand.u32 %v672, 4294901760
        %v674 = vsub.f32 %v672, %v673
        %v675 = vand.u32 %v674, 4294901760
        %676 = vmatmul.mubr.f32.gmra.mrb[0].mxu0 %v675
        %v677 = vpop.f32.mrb[0].mxu0
        %v678 = vadd.f32 %v502, %v677
        %v679 = vpop.f32.mrb[0].mxu0
        %680 = vmatprep.mubr.f32.mxu0 0.0
        %v681 = vand.u32 %v370, 4294901760
        %v682 = vsub.f32 %v370, %v681
        %v683 = vand.u32 %v682, 4294901760
        %v684 = vsub.f32 %v682, %v683
        %v685 = vand.u32 %v684, 4294901760
        %686 = vmatmul.mubr.f32.gmra.mrb[0].mxu0 %v685
        %v687 = vpop.f32.mrb[0].mxu0
        %v688 = vadd.f32 %v503, %v687
        %v689 = vpop.f32.mrb[0].mxu0
        %690 = vmatprep.mubr.f32.mxu0 0.0
        %v691 = vand.u32 %v371, 4294901760
        %v692 = vsub.f32 %v371, %v691
        %v693 = vand.u32 %v692, 4294901760
        %v694 = vsub.f32 %v692, %v693
        %v695 = vand.u32 %v694, 4294901760
        %696 = vmatmul.mubr.f32.gmra.mrb[0].mxu0 %v695
        %v697 = vpop.f32.mrb[0].mxu0
        %v698 = vadd.f32 %v504, %v697
        %v699 = vpop.f32.mrb[0].mxu0
        %700 = vmatprep.mubr.f32.mxu0 0.0
        %v701 = vand.u32 %v372, 4294901760
        %v702 = vsub.f32 %v372, %v701
        %v703 = vand.u32 %v702, 4294901760
        %v704 = vsub.f32 %v702, %v703
        %v705 = vand.u32 %v704, 4294901760
        %706 = vmatmul.mubr.f32.gmra.mrb[0].mxu0 %v705
        %v707 = vpop.f32.mrb[0].mxu0
        %v708 = vadd.f32 %v505, %v707
        %v709 = vpop.f32.mrb[0].mxu0
        %710 = vmatprep.mubr.f32.mxu0 0.0
        %v711 = vand.u32 %v373, 4294901760
        %v712 = vsub.f32 %v373, %v711
        %v713 = vand.u32 %v712, 4294901760
        %v714 = vsub.f32 %v712, %v713
        %v715 = vand.u32 %v714, 4294901760
        %716 = vmatmul.mubr.f32.gmra.mrb[0].mxu0 %v715
        %v717 = vpop.f32.mrb[0].mxu0
        %v718 = vadd.f32 %v506, %v717
        %v719 = vpop.f32.mrb[0].mxu0
        %720 = vmatprep.mubr.f32.mxu0 0.0
        %v721 = vand.u32 %v374, 4294901760
        %v722 = vsub.f32 %v374, %v721
        %v723 = vand.u32 %v722, 4294901760
        %v724 = vsub.f32 %v722, %v723
        %v725 = vand.u32 %v724, 4294901760
        %726 = vmatmul.mubr.f32.gmra.mrb[0].mxu0 %v725
        %v727 = vpop.f32.mrb[0].mxu0
        %v728 = vadd.f32 %v507, %v727
        %v729 = vpop.f32.mrb[0].mxu0
        %730 = vmatprep.mubr.f32.mxu0 0.0
        %v731 = vand.u32 %v375, 4294901760
        %v732 = vsub.f32 %v375, %v731
        %v733 = vand.u32 %v732, 4294901760
        %v734 = vsub.f32 %v732, %v733
        %v735 = vand.u32 %v734, 4294901760
        %736 = vmatmul.mubr.f32.gmra.mrb[0].mxu0 %v735
        %v737 = vpop.f32.mrb[0].mxu0
        %v738 = vadd.f32 %v508, %v737
        %v739 = vpop.f32.mrb[0].mxu0
        %740 = vmatprep.mubr.f32.mxu0 0.0
        %v741 = vand.u32 %v376, 4294901760
        %v742 = vsub.f32 %v376, %v741
        %v743 = vand.u32 %v742, 4294901760
        %v744 = vsub.f32 %v742, %v743
        %v745 = vand.u32 %v744, 4294901760
        %746 = vmatmul.mubr.f32.gmra.mrb[0].mxu0 %v745
        %v747 = vpop.f32.mrb[0].mxu0
        %v748 = vadd.f32 %v509, %v747
        %v749 = vpop.f32.mrb[0].mxu0
        %750 = vdwg.mxu0
        %751 = vmatprep.subr.mxu0 0.0
        %v752 = vand.u32 %v377, 4294901760
        %v753 = vsub.f32 %v377, %v752
        %v754 = vand.u32 %v753, 4294901760
        %v755 = vsub.f32 %v753, %v754
        %v756 = vand.u32 %v755, 4294901760
        %757 = vmatpush1.msra.mxu0 %v756
        %758 = vmatprep.subr.mxu0 0.0
        %v759 = vand.u32 %v378, 4294901760
        %v760 = vsub.f32 %v378, %v759
        %v761 = vand.u32 %v760, 4294901760
        %v762 = vsub.f32 %v760, %v761
        %v763 = vand.u32 %v762, 4294901760
        %764 = vmatpush1.msra.mxu0 %v763
        %765 = vmatprep.subr.mxu0 0.0
        %v766 = vand.u32 %v379, 4294901760
        %v767 = vsub.f32 %v379, %v766
        %v768 = vand.u32 %v767, 4294901760
        %v769 = vsub.f32 %v767, %v768
        %v770 = vand.u32 %v769, 4294901760
        %771 = vmatpush1.msra.mxu0 %v770
        %772 = vmatprep.subr.mxu0 0.0
        %v773 = vand.u32 %v380, 4294901760
        %v774 = vsub.f32 %v380, %v773
        %v775 = vand.u32 %v774, 4294901760
        %v776 = vsub.f32 %v774, %v775
        %v777 = vand.u32 %v776, 4294901760
        %778 = vmatpush1.msra.mxu0 %v777
        %779 = vmatprep.subr.mxu0 0.0
        %v780 = vand.u32 %v381, 4294901760
        %v781 = vsub.f32 %v381, %v780
        %v782 = vand.u32 %v781, 4294901760
        %v783 = vsub.f32 %v781, %v782
        %v784 = vand.u32 %v783, 4294901760
        %785 = vmatpush1.msra.mxu0 %v784
        %786 = vmatprep.subr.mxu0 0.0
        %v787 = vand.u32 %v382, 4294901760
        %v788 = vsub.f32 %v382, %v787
        %v789 = vand.u32 %v788, 4294901760
        %v790 = vsub.f32 %v788, %v789
        %v791 = vand.u32 %v790, 4294901760
        %792 = vmatpush1.msra.mxu0 %v791
        %793 = vmatprep.subr.mxu0 0.0
        %v794 = vand.u32 %v383, 4294901760
        %v795 = vsub.f32 %v383, %v794
        %v796 = vand.u32 %v795, 4294901760
        %v797 = vsub.f32 %v795, %v796
        %v798 = vand.u32 %v797, 4294901760
        %799 = vmatpush1.msra.mxu0 %v798
        %800 = vmatprep.subr.mxu0 0.0
        %v801 = vand.u32 %v384, 4294901760
        %v802 = vsub.f32 %v384, %v801
        %v803 = vand.u32 %v802, 4294901760
        %v804 = vsub.f32 %v802, %v803
        %v805 = vand.u32 %v804, 4294901760
        %806 = vmatpush1.msra.mxu0 %v805
        %807 = vmatprep.subr.mxu0 0.0
        %v808 = vand.u32 %v385, 4294901760
        %v809 = vsub.f32 %v385, %v808
        %v810 = vand.u32 %v809, 4294901760
        %v811 = vsub.f32 %v809, %v810
        %v812 = vand.u32 %v811, 4294901760
        %813 = vmatpush1.msra.mxu0 %v812
        %814 = vmatprep.subr.mxu0 0.0
        %v815 = vand.u32 %v386, 4294901760
        %v816 = vsub.f32 %v386, %v815
        %v817 = vand.u32 %v816, 4294901760
        %v818 = vsub.f32 %v816, %v817
        %v819 = vand.u32 %v818, 4294901760
        %820 = vmatpush1.msra.mxu0 %v819
        %821 = vmatprep.subr.mxu0 0.0
        %v822 = vand.u32 %v387, 4294901760
        %v823 = vsub.f32 %v387, %v822
        %v824 = vand.u32 %v823, 4294901760
        %v825 = vsub.f32 %v823, %v824
        %v826 = vand.u32 %v825, 4294901760
        %827 = vmatpush1.msra.mxu0 %v826
        %828 = vmatprep.subr.mxu0 0.0
        %v829 = vand.u32 %v388, 4294901760
        %v830 = vsub.f32 %v388, %v829
        %v831 = vand.u32 %v830, 4294901760
        %v832 = vsub.f32 %v830, %v831
        %v833 = vand.u32 %v832, 4294901760
        %834 = vmatpush1.msra.mxu0 %v833
        %835 = vmatprep.subr.mxu0 0.0
        %v836 = vand.u32 %v389, 4294901760
        %v837 = vsub.f32 %v389, %v836
        %v838 = vand.u32 %v837, 4294901760
        %v839 = vsub.f32 %v837, %v838
        %v840 = vand.u32 %v839, 4294901760
        %841 = vmatpush1.msra.mxu0 %v840
        %842 = vmatprep.subr.mxu0 0.0
        %v843 = vand.u32 %v390, 4294901760
        %v844 = vsub.f32 %v390, %v843
        %v845 = vand.u32 %v844, 4294901760
        %v846 = vsub.f32 %v844, %v845
        %v847 = vand.u32 %v846, 4294901760
        %848 = vmatpush1.msra.mxu0 %v847
        %849 = vmatprep.subr.mxu0 0.0
        %v850 = vand.u32 %v391, 4294901760
        %v851 = vsub.f32 %v391, %v850
        %v852 = vand.u32 %v851, 4294901760
        %v853 = vsub.f32 %v851, %v852
        %v854 = vand.u32 %v853, 4294901760
        %855 = vmatpush1.msra.mxu0 %v854
        %856 = vmatprep.subr.mxu0 0.0
        %v857 = vand.u32 %v392, 4294901760
        %v858 = vsub.f32 %v392, %v857
        %v859 = vand.u32 %v858, 4294901760
        %v860 = vsub.f32 %v858, %v859
        %v861 = vand.u32 %v860, 4294901760
        %862 = vmatpush1.msra.mxu0 %v861
        %863 = vmatprep.subr.mxu0 0.0
        %864 = vmatpush1.msra.mxu0 0.0
        %865 = vmatprep.subr.mxu0 0.0
        %866 = vmatpush1.msra.mxu0 0.0
        %867 = vmatprep.subr.mxu0 0.0
        %868 = vmatpush1.msra.mxu0 0.0
        %869 = vmatprep.subr.mxu0 0.0
        %870 = vmatpush1.msra.mxu0 0.0
        %871 = vmatprep.subr.mxu0 0.0
        %872 = vmatpush1.msra.mxu0 0.0
        %873 = vmatprep.subr.mxu0 0.0
        %874 = vmatpush1.msra.mxu0 0.0
        %875 = vmatprep.subr.mxu0 0.0
        %876 = vmatpush1.msra.mxu0 0.0
        %877 = vmatprep.subr.mxu0 0.0
        %878 = vmatpush1.msra.mxu0 0.0
        %879 = vmatprep.subr.mxu0 0.0
        %880 = vmatpush1.msra.mxu0 0.0
        %881 = vmatprep.subr.mxu0 0.0
        %882 = vmatpush1.msra.mxu0 0.0
        %883 = vmatprep.subr.mxu0 0.0
        %884 = vmatpush1.msra.mxu0 0.0
        %885 = vmatprep.subr.mxu0 0.0
        %886 = vmatpush1.msra.mxu0 0.0
        %887 = vmatprep.subr.mxu0 0.0
        %888 = vmatpush1.msra.mxu0 0.0
        %889 = vmatprep.subr.mxu0 0.0
        %890 = vmatpush1.msra.mxu0 0.0
        %891 = vmatprep.subr.mxu0 0.0
        %892 = vmatpush1.msra.mxu0 0.0
        %893 = vmatprep.subr.mxu0 0.0
        %894 = vmatpush1.msra.mxu0 0.0
        %895 = vmatprep.mubr.f32.mxu0 0.0
        %v896 = vand.u32 %v361, 4294901760
        %897 = vmatmul.mubr.f32.gmra.mrb[0].mxu0 %v896
        %v898 = vpop.f32.mrb[0].mxu0
        %v899 = vadd.f32 %v598, %v898
        %v900 = vpop.f32.mrb[0].mxu0
        %901 = vmatprep.mubr.f32.mxu0 0.0
        %v902 = vand.u32 %v362, 4294901760
        %903 = vmatmul.mubr.f32.gmra.mrb[0].mxu0 %v902
        %v904 = vpop.f32.mrb[0].mxu0
        %v905 = vadd.f32 %v608, %v904
        %v906 = vpop.f32.mrb[0].mxu0
        %907 = vmatprep.mubr.f32.mxu0 0.0
        %v908 = vand.u32 %v363, 4294901760
        %909 = vmatmul.mubr.f32.gmra.mrb[0].mxu0 %v908
        %v910 = vpop.f32.mrb[0].mxu0
        %v911 = vadd.f32 %v618, %v910
        %v912 = vpop.f32.mrb[0].mxu0
        %913 = vmatprep.mubr.f32.mxu0 0.0
        %v914 = vand.u32 %v364, 4294901760
        %915 = vmatmul.mubr.f32.gmra.mrb[0].mxu0 %v914
        %v916 = vpop.f32.mrb[0].mxu0
        %v917 = vadd.f32 %v628, %v916
        %v918 = vpop.f32.mrb[0].mxu0
        %919 = vmatprep.mubr.f32.mxu0 0.0
        %v920 = vand.u32 %v365, 4294901760
        %921 = vmatmul.mubr.f32.gmra.mrb[0].mxu0 %v920
        %v922 = vpop.f32.mrb[0].mxu0
        %v923 = vadd.f32 %v638, %v922
        %v924 = vpop.f32.mrb[0].mxu0
        %925 = vmatprep.mubr.f32.mxu0 0.0
        %v926 = vand.u32 %v366, 4294901760
        %927 = vmatmul.mubr.f32.gmra.mrb[0].mxu0 %v926
        %v928 = vpop.f32.mrb[0].mxu0
        %v929 = vadd.f32 %v648, %v928
        %v930 = vpop.f32.mrb[0].mxu0
        %931 = vmatprep.mubr.f32.mxu0 0.0
        %v932 = vand.u32 %v367, 4294901760
        %933 = vmatmul.mubr.f32.gmra.mrb[0].mxu0 %v932
        %v934 = vpop.f32.mrb[0].mxu0
        %v935 = vadd.f32 %v658, %v934
        %v936 = vpop.f32.mrb[0].mxu0
        %937 = vmatprep.mubr.f32.mxu0 0.0
        %v938 = vand.u32 %v368, 4294901760
        %939 = vmatmul.mubr.f32.gmra.mrb[0].mxu0 %v938
        %v940 = vpop.f32.mrb[0].mxu0
        %v941 = vadd.f32 %v668, %v940
        %v942 = vpop.f32.mrb[0].mxu0
        %943 = vmatprep.mubr.f32.mxu0 0.0
        %v944 = vand.u32 %v369, 4294901760
        %945 = vmatmul.mubr.f32.gmra.mrb[0].mxu0 %v944
        %v946 = vpop.f32.mrb[0].mxu0
        %v947 = vadd.f32 %v678, %v946
        %v948 = vpop.f32.mrb[0].mxu0
        %949 = vmatprep.mubr.f32.mxu0 0.0
        %v950 = vand.u32 %v370, 4294901760
        %951 = vmatmul.mubr.f32.gmra.mrb[0].mxu0 %v950
        %v952 = vpop.f32.mrb[0].mxu0
        %v953 = vadd.f32 %v688, %v952
        %v954 = vpop.f32.mrb[0].mxu0
        %955 = vmatprep.mubr.f32.mxu0 0.0
        %v956 = vand.u32 %v371, 4294901760
        %957 = vmatmul.mubr.f32.gmra.mrb[0].mxu0 %v956
        %v958 = vpop.f32.mrb[0].mxu0
        %v959 = vadd.f32 %v698, %v958
        %v960 = vpop.f32.mrb[0].mxu0
        %961 = vmatprep.mubr.f32.mxu0 0.0
        %v962 = vand.u32 %v372, 4294901760
        %963 = vmatmul.mubr.f32.gmra.mrb[0].mxu0 %v962
        %v964 = vpop.f32.mrb[0].mxu0
        %v965 = vadd.f32 %v708, %v964
        %v966 = vpop.f32.mrb[0].mxu0
        %967 = vmatprep.mubr.f32.mxu0 0.0
        %v968 = vand.u32 %v373, 4294901760
        %969 = vmatmul.mubr.f32.gmra.mrb[0].mxu0 %v968
        %v970 = vpop.f32.mrb[0].mxu0
        %v971 = vadd.f32 %v718, %v970
        %v972 = vpop.f32.mrb[0].mxu0
        %973 = vmatprep.mubr.f32.mxu0 0.0
        %v974 = vand.u32 %v374, 4294901760
        %975 = vmatmul.mubr.f32.gmra.mrb[0].mxu0 %v974
        %v976 = vpop.f32.mrb[0].mxu0
        %v977 = vadd.f32 %v728, %v976
        %v978 = vpop.f32.mrb[0].mxu0
        %979 = vmatprep.mubr.f32.mxu0 0.0
        %v980 = vand.u32 %v375, 4294901760
        %981 = vmatmul.mubr.f32.gmra.mrb[0].mxu0 %v980
        %v982 = vpop.f32.mrb[0].mxu0
        %v983 = vadd.f32 %v738, %v982
        %v984 = vpop.f32.mrb[0].mxu0
        %985 = vmatprep.mubr.f32.mxu0 0.0
        %v986 = vand.u32 %v376, 4294901760
        %987 = vmatmul.mubr.f32.gmra.mrb[0].mxu0 %v986
        %v988 = vpop.f32.mrb[0].mxu0
        %v989 = vadd.f32 %v748, %v988
        %v990 = vpop.f32.mrb[0].mxu0
        %991 = vdwg.mxu0
        %992 = vmatprep.subr.mxu0 0.0
        %v993 = vand.u32 %v377, 4294901760
        %v994 = vsub.f32 %v377, %v993
        %995 = vmatpush1.msra.mxu0 %v994
        %996 = vmatprep.subr.mxu0 0.0
        %v997 = vand.u32 %v378, 4294901760
        %v998 = vsub.f32 %v378, %v997
        %999 = vmatpush1.msra.mxu0 %v998
        %1000 = vmatprep.subr.mxu0 0.0
        %v1001 = vand.u32 %v379, 4294901760
        %v1002 = vsub.f32 %v379, %v1001
        %1003 = vmatpush1.msra.mxu0 %v1002
        %1004 = vmatprep.subr.mxu0 0.0
        %v1005 = vand.u32 %v380, 4294901760
        %v1006 = vsub.f32 %v380, %v1005
        %1007 = vmatpush1.msra.mxu0 %v1006
        %1008 = vmatprep.subr.mxu0 0.0
        %v1009 = vand.u32 %v381, 4294901760
        %v1010 = vsub.f32 %v381, %v1009
        %1011 = vmatpush1.msra.mxu0 %v1010
        %1012 = vmatprep.subr.mxu0 0.0
        %v1013 = vand.u32 %v382, 4294901760
        %v1014 = vsub.f32 %v382, %v1013
        %1015 = vmatpush1.msra.mxu0 %v1014
        %1016 = vmatprep.subr.mxu0 0.0
        %v1017 = vand.u32 %v383, 4294901760
        %v1018 = vsub.f32 %v383, %v1017
        %1019 = vmatpush1.msra.mxu0 %v1018
        %1020 = vmatprep.subr.mxu0 0.0
        %v1021 = vand.u32 %v384, 4294901760
        %v1022 = vsub.f32 %v384, %v1021
        %1023 = vmatpush1.msra.mxu0 %v1022
        %1024 = vmatprep.subr.mxu0 0.0
        %v1025 = vand.u32 %v385, 4294901760
        %v1026 = vsub.f32 %v385, %v1025
        %1027 = vmatpush1.msra.mxu0 %v1026
        %1028 = vmatprep.subr.mxu0 0.0
        %v1029 = vand.u32 %v386, 4294901760
        %v1030 = vsub.f32 %v386, %v1029
        %1031 = vmatpush1.msra.mxu0 %v1030
        %1032 = vmatprep.subr.mxu0 0.0
        %v1033 = vand.u32 %v387, 4294901760
        %v1034 = vsub.f32 %v387, %v1033
        %1035 = vmatpush1.msra.mxu0 %v1034
        %1036 = vmatprep.subr.mxu0 0.0
        %v1037 = vand.u32 %v388, 4294901760
        %v1038 = vsub.f32 %v388, %v1037
        %1039 = vmatpush1.msra.mxu0 %v1038
        %1040 = vmatprep.subr.mxu0 0.0
        %v1041 = vand.u32 %v389, 4294901760
        %v1042 = vsub.f32 %v389, %v1041
        %1043 = vmatpush1.msra.mxu0 %v1042
        %1044 = vmatprep.subr.mxu0 0.0
        %v1045 = vand.u32 %v390, 4294901760
        %v1046 = vsub.f32 %v390, %v1045
        %1047 = vmatpush1.msra.mxu0 %v1046
        %1048 = vmatprep.subr.mxu0 0.0
        %v1049 = vand.u32 %v391, 4294901760
        %v1050 = vsub.f32 %v391, %v1049
        %1051 = vmatpush1.msra.mxu0 %v1050
        %1052 = vmatprep.subr.mxu0 0.0
        %v1053 = vand.u32 %v392, 4294901760
        %v1054 = vsub.f32 %v392, %v1053
        %1055 = vmatpush1.msra.mxu0 %v1054
        %1056 = vmatprep.subr.mxu0 0.0
        %1057 = vmatpush1.msra.mxu0 0.0
        %1058 = vmatprep.subr.mxu0 0.0
        %1059 = vmatpush1.msra.mxu0 0.0
        %1060 = vmatprep.subr.mxu0 0.0
        %1061 = vmatpush1.msra.mxu0 0.0
        %1062 = vmatprep.subr.mxu0 0.0
        %1063 = vmatpush1.msra.mxu0 0.0
        %1064 = vmatprep.subr.mxu0 0.0
        %1065 = vmatpush1.msra.mxu0 0.0
        %1066 = vmatprep.subr.mxu0 0.0
        %1067 = vmatpush1.msra.mxu0 0.0
        %1068 = vmatprep.subr.mxu0 0.0
        %1069 = vmatpush1.msra.mxu0 0.0
        %1070 = vmatprep.subr.mxu0 0.0
        %1071 = vmatpush1.msra.mxu0 0.0
        %1072 = vmatprep.subr.mxu0 0.0
        %1073 = vmatpush1.msra.mxu0 0.0
        %1074 = vmatprep.subr.mxu0 0.0
        %1075 = vmatpush1.msra.mxu0 0.0
        %1076 = vmatprep.subr.mxu0 0.0
        %1077 = vmatpush1.msra.mxu0 0.0
        %1078 = vmatprep.subr.mxu0 0.0
        %1079 = vmatpush1.msra.mxu0 0.0
        %1080 = vmatprep.subr.mxu0 0.0
        %1081 = vmatpush1.msra.mxu0 0.0
        %1082 = vmatprep.subr.mxu0 0.0
        %1083 = vmatpush1.msra.mxu0 0.0
        %1084 = vmatprep.subr.mxu0 0.0
        %1085 = vmatpush1.msra.mxu0 0.0
        %1086 = vmatprep.subr.mxu0 0.0
        %1087 = vmatpush1.msra.mxu0 0.0
        %1088 = vmatprep.mubr.f32.mxu0 0.0
        %v1089 = vand.u32 %v361, 4294901760
        %v1090 = vsub.f32 %v361, %v1089
        %1091 = vmatmul.mubr.f32.gmra.mrb[0].mxu0 %v1090
        %v1092 = vpop.f32.mrb[0].mxu0
        %v1093 = vadd.f32 %v899, %v1092
        %v1094 = vpop.f32.mrb[0].mxu0
        %1095 = vmatprep.mubr.f32.mxu0 0.0
        %v1096 = vand.u32 %v362, 4294901760
        %v1097 = vsub.f32 %v362, %v1096
        %1098 = vmatmul.mubr.f32.gmra.mrb[0].mxu0 %v1097
        %v1099 = vpop.f32.mrb[0].mxu0
        %v1100 = vadd.f32 %v905, %v1099
        %v1101 = vpop.f32.mrb[0].mxu0
        %1102 = vmatprep.mubr.f32.mxu0 0.0
        %v1103 = vand.u32 %v363, 4294901760
        %v1104 = vsub.f32 %v363, %v1103
        %1105 = vmatmul.mubr.f32.gmra.mrb[0].mxu0 %v1104
        %v1106 = vpop.f32.mrb[0].mxu0
        %v1107 = vadd.f32 %v911, %v1106
        %v1108 = vpop.f32.mrb[0].mxu0
        %1109 = vmatprep.mubr.f32.mxu0 0.0
        %v1110 = vand.u32 %v364, 4294901760
        %v1111 = vsub.f32 %v364, %v1110
        %1112 = vmatmul.mubr.f32.gmra.mrb[0].mxu0 %v1111
        %v1113 = vpop.f32.mrb[0].mxu0
        %v1114 = vadd.f32 %v917, %v1113
        %v1115 = vpop.f32.mrb[0].mxu0
        %1116 = vmatprep.mubr.f32.mxu0 0.0
        %v1117 = vand.u32 %v365, 4294901760
        %v1118 = vsub.f32 %v365, %v1117
        %1119 = vmatmul.mubr.f32.gmra.mrb[0].mxu0 %v1118
        %v1120 = vpop.f32.mrb[0].mxu0
        %v1121 = vadd.f32 %v923, %v1120
        %v1122 = vpop.f32.mrb[0].mxu0
        %1123 = vmatprep.mubr.f32.mxu0 0.0
        %v1124 = vand.u32 %v366, 4294901760
        %v1125 = vsub.f32 %v366, %v1124
        %1126 = vmatmul.mubr.f32.gmra.mrb[0].mxu0 %v1125
        %v1127 = vpop.f32.mrb[0].mxu0
        %v1128 = vadd.f32 %v929, %v1127
        %v1129 = vpop.f32.mrb[0].mxu0
        %1130 = vmatprep.mubr.f32.mxu0 0.0
        %v1131 = vand.u32 %v367, 4294901760
        %v1132 = vsub.f32 %v367, %v1131
        %1133 = vmatmul.mubr.f32.gmra.mrb[0].mxu0 %v1132
        %v1134 = vpop.f32.mrb[0].mxu0
        %v1135 = vadd.f32 %v935, %v1134
        %v1136 = vpop.f32.mrb[0].mxu0
        %1137 = vmatprep.mubr.f32.mxu0 0.0
        %v1138 = vand.u32 %v368, 4294901760
        %v1139 = vsub.f32 %v368, %v1138
        %1140 = vmatmul.mubr.f32.gmra.mrb[0].mxu0 %v1139
        %v1141 = vpop.f32.mrb[0].mxu0
        %v1142 = vadd.f32 %v941, %v1141
        %v1143 = vpop.f32.mrb[0].mxu0
        %1144 = vmatprep.mubr.f32.mxu0 0.0
        %v1145 = vand.u32 %v369, 4294901760
        %v1146 = vsub.f32 %v369, %v1145
        %1147 = vmatmul.mubr.f32.gmra.mrb[0].mxu0 %v1146
        %v1148 = vpop.f32.mrb[0].mxu0
        %v1149 = vadd.f32 %v947, %v1148
        %v1150 = vpop.f32.mrb[0].mxu0
        %1151 = vmatprep.mubr.f32.mxu0 0.0
        %v1152 = vand.u32 %v370, 4294901760
        %v1153 = vsub.f32 %v370, %v1152
        %1154 = vmatmul.mubr.f32.gmra.mrb[0].mxu0 %v1153
        %v1155 = vpop.f32.mrb[0].mxu0
        %v1156 = vadd.f32 %v953, %v1155
        %v1157 = vpop.f32.mrb[0].mxu0
        %1158 = vmatprep.mubr.f32.mxu0 0.0
        %v1159 = vand.u32 %v371, 4294901760
        %v1160 = vsub.f32 %v371, %v1159
        %1161 = vmatmul.mubr.f32.gmra.mrb[0].mxu0 %v1160
        %v1162 = vpop.f32.mrb[0].mxu0
        %v1163 = vadd.f32 %v959, %v1162
        %v1164 = vpop.f32.mrb[0].mxu0
        %1165 = vmatprep.mubr.f32.mxu0 0.0
        %v1166 = vand.u32 %v372, 4294901760
        %v1167 = vsub.f32 %v372, %v1166
        %1168 = vmatmul.mubr.f32.gmra.mrb[0].mxu0 %v1167
        %v1169 = vpop.f32.mrb[0].mxu0
        %v1170 = vadd.f32 %v965, %v1169
        %v1171 = vpop.f32.mrb[0].mxu0
        %1172 = vmatprep.mubr.f32.mxu0 0.0
        %v1173 = vand.u32 %v373, 4294901760
        %v1174 = vsub.f32 %v373, %v1173
        %1175 = vmatmul.mubr.f32.gmra.mrb[0].mxu0 %v1174
        %v1176 = vpop.f32.mrb[0].mxu0
        %v1177 = vadd.f32 %v971, %v1176
        %v1178 = vpop.f32.mrb[0].mxu0
        %1179 = vmatprep.mubr.f32.mxu0 0.0
        %v1180 = vand.u32 %v374, 4294901760
        %v1181 = vsub.f32 %v374, %v1180
        %1182 = vmatmul.mubr.f32.gmra.mrb[0].mxu0 %v1181
        %v1183 = vpop.f32.mrb[0].mxu0
        %v1184 = vadd.f32 %v977, %v1183
        %v1185 = vpop.f32.mrb[0].mxu0
        %1186 = vmatprep.mubr.f32.mxu0 0.0
        %v1187 = vand.u32 %v375, 4294901760
        %v1188 = vsub.f32 %v375, %v1187
        %1189 = vmatmul.mubr.f32.gmra.mrb[0].mxu0 %v1188
        %v1190 = vpop.f32.mrb[0].mxu0
        %v1191 = vadd.f32 %v983, %v1190
        %v1192 = vpop.f32.mrb[0].mxu0
        %1193 = vmatprep.mubr.f32.mxu0 0.0
        %v1194 = vand.u32 %v376, 4294901760
        %v1195 = vsub.f32 %v376, %v1194
        %1196 = vmatmul.mubr.f32.gmra.mrb[0].mxu0 %v1195
        %v1197 = vpop.f32.mrb[0].mxu0
        %v1198 = vadd.f32 %v989, %v1197
        %v1199 = vpop.f32.mrb[0].mxu0
        %1200 = vdwg.mxu0
        %1201 = vmatprep.subr.mxu0 0.0
        %v1202 = vand.u32 %v377, 4294901760
        %1203 = vmatpush1.msra.mxu0 %v1202
        %1204 = vmatprep.subr.mxu0 0.0
        %v1205 = vand.u32 %v378, 4294901760
        %1206 = vmatpush1.msra.mxu0 %v1205
        %1207 = vmatprep.subr.mxu0 0.0
        %v1208 = vand.u32 %v379, 4294901760
        %1209 = vmatpush1.msra.mxu0 %v1208
        %1210 = vmatprep.subr.mxu0 0.0
        %v1211 = vand.u32 %v380, 4294901760
        %1212 = vmatpush1.msra.mxu0 %v1211
        %1213 = vmatprep.subr.mxu0 0.0
        %v1214 = vand.u32 %v381, 4294901760
        %1215 = vmatpush1.msra.mxu0 %v1214
        %1216 = vmatprep.subr.mxu0 0.0
        %v1217 = vand.u32 %v382, 4294901760
        %1218 = vmatpush1.msra.mxu0 %v1217
        %1219 = vmatprep.subr.mxu0 0.0
        %v1220 = vand.u32 %v383, 4294901760
        %1221 = vmatpush1.msra.mxu0 %v1220
        %1222 = vmatprep.subr.mxu0 0.0
        %v1223 = vand.u32 %v384, 4294901760
        %1224 = vmatpush1.msra.mxu0 %v1223
        %1225 = vmatprep.subr.mxu0 0.0
        %v1226 = vand.u32 %v385, 4294901760
        %1227 = vmatpush1.msra.mxu0 %v1226
        %1228 = vmatprep.subr.mxu0 0.0
        %v1229 = vand.u32 %v386, 4294901760
        %1230 = vmatpush1.msra.mxu0 %v1229
        %1231 = vmatprep.subr.mxu0 0.0
        %v1232 = vand.u32 %v387, 4294901760
        %1233 = vmatpush1.msra.mxu0 %v1232
        %1234 = vmatprep.subr.mxu0 0.0
        %v1235 = vand.u32 %v388, 4294901760
        %1236 = vmatpush1.msra.mxu0 %v1235
        %1237 = vmatprep.subr.mxu0 0.0
        %v1238 = vand.u32 %v389, 4294901760
        %1239 = vmatpush1.msra.mxu0 %v1238
        %1240 = vmatprep.subr.mxu0 0.0
        %v1241 = vand.u32 %v390, 4294901760
        %1242 = vmatpush1.msra.mxu0 %v1241
        %1243 = vmatprep.subr.mxu0 0.0
        %v1244 = vand.u32 %v391, 4294901760
        %1245 = vmatpush1.msra.mxu0 %v1244
        %1246 = vmatprep.subr.mxu0 0.0
        %v1247 = vand.u32 %v392, 4294901760
        %1248 = vmatpush1.msra.mxu0 %v1247
        %1249 = vmatprep.subr.mxu0 0.0
        %1250 = vmatpush1.msra.mxu0 0.0
        %1251 = vmatprep.subr.mxu0 0.0
        %1252 = vmatpush1.msra.mxu0 0.0
        %1253 = vmatprep.subr.mxu0 0.0
        %1254 = vmatpush1.msra.mxu0 0.0
        %1255 = vmatprep.subr.mxu0 0.0
        %1256 = vmatpush1.msra.mxu0 0.0
        %1257 = vmatprep.subr.mxu0 0.0
        %1258 = vmatpush1.msra.mxu0 0.0
        %1259 = vmatprep.subr.mxu0 0.0
        %1260 = vmatpush1.msra.mxu0 0.0
        %1261 = vmatprep.subr.mxu0 0.0
        %1262 = vmatpush1.msra.mxu0 0.0
        %1263 = vmatprep.subr.mxu0 0.0
        %1264 = vmatpush1.msra.mxu0 0.0
        %1265 = vmatprep.subr.mxu0 0.0
        %1266 = vmatpush1.msra.mxu0 0.0
        %1267 = vmatprep.subr.mxu0 0.0
        %1268 = vmatpush1.msra.mxu0 0.0
        %1269 = vmatprep.subr.mxu0 0.0
        %1270 = vmatpush1.msra.mxu0 0.0
        %1271 = vmatprep.subr.mxu0 0.0
        %1272 = vmatpush1.msra.mxu0 0.0
        %1273 = vmatprep.subr.mxu0 0.0
        %1274 = vmatpush1.msra.mxu0 0.0
        %1275 = vmatprep.subr.mxu0 0.0
        %1276 = vmatpush1.msra.mxu0 0.0
        %1277 = vmatprep.subr.mxu0 0.0
        %1278 = vmatpush1.msra.mxu0 0.0
        %1279 = vmatprep.subr.mxu0 0.0
        %1280 = vmatpush1.msra.mxu0 0.0
        %1281 = vmatprep.mubr.f32.mxu0 0.0
        %v1282 = vand.u32 %v361, 4294901760
        %v1283 = vsub.f32 %v361, %v1282
        %v1284 = vand.u32 %v1283, 4294901760
        %1285 = vmatmul.mubr.f32.gmra.mrb[0].mxu0 %v1284
        %v1286 = vpop.f32.mrb[0].mxu0
        %v1287 = vadd.f32 %v1093, %v1286
        %v1288 = vpop.f32.mrb[0].mxu0
        %1289 = vmatprep.mubr.f32.mxu0 0.0
        %v1290 = vand.u32 %v362, 4294901760
        %v1291 = vsub.f32 %v362, %v1290
        %v1292 = vand.u32 %v1291, 4294901760
        %1293 = vmatmul.mubr.f32.gmra.mrb[0].mxu0 %v1292
        %v1294 = vpop.f32.mrb[0].mxu0
        %v1295 = vadd.f32 %v1100, %v1294
        %v1296 = vpop.f32.mrb[0].mxu0
        %1297 = vmatprep.mubr.f32.mxu0 0.0
        %v1298 = vand.u32 %v363, 4294901760
        %v1299 = vsub.f32 %v363, %v1298
        %v1300 = vand.u32 %v1299, 4294901760
        %1301 = vmatmul.mubr.f32.gmra.mrb[0].mxu0 %v1300
        %v1302 = vpop.f32.mrb[0].mxu0
        %v1303 = vadd.f32 %v1107, %v1302
        %v1304 = vpop.f32.mrb[0].mxu0
        %1305 = vmatprep.mubr.f32.mxu0 0.0
        %v1306 = vand.u32 %v364, 4294901760
        %v1307 = vsub.f32 %v364, %v1306
        %v1308 = vand.u32 %v1307, 4294901760
        %1309 = vmatmul.mubr.f32.gmra.mrb[0].mxu0 %v1308
        %v1310 = vpop.f32.mrb[0].mxu0
        %v1311 = vadd.f32 %v1114, %v1310
        %v1312 = vpop.f32.mrb[0].mxu0
        %1313 = vmatprep.mubr.f32.mxu0 0.0
        %v1314 = vand.u32 %v365, 4294901760
        %v1315 = vsub.f32 %v365, %v1314
        %v1316 = vand.u32 %v1315, 4294901760
        %1317 = vmatmul.mubr.f32.gmra.mrb[0].mxu0 %v1316
        %v1318 = vpop.f32.mrb[0].mxu0
        %v1319 = vadd.f32 %v1121, %v1318
        %v1320 = vpop.f32.mrb[0].mxu0
        %1321 = vmatprep.mubr.f32.mxu0 0.0
        %v1322 = vand.u32 %v366, 4294901760
        %v1323 = vsub.f32 %v366, %v1322
        %v1324 = vand.u32 %v1323, 4294901760
        %1325 = vmatmul.mubr.f32.gmra.mrb[0].mxu0 %v1324
        %v1326 = vpop.f32.mrb[0].mxu0
        %v1327 = vadd.f32 %v1128, %v1326
        %v1328 = vpop.f32.mrb[0].mxu0
        %1329 = vmatprep.mubr.f32.mxu0 0.0
        %v1330 = vand.u32 %v367, 4294901760
        %v1331 = vsub.f32 %v367, %v1330
        %v1332 = vand.u32 %v1331, 4294901760
        %1333 = vmatmul.mubr.f32.gmra.mrb[0].mxu0 %v1332
        %v1334 = vpop.f32.mrb[0].mxu0
        %v1335 = vadd.f32 %v1135, %v1334
        %v1336 = vpop.f32.mrb[0].mxu0
        %1337 = vmatprep.mubr.f32.mxu0 0.0
        %v1338 = vand.u32 %v368, 4294901760
        %v1339 = vsub.f32 %v368, %v1338
        %v1340 = vand.u32 %v1339, 4294901760
        %1341 = vmatmul.mubr.f32.gmra.mrb[0].mxu0 %v1340
        %v1342 = vpop.f32.mrb[0].mxu0
        %v1343 = vadd.f32 %v1142, %v1342
        %v1344 = vpop.f32.mrb[0].mxu0
        %1345 = vmatprep.mubr.f32.mxu0 0.0
        %v1346 = vand.u32 %v369, 4294901760
        %v1347 = vsub.f32 %v369, %v1346
        %v1348 = vand.u32 %v1347, 4294901760
        %1349 = vmatmul.mubr.f32.gmra.mrb[0].mxu0 %v1348
        %v1350 = vpop.f32.mrb[0].mxu0
        %v1351 = vadd.f32 %v1149, %v1350
        %v1352 = vpop.f32.mrb[0].mxu0
        %1353 = vmatprep.mubr.f32.mxu0 0.0
        %v1354 = vand.u32 %v370, 4294901760
        %v1355 = vsub.f32 %v370, %v1354
        %v1356 = vand.u32 %v1355, 4294901760
        %1357 = vmatmul.mubr.f32.gmra.mrb[0].mxu0 %v1356
        %v1358 = vpop.f32.mrb[0].mxu0
        %v1359 = vadd.f32 %v1156, %v1358
        %v1360 = vpop.f32.mrb[0].mxu0
        %1361 = vmatprep.mubr.f32.mxu0 0.0
        %v1362 = vand.u32 %v371, 4294901760
        %v1363 = vsub.f32 %v371, %v1362
        %v1364 = vand.u32 %v1363, 4294901760
        %1365 = vmatmul.mubr.f32.gmra.mrb[0].mxu0 %v1364
        %v1366 = vpop.f32.mrb[0].mxu0
        %v1367 = vadd.f32 %v1163, %v1366
        %v1368 = vpop.f32.mrb[0].mxu0
        %1369 = vmatprep.mubr.f32.mxu0 0.0
        %v1370 = vand.u32 %v372, 4294901760
        %v1371 = vsub.f32 %v372, %v1370
        %v1372 = vand.u32 %v1371, 4294901760
        %1373 = vmatmul.mubr.f32.gmra.mrb[0].mxu0 %v1372
        %v1374 = vpop.f32.mrb[0].mxu0
        %v1375 = vadd.f32 %v1170, %v1374
        %v1376 = vpop.f32.mrb[0].mxu0
        %1377 = vmatprep.mubr.f32.mxu0 0.0
        %v1378 = vand.u32 %v373, 4294901760
        %v1379 = vsub.f32 %v373, %v1378
        %v1380 = vand.u32 %v1379, 4294901760
        %1381 = vmatmul.mubr.f32.gmra.mrb[0].mxu0 %v1380
        %v1382 = vpop.f32.mrb[0].mxu0
        %v1383 = vadd.f32 %v1177, %v1382
        %v1384 = vpop.f32.mrb[0].mxu0
        %1385 = vmatprep.mubr.f32.mxu0 0.0
        %v1386 = vand.u32 %v374, 4294901760
        %v1387 = vsub.f32 %v374, %v1386
        %v1388 = vand.u32 %v1387, 4294901760
        %1389 = vmatmul.mubr.f32.gmra.mrb[0].mxu0 %v1388
        %v1390 = vpop.f32.mrb[0].mxu0
        %v1391 = vadd.f32 %v1184, %v1390
        %v1392 = vpop.f32.mrb[0].mxu0
        %1393 = vmatprep.mubr.f32.mxu0 0.0
        %v1394 = vand.u32 %v375, 4294901760
        %v1395 = vsub.f32 %v375, %v1394
        %v1396 = vand.u32 %v1395, 4294901760
        %1397 = vmatmul.mubr.f32.gmra.mrb[0].mxu0 %v1396
        %v1398 = vpop.f32.mrb[0].mxu0
        %v1399 = vadd.f32 %v1191, %v1398
        %v1400 = vpop.f32.mrb[0].mxu0
        %1401 = vmatprep.mubr.f32.mxu0 0.0
        %v1402 = vand.u32 %v376, 4294901760
        %v1403 = vsub.f32 %v376, %v1402
        %v1404 = vand.u32 %v1403, 4294901760
        %1405 = vmatmul.mubr.f32.gmra.mrb[0].mxu0 %v1404
        %v1406 = vpop.f32.mrb[0].mxu0
        %v1407 = vadd.f32 %v1198, %v1406
        %v1408 = vpop.f32.mrb[0].mxu0
        %1409 = vdwg.mxu0
        %1410 = vmatprep.subr.mxu0 0.0
        %v1411 = vand.u32 %v377, 4294901760
        %v1412 = vsub.f32 %v377, %v1411
        %v1413 = vand.u32 %v1412, 4294901760
        %1414 = vmatpush1.msra.mxu0 %v1413
        %1415 = vmatprep.subr.mxu0 0.0
        %v1416 = vand.u32 %v378, 4294901760
        %v1417 = vsub.f32 %v378, %v1416
        %v1418 = vand.u32 %v1417, 4294901760
        %1419 = vmatpush1.msra.mxu0 %v1418
        %1420 = vmatprep.subr.mxu0 0.0
        %v1421 = vand.u32 %v379, 4294901760
        %v1422 = vsub.f32 %v379, %v1421
        %v1423 = vand.u32 %v1422, 4294901760
        %1424 = vmatpush1.msra.mxu0 %v1423
        %1425 = vmatprep.subr.mxu0 0.0
        %v1426 = vand.u32 %v380, 4294901760
        %v1427 = vsub.f32 %v380, %v1426
        %v1428 = vand.u32 %v1427, 4294901760
        %1429 = vmatpush1.msra.mxu0 %v1428
        %1430 = vmatprep.subr.mxu0 0.0
        %v1431 = vand.u32 %v381, 4294901760
        %v1432 = vsub.f32 %v381, %v1431
        %v1433 = vand.u32 %v1432, 4294901760
        %1434 = vmatpush1.msra.mxu0 %v1433
        %1435 = vmatprep.subr.mxu0 0.0
        %v1436 = vand.u32 %v382, 4294901760
        %v1437 = vsub.f32 %v382, %v1436
        %v1438 = vand.u32 %v1437, 4294901760
        %1439 = vmatpush1.msra.mxu0 %v1438
        %1440 = vmatprep.subr.mxu0 0.0
        %v1441 = vand.u32 %v383, 4294901760
        %v1442 = vsub.f32 %v383, %v1441
        %v1443 = vand.u32 %v1442, 4294901760
        %1444 = vmatpush1.msra.mxu0 %v1443
        %1445 = vmatprep.subr.mxu0 0.0
        %v1446 = vand.u32 %v384, 4294901760
        %v1447 = vsub.f32 %v384, %v1446
        %v1448 = vand.u32 %v1447, 4294901760
        %1449 = vmatpush1.msra.mxu0 %v1448
        %1450 = vmatprep.subr.mxu0 0.0
        %v1451 = vand.u32 %v385, 4294901760
        %v1452 = vsub.f32 %v385, %v1451
        %v1453 = vand.u32 %v1452, 4294901760
        %1454 = vmatpush1.msra.mxu0 %v1453
        %1455 = vmatprep.subr.mxu0 0.0
        %v1456 = vand.u32 %v386, 4294901760
        %v1457 = vsub.f32 %v386, %v1456
        %v1458 = vand.u32 %v1457, 4294901760
        %1459 = vmatpush1.msra.mxu0 %v1458
        %1460 = vmatprep.subr.mxu0 0.0
        %v1461 = vand.u32 %v387, 4294901760
        %v1462 = vsub.f32 %v387, %v1461
        %v1463 = vand.u32 %v1462, 4294901760
        %1464 = vmatpush1.msra.mxu0 %v1463
        %1465 = vmatprep.subr.mxu0 0.0
        %v1466 = vand.u32 %v388, 4294901760
        %v1467 = vsub.f32 %v388, %v1466
        %v1468 = vand.u32 %v1467, 4294901760
        %1469 = vmatpush1.msra.mxu0 %v1468
        %1470 = vmatprep.subr.mxu0 0.0
        %v1471 = vand.u32 %v389, 4294901760
        %v1472 = vsub.f32 %v389, %v1471
        %v1473 = vand.u32 %v1472, 4294901760
        %1474 = vmatpush1.msra.mxu0 %v1473
        %1475 = vmatprep.subr.mxu0 0.0
        %v1476 = vand.u32 %v390, 4294901760
        %v1477 = vsub.f32 %v390, %v1476
        %v1478 = vand.u32 %v1477, 4294901760
        %1479 = vmatpush1.msra.mxu0 %v1478
        %1480 = vmatprep.subr.mxu0 0.0
        %v1481 = vand.u32 %v391, 4294901760
        %v1482 = vsub.f32 %v391, %v1481
        %v1483 = vand.u32 %v1482, 4294901760
        %1484 = vmatpush1.msra.mxu0 %v1483
        %1485 = vmatprep.subr.mxu0 0.0
        %v1486 = vand.u32 %v392, 4294901760
        %v1487 = vsub.f32 %v392, %v1486
        %v1488 = vand.u32 %v1487, 4294901760
        %1489 = vmatpush1.msra.mxu0 %v1488
        %1490 = vmatprep.subr.mxu0 0.0
        %1491 = vmatpush1.msra.mxu0 0.0
        %1492 = vmatprep.subr.mxu0 0.0
        %1493 = vmatpush1.msra.mxu0 0.0
        %1494 = vmatprep.subr.mxu0 0.0
        %1495 = vmatpush1.msra.mxu0 0.0
        %1496 = vmatprep.subr.mxu0 0.0
        %1497 = vmatpush1.msra.mxu0 0.0
        %1498 = vmatprep.subr.mxu0 0.0
        %1499 = vmatpush1.msra.mxu0 0.0
        %1500 = vmatprep.subr.mxu0 0.0
        %1501 = vmatpush1.msra.mxu0 0.0
        %1502 = vmatprep.subr.mxu0 0.0
        %1503 = vmatpush1.msra.mxu0 0.0
        %1504 = vmatprep.subr.mxu0 0.0
        %1505 = vmatpush1.msra.mxu0 0.0
        %1506 = vmatprep.subr.mxu0 0.0
        %1507 = vmatpush1.msra.mxu0 0.0
        %1508 = vmatprep.subr.mxu0 0.0
        %1509 = vmatpush1.msra.mxu0 0.0
        %1510 = vmatprep.subr.mxu0 0.0
        %1511 = vmatpush1.msra.mxu0 0.0
        %1512 = vmatprep.subr.mxu0 0.0
        %1513 = vmatpush1.msra.mxu0 0.0
        %1514 = vmatprep.subr.mxu0 0.0
        %1515 = vmatpush1.msra.mxu0 0.0
        %1516 = vmatprep.subr.mxu0 0.0
        %1517 = vmatpush1.msra.mxu0 0.0
        %1518 = vmatprep.subr.mxu0 0.0
        %1519 = vmatpush1.msra.mxu0 0.0
        %1520 = vmatprep.subr.mxu0 0.0
        %1521 = vmatpush1.msra.mxu0 0.0
        %1522 = vmatprep.mubr.f32.mxu0 0.0
        %v1523 = vand.u32 %v361, 4294901760
        %1524 = vmatmul.mubr.f32.gmra.mrb[0].mxu0 %v1523
        %v1525 = vpop.f32.mrb[0].mxu0
        %v1526 = vadd.f32 %v1287, %v1525
        %v1527 = vpop.f32.mrb[0].mxu0
        %1528 = vmatprep.mubr.f32.mxu0 0.0
        %v1529 = vand.u32 %v362, 4294901760
        %1530 = vmatmul.mubr.f32.gmra.mrb[0].mxu0 %v1529
        %v1531 = vpop.f32.mrb[0].mxu0
        %v1532 = vadd.f32 %v1295, %v1531
        %v1533 = vpop.f32.mrb[0].mxu0
        %1534 = vmatprep.mubr.f32.mxu0 0.0
        %v1535 = vand.u32 %v363, 4294901760
        %1536 = vmatmul.mubr.f32.gmra.mrb[0].mxu0 %v1535
        %v1537 = vpop.f32.mrb[0].mxu0
        %v1538 = vadd.f32 %v1303, %v1537
        %v1539 = vpop.f32.mrb[0].mxu0
        %1540 = vmatprep.mubr.f32.mxu0 0.0
        %v1541 = vand.u32 %v364, 4294901760
        %1542 = vmatmul.mubr.f32.gmra.mrb[0].mxu0 %v1541
        %v1543 = vpop.f32.mrb[0].mxu0
        %v1544 = vadd.f32 %v1311, %v1543
        %v1545 = vpop.f32.mrb[0].mxu0
        %1546 = vmatprep.mubr.f32.mxu0 0.0
        %v1547 = vand.u32 %v365, 4294901760
        %1548 = vmatmul.mubr.f32.gmra.mrb[0].mxu0 %v1547
        %v1549 = vpop.f32.mrb[0].mxu0
        %v1550 = vadd.f32 %v1319, %v1549
        %v1551 = vpop.f32.mrb[0].mxu0
        %1552 = vmatprep.mubr.f32.mxu0 0.0
        %v1553 = vand.u32 %v366, 4294901760
        %1554 = vmatmul.mubr.f32.gmra.mrb[0].mxu0 %v1553
        %v1555 = vpop.f32.mrb[0].mxu0
        %v1556 = vadd.f32 %v1327, %v1555
        %v1557 = vpop.f32.mrb[0].mxu0
        %1558 = vmatprep.mubr.f32.mxu0 0.0
        %v1559 = vand.u32 %v367, 4294901760
        %1560 = vmatmul.mubr.f32.gmra.mrb[0].mxu0 %v1559
        %v1561 = vpop.f32.mrb[0].mxu0
        %v1562 = vadd.f32 %v1335, %v1561
        %v1563 = vpop.f32.mrb[0].mxu0
        %1564 = vmatprep.mubr.f32.mxu0 0.0
        %v1565 = vand.u32 %v368, 4294901760
        %1566 = vmatmul.mubr.f32.gmra.mrb[0].mxu0 %v1565
        %v1567 = vpop.f32.mrb[0].mxu0
        %v1568 = vadd.f32 %v1343, %v1567
        %v1569 = vpop.f32.mrb[0].mxu0
        %1570 = vmatprep.mubr.f32.mxu0 0.0
        %v1571 = vand.u32 %v369, 4294901760
        %1572 = vmatmul.mubr.f32.gmra.mrb[0].mxu0 %v1571
        %v1573 = vpop.f32.mrb[0].mxu0
        %v1574 = vadd.f32 %v1351, %v1573
        %v1575 = vpop.f32.mrb[0].mxu0
        %1576 = vmatprep.mubr.f32.mxu0 0.0
        %v1577 = vand.u32 %v370, 4294901760
        %1578 = vmatmul.mubr.f32.gmra.mrb[0].mxu0 %v1577
        %v1579 = vpop.f32.mrb[0].mxu0
        %v1580 = vadd.f32 %v1359, %v1579
        %v1581 = vpop.f32.mrb[0].mxu0
        %1582 = vmatprep.mubr.f32.mxu0 0.0
        %v1583 = vand.u32 %v371, 4294901760
        %1584 = vmatmul.mubr.f32.gmra.mrb[0].mxu0 %v1583
        %v1585 = vpop.f32.mrb[0].mxu0
        %v1586 = vadd.f32 %v1367, %v1585
        %v1587 = vpop.f32.mrb[0].mxu0
        %1588 = vmatprep.mubr.f32.mxu0 0.0
        %v1589 = vand.u32 %v372, 4294901760
        %1590 = vmatmul.mubr.f32.gmra.mrb[0].mxu0 %v1589
        %v1591 = vpop.f32.mrb[0].mxu0
        %v1592 = vadd.f32 %v1375, %v1591
        %v1593 = vpop.f32.mrb[0].mxu0
        %1594 = vmatprep.mubr.f32.mxu0 0.0
        %v1595 = vand.u32 %v373, 4294901760
        %1596 = vmatmul.mubr.f32.gmra.mrb[0].mxu0 %v1595
        %v1597 = vpop.f32.mrb[0].mxu0
        %v1598 = vadd.f32 %v1383, %v1597
        %v1599 = vpop.f32.mrb[0].mxu0
        %1600 = vmatprep.mubr.f32.mxu0 0.0
        %v1601 = vand.u32 %v374, 4294901760
        %1602 = vmatmul.mubr.f32.gmra.mrb[0].mxu0 %v1601
        %v1603 = vpop.f32.mrb[0].mxu0
        %v1604 = vadd.f32 %v1391, %v1603
        %v1605 = vpop.f32.mrb[0].mxu0
        %1606 = vmatprep.mubr.f32.mxu0 0.0
        %v1607 = vand.u32 %v375, 4294901760
        %1608 = vmatmul.mubr.f32.gmra.mrb[0].mxu0 %v1607
        %v1609 = vpop.f32.mrb[0].mxu0
        %v1610 = vadd.f32 %v1399, %v1609
        %v1611 = vpop.f32.mrb[0].mxu0
        %1612 = vmatprep.mubr.f32.mxu0 0.0
        %v1613 = vand.u32 %v376, 4294901760
        %1614 = vmatmul.mubr.f32.gmra.mrb[0].mxu0 %v1613
        %v1615 = vpop.f32.mrb[0].mxu0
        %v1616 = vadd.f32 %v1407, %v1615
        %v1617 = vpop.f32.mrb[0].mxu0
        %1618 = vdwg.mxu0
        %1619 = vmatprep.subr.mxu0 0.0
        %v1620 = vand.u32 %v377, 4294901760
        %1621 = vmatpush1.msra.mxu0 %v1620
        %1622 = vmatprep.subr.mxu0 0.0
        %v1623 = vand.u32 %v378, 4294901760
        %1624 = vmatpush1.msra.mxu0 %v1623
        %1625 = vmatprep.subr.mxu0 0.0
        %v1626 = vand.u32 %v379, 4294901760
        %1627 = vmatpush1.msra.mxu0 %v1626
        %1628 = vmatprep.subr.mxu0 0.0
        %v1629 = vand.u32 %v380, 4294901760
        %1630 = vmatpush1.msra.mxu0 %v1629
        %1631 = vmatprep.subr.mxu0 0.0
        %v1632 = vand.u32 %v381, 4294901760
        %1633 = vmatpush1.msra.mxu0 %v1632
        %1634 = vmatprep.subr.mxu0 0.0
        %v1635 = vand.u32 %v382, 4294901760
        %1636 = vmatpush1.msra.mxu0 %v1635
        %1637 = vmatprep.subr.mxu0 0.0
        %v1638 = vand.u32 %v383, 4294901760
        %1639 = vmatpush1.msra.mxu0 %v1638
        %1640 = vmatprep.subr.mxu0 0.0
        %v1641 = vand.u32 %v384, 4294901760
        %1642 = vmatpush1.msra.mxu0 %v1641
        %1643 = vmatprep.subr.mxu0 0.0
        %v1644 = vand.u32 %v385, 4294901760
        %1645 = vmatpush1.msra.mxu0 %v1644
        %1646 = vmatprep.subr.mxu0 0.0
        %v1647 = vand.u32 %v386, 4294901760
        %1648 = vmatpush1.msra.mxu0 %v1647
        %1649 = vmatprep.subr.mxu0 0.0
        %v1650 = vand.u32 %v387, 4294901760
        %1651 = vmatpush1.msra.mxu0 %v1650
        %1652 = vmatprep.subr.mxu0 0.0
        %v1653 = vand.u32 %v388, 4294901760
        %1654 = vmatpush1.msra.mxu0 %v1653
        %1655 = vmatprep.subr.mxu0 0.0
        %v1656 = vand.u32 %v389, 4294901760
        %1657 = vmatpush1.msra.mxu0 %v1656
        %1658 = vmatprep.subr.mxu0 0.0
        %v1659 = vand.u32 %v390, 4294901760
        %1660 = vmatpush1.msra.mxu0 %v1659
        %1661 = vmatprep.subr.mxu0 0.0
        %v1662 = vand.u32 %v391, 4294901760
        %1663 = vmatpush1.msra.mxu0 %v1662
        %1664 = vmatprep.subr.mxu0 0.0
        %v1665 = vand.u32 %v392, 4294901760
        %1666 = vmatpush1.msra.mxu0 %v1665
        %1667 = vmatprep.subr.mxu0 0.0
        %1668 = vmatpush1.msra.mxu0 0.0
        %1669 = vmatprep.subr.mxu0 0.0
        %1670 = vmatpush1.msra.mxu0 0.0
        %1671 = vmatprep.subr.mxu0 0.0
        %1672 = vmatpush1.msra.mxu0 0.0
        %1673 = vmatprep.subr.mxu0 0.0
        %1674 = vmatpush1.msra.mxu0 0.0
        %1675 = vmatprep.subr.mxu0 0.0
        %1676 = vmatpush1.msra.mxu0 0.0
        %1677 = vmatprep.subr.mxu0 0.0
        %1678 = vmatpush1.msra.mxu0 0.0
        %1679 = vmatprep.subr.mxu0 0.0
        %1680 = vmatpush1.msra.mxu0 0.0
        %1681 = vmatprep.subr.mxu0 0.0
        %1682 = vmatpush1.msra.mxu0 0.0
        %1683 = vmatprep.subr.mxu0 0.0
        %1684 = vmatpush1.msra.mxu0 0.0
        %1685 = vmatprep.subr.mxu0 0.0
        %1686 = vmatpush1.msra.mxu0 0.0
        %1687 = vmatprep.subr.mxu0 0.0
        %1688 = vmatpush1.msra.mxu0 0.0
        %1689 = vmatprep.subr.mxu0 0.0
        %1690 = vmatpush1.msra.mxu0 0.0
        %1691 = vmatprep.subr.mxu0 0.0
        %1692 = vmatpush1.msra.mxu0 0.0
        %1693 = vmatprep.subr.mxu0 0.0
        %1694 = vmatpush1.msra.mxu0 0.0
        %1695 = vmatprep.subr.mxu0 0.0
        %1696 = vmatpush1.msra.mxu0 0.0
        %1697 = vmatprep.subr.mxu0 0.0
        %1698 = vmatpush1.msra.mxu0 0.0
        %1699 = vmatprep.mubr.f32.mxu0 0.0
        %v1700 = vand.u32 %v361, 4294901760
        %1701 = vmatmul.mubr.f32.gmra.mrb[0].mxu0 %v1700
        %v1702 = vpop.f32.mrb[0].mxu0
        %v1703 = vadd.f32 %v1526, %v1702
        %v1704 = vpop.f32.mrb[0].mxu0
        %1705 = vmatprep.mubr.f32.mxu0 0.0
        %v1706 = vand.u32 %v362, 4294901760
        %1707 = vmatmul.mubr.f32.gmra.mrb[0].mxu0 %v1706
        %v1708 = vpop.f32.mrb[0].mxu0
        %v1709 = vadd.f32 %v1532, %v1708
        %v1710 = vpop.f32.mrb[0].mxu0
        %1711 = vmatprep.mubr.f32.mxu0 0.0
        %v1712 = vand.u32 %v363, 4294901760
        %1713 = vmatmul.mubr.f32.gmra.mrb[0].mxu0 %v1712
        %v1714 = vpop.f32.mrb[0].mxu0
        %v1715 = vadd.f32 %v1538, %v1714
        %v1716 = vpop.f32.mrb[0].mxu0
        %1717 = vmatprep.mubr.f32.mxu0 0.0
        %v1718 = vand.u32 %v364, 4294901760
        %1719 = vmatmul.mubr.f32.gmra.mrb[0].mxu0 %v1718
        %v1720 = vpop.f32.mrb[0].mxu0
        %v1721 = vadd.f32 %v1544, %v1720
        %v1722 = vpop.f32.mrb[0].mxu0
        %1723 = vmatprep.mubr.f32.mxu0 0.0
        %v1724 = vand.u32 %v365, 4294901760
        %1725 = vmatmul.mubr.f32.gmra.mrb[0].mxu0 %v1724
        %v1726 = vpop.f32.mrb[0].mxu0
        %v1727 = vadd.f32 %v1550, %v1726
        %v1728 = vpop.f32.mrb[0].mxu0
        %1729 = vmatprep.mubr.f32.mxu0 0.0
        %v1730 = vand.u32 %v366, 4294901760
        %1731 = vmatmul.mubr.f32.gmra.mrb[0].mxu0 %v1730
        %v1732 = vpop.f32.mrb[0].mxu0
        %v1733 = vadd.f32 %v1556, %v1732
        %v1734 = vpop.f32.mrb[0].mxu0
        %1735 = vmatprep.mubr.f32.mxu0 0.0
        %v1736 = vand.u32 %v367, 4294901760
        %1737 = vmatmul.mubr.f32.gmra.mrb[0].mxu0 %v1736
        %v1738 = vpop.f32.mrb[0].mxu0
        %v1739 = vadd.f32 %v1562, %v1738
        %v1740 = vpop.f32.mrb[0].mxu0
        %1741 = vmatprep.mubr.f32.mxu0 0.0
        %v1742 = vand.u32 %v368, 4294901760
        %1743 = vmatmul.mubr.f32.gmra.mrb[0].mxu0 %v1742
        %v1744 = vpop.f32.mrb[0].mxu0
        %v1745 = vadd.f32 %v1568, %v1744
        %v1746 = vpop.f32.mrb[0].mxu0
        %1747 = vmatprep.mubr.f32.mxu0 0.0
        %v1748 = vand.u32 %v369, 4294901760
        %1749 = vmatmul.mubr.f32.gmra.mrb[0].mxu0 %v1748
        %v1750 = vpop.f32.mrb[0].mxu0
        %v1751 = vadd.f32 %v1574, %v1750
        %v1752 = vpop.f32.mrb[0].mxu0
        %1753 = vmatprep.mubr.f32.mxu0 0.0
        %v1754 = vand.u32 %v370, 4294901760
        %1755 = vmatmul.mubr.f32.gmra.mrb[0].mxu0 %v1754
        %v1756 = vpop.f32.mrb[0].mxu0
        %v1757 = vadd.f32 %v1580, %v1756
        %v1758 = vpop.f32.mrb[0].mxu0
        %1759 = vmatprep.mubr.f32.mxu0 0.0
        %v1760 = vand.u32 %v371, 4294901760
        %1761 = vmatmul.mubr.f32.gmra.mrb[0].mxu0 %v1760
        %v1762 = vpop.f32.mrb[0].mxu0
        %v1763 = vadd.f32 %v1586, %v1762
        %v1764 = vpop.f32.mrb[0].mxu0
        %1765 = vmatprep.mubr.f32.mxu0 0.0
        %v1766 = vand.u32 %v372, 4294901760
        %1767 = vmatmul.mubr.f32.gmra.mrb[0].mxu0 %v1766
        %v1768 = vpop.f32.mrb[0].mxu0
        %v1769 = vadd.f32 %v1592, %v1768
        %v1770 = vpop.f32.mrb[0].mxu0
        %1771 = vmatprep.mubr.f32.mxu0 0.0
        %v1772 = vand.u32 %v373, 4294901760
        %1773 = vmatmul.mubr.f32.gmra.mrb[0].mxu0 %v1772
        %v1774 = vpop.f32.mrb[0].mxu0
        %v1775 = vadd.f32 %v1598, %v1774
        %v1776 = vpop.f32.mrb[0].mxu0
        %1777 = vmatprep.mubr.f32.mxu0 0.0
        %v1778 = vand.u32 %v374, 4294901760
        %1779 = vmatmul.mubr.f32.gmra.mrb[0].mxu0 %v1778
        %v1780 = vpop.f32.mrb[0].mxu0
        %v1781 = vadd.f32 %v1604, %v1780
        %v1782 = vpop.f32.mrb[0].mxu0
        %1783 = vmatprep.mubr.f32.mxu0 0.0
        %v1784 = vand.u32 %v375, 4294901760
        %1785 = vmatmul.mubr.f32.gmra.mrb[0].mxu0 %v1784
        %v1786 = vpop.f32.mrb[0].mxu0
        %v1787 = vadd.f32 %v1610, %v1786
        %v1788 = vpop.f32.mrb[0].mxu0
        %1789 = vmatprep.mubr.f32.mxu0 0.0
        %v1790 = vand.u32 %v376, 4294901760
        %1791 = vmatmul.mubr.f32.gmra.mrb[0].mxu0 %v1790
        %v1792 = vpop.f32.mrb[0].mxu0
        %v1793 = vadd.f32 %v1616, %v1792
        %v1794 = vpop.f32.mrb[0].mxu0
        %1795 = vdwg.mxu0
        %v1796 = vld [vmem:[%s2 + $0x1] sm:$0x1]
        %1797 = vset.pattern.permute.xlu0 1
        %1798 = vperm.xlu0 %1797, %v393
        %v1799 = vpop.permute.xlu0 %1798
        %1801 = vset.pattern.permute.xlu0 1
        %1802 = vperm.xlu0 %1801, %v394
        %v1803 = vpop.permute.xlu0 %1802
        %1805 = vset.pattern.permute.xlu0 1
        %1806 = vperm.xlu0 %1805, %v395
        %v1807 = vpop.permute.xlu0 %1806
        %1809 = vset.pattern.permute.xlu0 1
        %1810 = vperm.xlu0 %1809, %v396
        %v1811 = vpop.permute.xlu0 %1810
        %1813 = vset.pattern.permute.xlu0 1
        %1814 = vperm.xlu0 %1813, %v397
        %v1815 = vpop.permute.xlu0 %1814
        %1817 = vset.pattern.permute.xlu0 1
        %1818 = vperm.xlu0 %1817, %v398
        %v1819 = vpop.permute.xlu0 %1818
        %1821 = vset.pattern.permute.xlu0 1
        %1822 = vperm.xlu0 %1821, %v399
        %v1823 = vpop.permute.xlu0 %1822
        %1825 = vset.pattern.permute.xlu0 1
        %1826 = vperm.xlu0 %1825, %v400
        %v1827 = vpop.permute.xlu0 %1826
        %1829 = vset.pattern.permute.xlu0 1
        %1830 = vperm.xlu0 %1829, %v401
        %v1831 = vpop.permute.xlu0 %1830
        %1833 = vset.pattern.permute.xlu0 1
        %1834 = vperm.xlu0 %1833, %v402
        %v1835 = vpop.permute.xlu0 %1834
        %1837 = vset.pattern.permute.xlu0 1
        %1838 = vperm.xlu0 %1837, %v403
        %v1839 = vpop.permute.xlu0 %1838
        %1841 = vset.pattern.permute.xlu0 1
        %1842 = vperm.xlu0 %1841, %v404
        %v1843 = vpop.permute.xlu0 %1842
        %1845 = vset.pattern.permute.xlu0 1
        %1846 = vperm.xlu0 %1845, %v405
        %v1847 = vpop.permute.xlu0 %1846
        %1849 = vset.pattern.permute.xlu0 1
        %1850 = vperm.xlu0 %1849, %v406
        %v1851 = vpop.permute.xlu0 %1850
        %1853 = vset.pattern.permute.xlu0 1
        %1854 = vperm.xlu0 %1853, %v407
        %v1855 = vpop.permute.xlu0 %1854
        %1857 = vset.pattern.permute.xlu0 1
        %1858 = vperm.xlu0 %1857, %v408
        %v1859 = vpop.permute.xlu0 %1858
        %v1861 = vlaneseq
        %v1862 = vshrl.u32 %v1861, 7
        %v1863 = vsub.s32 0, %v1862
        %v1864 = vrot.slane %v1796, %v1863
        %v1865 = vmul.f32 %v1799, %v1864
        %v1866 = vmul.f32 %v1803, %v1864
        %v1867 = vmul.f32 %v1807, %v1864
        %v1868 = vmul.f32 %v1811, %v1864
        %v1869 = vmul.f32 %v1815, %v1864
        %v1870 = vmul.f32 %v1819, %v1864
        %v1871 = vmul.f32 %v1823, %v1864
        %v1872 = vmul.f32 %v1827, %v1864
        %v1873 = vmul.f32 %v1831, %v1864
        %v1874 = vmul.f32 %v1835, %v1864
        %v1875 = vmul.f32 %v1839, %v1864
        %v1876 = vmul.f32 %v1843, %v1864
        %v1877 = vmul.f32 %v1847, %v1864
        %v1878 = vmul.f32 %v1851, %v1864
        %v1879 = vmul.f32 %v1855, %v1864
        %v1880 = vmul.f32 %v1859, %v1864
        %v1881 = vadd.f32 %v1703, %v1865
        %v1882 = vadd.f32 %v1709, %v1866
        %v1883 = vadd.f32 %v1715, %v1867
        %v1884 = vadd.f32 %v1721, %v1868
        %v1885 = vadd.f32 %v1727, %v1869
        %v1886 = vadd.f32 %v1733, %v1870
        %v1887 = vadd.f32 %v1739, %v1871
        %v1888 = vadd.f32 %v1745, %v1872
        %v1889 = vadd.f32 %v1751, %v1873
        %v1890 = vadd.f32 %v1757, %v1874
        %v1891 = vadd.f32 %v1763, %v1875
        %v1892 = vadd.f32 %v1769, %v1876
        %v1893 = vadd.f32 %v1775, %v1877
        %v1894 = vadd.f32 %v1781, %v1878
        %v1895 = vadd.f32 %v1787, %v1879
        %v1896 = vadd.f32 %v1793, %v1880
        %v1897 = vmax.f32 %v1881, 0.0
        %v1898 = vmax.f32 %v1882, 0.0
        %v1899 = vmax.f32 %v1883, 0.0
        %v1900 = vmax.f32 %v1884, 0.0
        %v1901 = vmax.f32 %v1885, 0.0
        %v1902 = vmax.f32 %v1886, 0.0
        %v1903 = vmax.f32 %v1887, 0.0
        %v1904 = vmax.f32 %v1888, 0.0
        %v1905 = vmax.f32 %v1889, 0.0
        %v1906 = vmax.f32 %v1890, 0.0
        %v1907 = vmax.f32 %v1891, 0.0
        %v1908 = vmax.f32 %v1892, 0.0
        %v1909 = vmax.f32 %v1893, 0.0
        %v1910 = vmax.f32 %v1894, 0.0
        %v1911 = vmax.f32 %v1895, 0.0
        %v1912 = vmax.f32 %v1896, 0.0
        %v1913 = vld [vmem:[%s3] sm:$0xff]
        %v1914 = vld [vmem:[%s3 + $0x8] sm:$0xff]
        %v1915 = vld [vmem:[%s3 + $0x10] sm:$0xff]
        %v1916 = vld [vmem:[%s3 + $0x18] sm:$0xff]
        %v1917 = vld [vmem:[%s3 + $0x20] sm:$0xff]
        %v1918 = vld [vmem:[%s3 + $0x28] sm:$0xff]
        %v1919 = vld [vmem:[%s3 + $0x30] sm:$0xff]
        %v1920 = vld [vmem:[%s3 + $0x38] sm:$0xf]
        %v1921 = vld [vmem:[%s4] sm:$0x1]
        %v1923 = vlaneseq
        %v1924 = vshrl.u32 %v1923, 7
        %v1925 = vsub.s32 0, %v1924
        %v1926 = vrot.slane %v1921, %v1925
        %vm1928 = vcmask 490496
        %v1930 = vsel %vm1928, %v1897, 0
        %v1933 = vsel %vm1928, %v1898, 0
        %v1936 = vsel %vm1928, %v1899, 0
        %v1939 = vsel %vm1928, %v1900, 0
        %v1942 = vsel %vm1928, %v1901, 0
        %v1945 = vsel %vm1928, %v1902, 0
        %v1948 = vsel %vm1928, %v1903, 0
        %v1951 = vsel %vm1928, %v1904, 0
        %v1954 = vsel %vm1928, %v1905, 0
        %v1957 = vsel %vm1928, %v1906, 0
        %v1960 = vsel %vm1928, %v1907, 0
        %v1963 = vsel %vm1928, %v1908, 0
        %v1966 = vsel %vm1928, %v1909, 0
        %v1969 = vsel %vm1928, %v1910, 0
        %v1972 = vsel %vm1928, %v1911, 0
        %v1975 = vsel %vm1928, %v1912, 0
        %vm1977 = vcmask 1043456
        %v1979 = vsel %vm1977, %v1920, 0
        %1981 = vmatprep.subr.mxu0 0.0
        %v1982 = vand.u32 %v1913, 4294901760
        %1983 = vmatpush1.msra.mxu0 %v1982
        %1984 = vmatprep.subr.mxu0 0.0
        %v1985 = vand.u32 %v1914, 4294901760
        %1986 = vmatpush1.msra.mxu0 %v1985
        %1987 = vmatprep.subr.mxu0 0.0
        %v1988 = vand.u32 %v1915, 4294901760
        %1989 = vmatpush1.msra.mxu0 %v1988
        %1990 = vmatprep.subr.mxu0 0.0
        %v1991 = vand.u32 %v1916, 4294901760
        %1992 = vmatpush1.msra.mxu0 %v1991
        %1993 = vmatprep.subr.mxu0 0.0
        %v1994 = vand.u32 %v1917, 4294901760
        %1995 = vmatpush1.msra.mxu0 %v1994
        %1996 = vmatprep.subr.mxu0 0.0
        %v1997 = vand.u32 %v1918, 4294901760
        %1998 = vmatpush1.msra.mxu0 %v1997
        %1999 = vmatprep.subr.mxu0 0.0
        %v2000 = vand.u32 %v1919, 4294901760
        %2001 = vmatpush1.msra.mxu0 %v2000
        %2002 = vmatprep.subr.mxu0 0.0
        %v2003 = vand.u32 %v1979, 4294901760
        %2004 = vmatpush1.msra.mxu0 %v2003
        %2005 = vmatprep.subr.mxu0 0.0
        %2006 = vmatpush1.msra.mxu0 0.0
        %2007 = vmatprep.subr.mxu0 0.0
        %2008 = vmatpush1.msra.mxu0 0.0
        %2009 = vmatprep.subr.mxu0 0.0
        %2010 = vmatpush1.msra.mxu0 0.0
        %2011 = vmatprep.subr.mxu0 0.0
        %2012 = vmatpush1.msra.mxu0 0.0
        %2013 = vmatprep.subr.mxu0 0.0
        %2014 = vmatpush1.msra.mxu0 0.0
        %2015 = vmatprep.subr.mxu0 0.0
        %2016 = vmatpush1.msra.mxu0 0.0
        %2017 = vmatprep.subr.mxu0 0.0
        %2018 = vmatpush1.msra.mxu0 0.0
        %2019 = vmatprep.subr.mxu0 0.0
        %2020 = vmatpush1.msra.mxu0 0.0
        %2021 = vmatprep.subr.mxu0 0.0
        %2022 = vmatpush1.msra.mxu0 0.0
        %2023 = vmatprep.subr.mxu0 0.0
        %2024 = vmatpush1.msra.mxu0 0.0
        %2025 = vmatprep.subr.mxu0 0.0
        %2026 = vmatpush1.msra.mxu0 0.0
        %2027 = vmatprep.subr.mxu0 0.0
        %2028 = vmatpush1.msra.mxu0 0.0
        %2029 = vmatprep.subr.mxu0 0.0
        %2030 = vmatpush1.msra.mxu0 0.0
        %2031 = vmatprep.subr.mxu0 0.0
        %2032 = vmatpush1.msra.mxu0 0.0
        %2033 = vmatprep.subr.mxu0 0.0
        %2034 = vmatpush1.msra.mxu0 0.0
        %2035 = vmatprep.subr.mxu0 0.0
        %2036 = vmatpush1.msra.mxu0 0.0
        %2037 = vmatprep.subr.mxu0 0.0
        %2038 = vmatpush1.msra.mxu0 0.0
        %2039 = vmatprep.subr.mxu0 0.0
        %2040 = vmatpush1.msra.mxu0 0.0
        %2041 = vmatprep.subr.mxu0 0.0
        %2042 = vmatpush1.msra.mxu0 0.0
        %2043 = vmatprep.subr.mxu0 0.0
        %2044 = vmatpush1.msra.mxu0 0.0
        %2045 = vmatprep.subr.mxu0 0.0
        %2046 = vmatpush1.msra.mxu0 0.0
        %2047 = vmatprep.subr.mxu0 0.0
        %2048 = vmatpush1.msra.mxu0 0.0
        %2049 = vmatprep.subr.mxu0 0.0
        %2050 = vmatpush1.msra.mxu0 0.0
        %2051 = vmatprep.subr.mxu0 0.0
        %2052 = vmatpush1.msra.mxu0 0.0
        %2053 = vmatprep.mubr.f32.mxu0 0.0
        %v2054 = vand.u32 %v1930, 4294901760
        %v2055 = vsub.f32 %v1930, %v2054
        %v2056 = vand.u32 %v2055, 4294901760
        %v2057 = vsub.f32 %v2055, %v2056
        %v2058 = vand.u32 %v2057, 4294901760
        %2059 = vmatmul.mubr.f32.gmra.mrb[0].mxu0 %v2058
        %v2060 = vpop.f32.mrb[0].mxu0
        %v2061 = vadd.f32 %v1926, %v2060
        %v2062 = vpop.f32.mrb[0].mxu0
        %2063 = vmatprep.mubr.f32.mxu0 0.0
        %v2064 = vand.u32 %v1933, 4294901760
        %v2065 = vsub.f32 %v1933, %v2064
        %v2066 = vand.u32 %v2065, 4294901760
        %v2067 = vsub.f32 %v2065, %v2066
        %v2068 = vand.u32 %v2067, 4294901760
        %2069 = vmatmul.mubr.f32.gmra.mrb[0].mxu0 %v2068
        %v2070 = vpop.f32.mrb[0].mxu0
        %v2071 = vadd.f32 %v1926, %v2070
        %v2072 = vpop.f32.mrb[0].mxu0
        %2073 = vmatprep.mubr.f32.mxu0 0.0
        %v2074 = vand.u32 %v1936, 4294901760
        %v2075 = vsub.f32 %v1936, %v2074
        %v2076 = vand.u32 %v2075, 4294901760
        %v2077 = vsub.f32 %v2075, %v2076
        %v2078 = vand.u32 %v2077, 4294901760
        %2079 = vmatmul.mubr.f32.gmra.mrb[0].mxu0 %v2078
        %v2080 = vpop.f32.mrb[0].mxu0
        %v2081 = vadd.f32 %v1926, %v2080
        %v2082 = vpop.f32.mrb[0].mxu0
        %2083 = vmatprep.mubr.f32.mxu0 0.0
        %v2084 = vand.u32 %v1939, 4294901760
        %v2085 = vsub.f32 %v1939, %v2084
        %v2086 = vand.u32 %v2085, 4294901760
        %v2087 = vsub.f32 %v2085, %v2086
        %v2088 = vand.u32 %v2087, 4294901760
        %2089 = vmatmul.mubr.f32.gmra.mrb[0].mxu0 %v2088
        %v2090 = vpop.f32.mrb[0].mxu0
        %v2091 = vadd.f32 %v1926, %v2090
        %v2092 = vpop.f32.mrb[0].mxu0
        %2093 = vmatprep.mubr.f32.mxu0 0.0
        %v2094 = vand.u32 %v1942, 4294901760
        %v2095 = vsub.f32 %v1942, %v2094
        %v2096 = vand.u32 %v2095, 4294901760
        %v2097 = vsub.f32 %v2095, %v2096
        %v2098 = vand.u32 %v2097, 4294901760
        %2099 = vmatmul.mubr.f32.gmra.mrb[0].mxu0 %v2098
        %v2100 = vpop.f32.mrb[0].mxu0
        %v2101 = vadd.f32 %v1926, %v2100
        %v2102 = vpop.f32.mrb[0].mxu0
        %2103 = vmatprep.mubr.f32.mxu0 0.0
        %v2104 = vand.u32 %v1945, 4294901760
        %v2105 = vsub.f32 %v1945, %v2104
        %v2106 = vand.u32 %v2105, 4294901760
        %v2107 = vsub.f32 %v2105, %v2106
        %v2108 = vand.u32 %v2107, 4294901760
        %2109 = vmatmul.mubr.f32.gmra.mrb[0].mxu0 %v2108
        %v2110 = vpop.f32.mrb[0].mxu0
        %v2111 = vadd.f32 %v1926, %v2110
        %v2112 = vpop.f32.mrb[0].mxu0
        %2113 = vmatprep.mubr.f32.mxu0 0.0
        %v2114 = vand.u32 %v1948, 4294901760
        %v2115 = vsub.f32 %v1948, %v2114
        %v2116 = vand.u32 %v2115, 4294901760
        %v2117 = vsub.f32 %v2115, %v2116
        %v2118 = vand.u32 %v2117, 4294901760
        %2119 = vmatmul.mubr.f32.gmra.mrb[0].mxu0 %v2118
        %v2120 = vpop.f32.mrb[0].mxu0
        %v2121 = vadd.f32 %v1926, %v2120
        %v2122 = vpop.f32.mrb[0].mxu0
        %2123 = vmatprep.mubr.f32.mxu0 0.0
        %v2124 = vand.u32 %v1951, 4294901760
        %v2125 = vsub.f32 %v1951, %v2124
        %v2126 = vand.u32 %v2125, 4294901760
        %v2127 = vsub.f32 %v2125, %v2126
        %v2128 = vand.u32 %v2127, 4294901760
        %2129 = vmatmul.mubr.f32.gmra.mrb[0].mxu0 %v2128
        %v2130 = vpop.f32.mrb[0].mxu0
        %v2131 = vadd.f32 %v1926, %v2130
        %v2132 = vpop.f32.mrb[0].mxu0
        %2133 = vmatprep.mubr.f32.mxu0 0.0
        %v2134 = vand.u32 %v1954, 4294901760
        %v2135 = vsub.f32 %v1954, %v2134
        %v2136 = vand.u32 %v2135, 4294901760
        %v2137 = vsub.f32 %v2135, %v2136
        %v2138 = vand.u32 %v2137, 4294901760
        %2139 = vmatmul.mubr.f32.gmra.mrb[0].mxu0 %v2138
        %v2140 = vpop.f32.mrb[0].mxu0
        %v2141 = vadd.f32 %v1926, %v2140
        %v2142 = vpop.f32.mrb[0].mxu0
        %2143 = vmatprep.mubr.f32.mxu0 0.0
        %v2144 = vand.u32 %v1957, 4294901760
        %v2145 = vsub.f32 %v1957, %v2144
        %v2146 = vand.u32 %v2145, 4294901760
        %v2147 = vsub.f32 %v2145, %v2146
        %v2148 = vand.u32 %v2147, 4294901760
        %2149 = vmatmul.mubr.f32.gmra.mrb[0].mxu0 %v2148
        %v2150 = vpop.f32.mrb[0].mxu0
        %v2151 = vadd.f32 %v1926, %v2150
        %v2152 = vpop.f32.mrb[0].mxu0
        %2153 = vmatprep.mubr.f32.mxu0 0.0
        %v2154 = vand.u32 %v1960, 4294901760
        %v2155 = vsub.f32 %v1960, %v2154
        %v2156 = vand.u32 %v2155, 4294901760
        %v2157 = vsub.f32 %v2155, %v2156
        %v2158 = vand.u32 %v2157, 4294901760
        %2159 = vmatmul.mubr.f32.gmra.mrb[0].mxu0 %v2158
        %v2160 = vpop.f32.mrb[0].mxu0
        %v2161 = vadd.f32 %v1926, %v2160
        %v2162 = vpop.f32.mrb[0].mxu0
        %2163 = vmatprep.mubr.f32.mxu0 0.0
        %v2164 = vand.u32 %v1963, 4294901760
        %v2165 = vsub.f32 %v1963, %v2164
        %v2166 = vand.u32 %v2165, 4294901760
        %v2167 = vsub.f32 %v2165, %v2166
        %v2168 = vand.u32 %v2167, 4294901760
        %2169 = vmatmul.mubr.f32.gmra.mrb[0].mxu0 %v2168
        %v2170 = vpop.f32.mrb[0].mxu0
        %v2171 = vadd.f32 %v1926, %v2170
        %v2172 = vpop.f32.mrb[0].mxu0
        %2173 = vmatprep.mubr.f32.mxu0 0.0
        %v2174 = vand.u32 %v1966, 4294901760
        %v2175 = vsub.f32 %v1966, %v2174
        %v2176 = vand.u32 %v2175, 4294901760
        %v2177 = vsub.f32 %v2175, %v2176
        %v2178 = vand.u32 %v2177, 4294901760
        %2179 = vmatmul.mubr.f32.gmra.mrb[0].mxu0 %v2178
        %v2180 = vpop.f32.mrb[0].mxu0
        %v2181 = vadd.f32 %v1926, %v2180
        %v2182 = vpop.f32.mrb[0].mxu0
        %2183 = vmatprep.mubr.f32.mxu0 0.0
        %v2184 = vand.u32 %v1969, 4294901760
        %v2185 = vsub.f32 %v1969, %v2184
        %v2186 = vand.u32 %v2185, 4294901760
        %v2187 = vsub.f32 %v2185, %v2186
        %v2188 = vand.u32 %v2187, 4294901760
        %2189 = vmatmul.mubr.f32.gmra.mrb[0].mxu0 %v2188
        %v2190 = vpop.f32.mrb[0].mxu0
        %v2191 = vadd.f32 %v1926, %v2190
        %v2192 = vpop.f32.mrb[0].mxu0
        %2193 = vmatprep.mubr.f32.mxu0 0.0
        %v2194 = vand.u32 %v1972, 4294901760
        %v2195 = vsub.f32 %v1972, %v2194
        %v2196 = vand.u32 %v2195, 4294901760
        %v2197 = vsub.f32 %v2195, %v2196
        %v2198 = vand.u32 %v2197, 4294901760
        %2199 = vmatmul.mubr.f32.gmra.mrb[0].mxu0 %v2198
        %v2200 = vpop.f32.mrb[0].mxu0
        %v2201 = vadd.f32 %v1926, %v2200
        %v2202 = vpop.f32.mrb[0].mxu0
        %2203 = vmatprep.mubr.f32.mxu0 0.0
        %v2204 = vand.u32 %v1975, 4294901760
        %v2205 = vsub.f32 %v1975, %v2204
        %v2206 = vand.u32 %v2205, 4294901760
        %v2207 = vsub.f32 %v2205, %v2206
        %v2208 = vand.u32 %v2207, 4294901760
        %2209 = vmatmul.mubr.f32.gmra.mrb[0].mxu0 %v2208
        %v2210 = vpop.f32.mrb[0].mxu0
        %v2211 = vadd.f32 %v1926, %v2210
        %v2212 = vpop.f32.mrb[0].mxu0
        %2213 = vdwg.mxu0
        %2214 = vmatprep.subr.mxu0 0.0
        %v2215 = vand.u32 %v1913, 4294901760
        %v2216 = vsub.f32 %v1913, %v2215
        %v2217 = vand.u32 %v2216, 4294901760
        %v2218 = vsub.f32 %v2216, %v2217
        %v2219 = vand.u32 %v2218, 4294901760
        %2220 = vmatpush1.msra.mxu0 %v2219
        %2221 = vmatprep.subr.mxu0 0.0
        %v2222 = vand.u32 %v1914, 4294901760
        %v2223 = vsub.f32 %v1914, %v2222
        %v2224 = vand.u32 %v2223, 4294901760
        %v2225 = vsub.f32 %v2223, %v2224
        %v2226 = vand.u32 %v2225, 4294901760
        %2227 = vmatpush1.msra.mxu0 %v2226
        %2228 = vmatprep.subr.mxu0 0.0
        %v2229 = vand.u32 %v1915, 4294901760
        %v2230 = vsub.f32 %v1915, %v2229
        %v2231 = vand.u32 %v2230, 4294901760
        %v2232 = vsub.f32 %v2230, %v2231
        %v2233 = vand.u32 %v2232, 4294901760
        %2234 = vmatpush1.msra.mxu0 %v2233
        %2235 = vmatprep.subr.mxu0 0.0
        %v2236 = vand.u32 %v1916, 4294901760
        %v2237 = vsub.f32 %v1916, %v2236
        %v2238 = vand.u32 %v2237, 4294901760
        %v2239 = vsub.f32 %v2237, %v2238
        %v2240 = vand.u32 %v2239, 4294901760
        %2241 = vmatpush1.msra.mxu0 %v2240
        %2242 = vmatprep.subr.mxu0 0.0
        %v2243 = vand.u32 %v1917, 4294901760
        %v2244 = vsub.f32 %v1917, %v2243
        %v2245 = vand.u32 %v2244, 4294901760
        %v2246 = vsub.f32 %v2244, %v2245
        %v2247 = vand.u32 %v2246, 4294901760
        %2248 = vmatpush1.msra.mxu0 %v2247
        %2249 = vmatprep.subr.mxu0 0.0
        %v2250 = vand.u32 %v1918, 4294901760
        %v2251 = vsub.f32 %v1918, %v2250
        %v2252 = vand.u32 %v2251, 4294901760
        %v2253 = vsub.f32 %v2251, %v2252
        %v2254 = vand.u32 %v2253, 4294901760
        %2255 = vmatpush1.msra.mxu0 %v2254
        %2256 = vmatprep.subr.mxu0 0.0
        %v2257 = vand.u32 %v1919, 4294901760
        %v2258 = vsub.f32 %v1919, %v2257
        %v2259 = vand.u32 %v2258, 4294901760
        %v2260 = vsub.f32 %v2258, %v2259
        %v2261 = vand.u32 %v2260, 4294901760
        %2262 = vmatpush1.msra.mxu0 %v2261
        %2263 = vmatprep.subr.mxu0 0.0
        %v2264 = vand.u32 %v1979, 4294901760
        %v2265 = vsub.f32 %v1979, %v2264
        %v2266 = vand.u32 %v2265, 4294901760
        %v2267 = vsub.f32 %v2265, %v2266
        %v2268 = vand.u32 %v2267, 4294901760
        %2269 = vmatpush1.msra.mxu0 %v2268
        %2270 = vmatprep.subr.mxu0 0.0
        %2271 = vmatpush1.msra.mxu0 0.0
        %2272 = vmatprep.subr.mxu0 0.0
        %2273 = vmatpush1.msra.mxu0 0.0
        %2274 = vmatprep.subr.mxu0 0.0
        %2275 = vmatpush1.msra.mxu0 0.0
        %2276 = vmatprep.subr.mxu0 0.0
        %2277 = vmatpush1.msra.mxu0 0.0
        %2278 = vmatprep.subr.mxu0 0.0
        %2279 = vmatpush1.msra.mxu0 0.0
        %2280 = vmatprep.subr.mxu0 0.0
        %2281 = vmatpush1.msra.mxu0 0.0
        %2282 = vmatprep.subr.mxu0 0.0
        %2283 = vmatpush1.msra.mxu0 0.0
        %2284 = vmatprep.subr.mxu0 0.0
        %2285 = vmatpush1.msra.mxu0 0.0
        %2286 = vmatprep.subr.mxu0 0.0
        %2287 = vmatpush1.msra.mxu0 0.0
        %2288 = vmatprep.subr.mxu0 0.0
        %2289 = vmatpush1.msra.mxu0 0.0
        %2290 = vmatprep.subr.mxu0 0.0
        %2291 = vmatpush1.msra.mxu0 0.0
        %2292 = vmatprep.subr.mxu0 0.0
        %2293 = vmatpush1.msra.mxu0 0.0
        %2294 = vmatprep.subr.mxu0 0.0
        %2295 = vmatpush1.msra.mxu0 0.0
        %2296 = vmatprep.subr.mxu0 0.0
        %2297 = vmatpush1.msra.mxu0 0.0
        %2298 = vmatprep.subr.mxu0 0.0
        %2299 = vmatpush1.msra.mxu0 0.0
        %2300 = vmatprep.subr.mxu0 0.0
        %2301 = vmatpush1.msra.mxu0 0.0
        %2302 = vmatprep.subr.mxu0 0.0
        %2303 = vmatpush1.msra.mxu0 0.0
        %2304 = vmatprep.subr.mxu0 0.0
        %2305 = vmatpush1.msra.mxu0 0.0
        %2306 = vmatprep.subr.mxu0 0.0
        %2307 = vmatpush1.msra.mxu0 0.0
        %2308 = vmatprep.subr.mxu0 0.0
        %2309 = vmatpush1.msra.mxu0 0.0
        %2310 = vmatprep.subr.mxu0 0.0
        %2311 = vmatpush1.msra.mxu0 0.0
        %2312 = vmatprep.subr.mxu0 0.0
        %2313 = vmatpush1.msra.mxu0 0.0
        %2314 = vmatprep.subr.mxu0 0.0
        %2315 = vmatpush1.msra.mxu0 0.0
        %2316 = vmatprep.subr.mxu0 0.0
        %2317 = vmatpush1.msra.mxu0 0.0
        %2318 = vmatprep.mubr.f32.mxu0 0.0
        %v2319 = vand.u32 %v1930, 4294901760
        %2320 = vmatmul.mubr.f32.gmra.mrb[0].mxu0 %v2319
        %v2321 = vpop.f32.mrb[0].mxu0
        %v2322 = vadd.f32 %v2061, %v2321
        %v2323 = vpop.f32.mrb[0].mxu0
        %2324 = vmatprep.mubr.f32.mxu0 0.0
        %v2325 = vand.u32 %v1933, 4294901760
        %2326 = vmatmul.mubr.f32.gmra.mrb[0].mxu0 %v2325
        %v2327 = vpop.f32.mrb[0].mxu0
        %v2328 = vadd.f32 %v2071, %v2327
        %v2329 = vpop.f32.mrb[0].mxu0
        %2330 = vmatprep.mubr.f32.mxu0 0.0
        %v2331 = vand.u32 %v1936, 4294901760
        %2332 = vmatmul.mubr.f32.gmra.mrb[0].mxu0 %v2331
        %v2333 = vpop.f32.mrb[0].mxu0
        %v2334 = vadd.f32 %v2081, %v2333
        %v2335 = vpop.f32.mrb[0].mxu0
        %2336 = vmatprep.mubr.f32.mxu0 0.0
        %v2337 = vand.u32 %v1939, 4294901760
        %2338 = vmatmul.mubr.f32.gmra.mrb[0].mxu0 %v2337
        %v2339 = vpop.f32.mrb[0].mxu0
        %v2340 = vadd.f32 %v2091, %v2339
        %v2341 = vpop.f32.mrb[0].mxu0
        %2342 = vmatprep.mubr.f32.mxu0 0.0
        %v2343 = vand.u32 %v1942, 4294901760
        %2344 = vmatmul.mubr.f32.gmra.mrb[0].mxu0 %v2343
        %v2345 = vpop.f32.mrb[0].mxu0
        %v2346 = vadd.f32 %v2101, %v2345
        %v2347 = vpop.f32.mrb[0].mxu0
        %2348 = vmatprep.mubr.f32.mxu0 0.0
        %v2349 = vand.u32 %v1945, 4294901760
        %2350 = vmatmul.mubr.f32.gmra.mrb[0].mxu0 %v2349
        %v2351 = vpop.f32.mrb[0].mxu0
        %v2352 = vadd.f32 %v2111, %v2351
        %v2353 = vpop.f32.mrb[0].mxu0
        %2354 = vmatprep.mubr.f32.mxu0 0.0
        %v2355 = vand.u32 %v1948, 4294901760
        %2356 = vmatmul.mubr.f32.gmra.mrb[0].mxu0 %v2355
        %v2357 = vpop.f32.mrb[0].mxu0
        %v2358 = vadd.f32 %v2121, %v2357
        %v2359 = vpop.f32.mrb[0].mxu0
        %2360 = vmatprep.mubr.f32.mxu0 0.0
        %v2361 = vand.u32 %v1951, 4294901760
        %2362 = vmatmul.mubr.f32.gmra.mrb[0].mxu0 %v2361
        %v2363 = vpop.f32.mrb[0].mxu0
        %v2364 = vadd.f32 %v2131, %v2363
        %v2365 = vpop.f32.mrb[0].mxu0
        %2366 = vmatprep.mubr.f32.mxu0 0.0
        %v2367 = vand.u32 %v1954, 4294901760
        %2368 = vmatmul.mubr.f32.gmra.mrb[0].mxu0 %v2367
        %v2369 = vpop.f32.mrb[0].mxu0
        %v2370 = vadd.f32 %v2141, %v2369
        %v2371 = vpop.f32.mrb[0].mxu0
        %2372 = vmatprep.mubr.f32.mxu0 0.0
        %v2373 = vand.u32 %v1957, 4294901760
        %2374 = vmatmul.mubr.f32.gmra.mrb[0].mxu0 %v2373
        %v2375 = vpop.f32.mrb[0].mxu0
        %v2376 = vadd.f32 %v2151, %v2375
        %v2377 = vpop.f32.mrb[0].mxu0
        %2378 = vmatprep.mubr.f32.mxu0 0.0
        %v2379 = vand.u32 %v1960, 4294901760
        %2380 = vmatmul.mubr.f32.gmra.mrb[0].mxu0 %v2379
        %v2381 = vpop.f32.mrb[0].mxu0
        %v2382 = vadd.f32 %v2161, %v2381
        %v2383 = vpop.f32.mrb[0].mxu0
        %2384 = vmatprep.mubr.f32.mxu0 0.0
        %v2385 = vand.u32 %v1963, 4294901760
        %2386 = vmatmul.mubr.f32.gmra.mrb[0].mxu0 %v2385
        %v2387 = vpop.f32.mrb[0].mxu0
        %v2388 = vadd.f32 %v2171, %v2387
        %v2389 = vpop.f32.mrb[0].mxu0
        %2390 = vmatprep.mubr.f32.mxu0 0.0
        %v2391 = vand.u32 %v1966, 4294901760
        %2392 = vmatmul.mubr.f32.gmra.mrb[0].mxu0 %v2391
        %v2393 = vpop.f32.mrb[0].mxu0
        %v2394 = vadd.f32 %v2181, %v2393
        %v2395 = vpop.f32.mrb[0].mxu0
        %2396 = vmatprep.mubr.f32.mxu0 0.0
        %v2397 = vand.u32 %v1969, 4294901760
        %2398 = vmatmul.mubr.f32.gmra.mrb[0].mxu0 %v2397
        %v2399 = vpop.f32.mrb[0].mxu0
        %v2400 = vadd.f32 %v2191, %v2399
        %v2401 = vpop.f32.mrb[0].mxu0
        %2402 = vmatprep.mubr.f32.mxu0 0.0
        %v2403 = vand.u32 %v1972, 4294901760
        %2404 = vmatmul.mubr.f32.gmra.mrb[0].mxu0 %v2403
        %v2405 = vpop.f32.mrb[0].mxu0
        %v2406 = vadd.f32 %v2201, %v2405
        %v2407 = vpop.f32.mrb[0].mxu0
        %2408 = vmatprep.mubr.f32.mxu0 0.0
        %v2409 = vand.u32 %v1975, 4294901760
        %2410 = vmatmul.mubr.f32.gmra.mrb[0].mxu0 %v2409
        %v2411 = vpop.f32.mrb[0].mxu0
        %v2412 = vadd.f32 %v2211, %v2411
        %v2413 = vpop.f32.mrb[0].mxu0
        %2414 = vdwg.mxu0
        %2415 = vmatprep.subr.mxu0 0.0
        %v2416 = vand.u32 %v1913, 4294901760
        %v2417 = vsub.f32 %v1913, %v2416
        %2418 = vmatpush1.msra.mxu0 %v2417
        %2419 = vmatprep.subr.mxu0 0.0
        %v2420 = vand.u32 %v1914, 4294901760
        %v2421 = vsub.f32 %v1914, %v2420
        %2422 = vmatpush1.msra.mxu0 %v2421
        %2423 = vmatprep.subr.mxu0 0.0
        %v2424 = vand.u32 %v1915, 4294901760
        %v2425 = vsub.f32 %v1915, %v2424
        %2426 = vmatpush1.msra.mxu0 %v2425
        %2427 = vmatprep.subr.mxu0 0.0
        %v2428 = vand.u32 %v1916, 4294901760
        %v2429 = vsub.f32 %v1916, %v2428
        %2430 = vmatpush1.msra.mxu0 %v2429
        %2431 = vmatprep.subr.mxu0 0.0
        %v2432 = vand.u32 %v1917, 4294901760
        %v2433 = vsub.f32 %v1917, %v2432
        %2434 = vmatpush1.msra.mxu0 %v2433
        %2435 = vmatprep.subr.mxu0 0.0
        %v2436 = vand.u32 %v1918, 4294901760
        %v2437 = vsub.f32 %v1918, %v2436
        %2438 = vmatpush1.msra.mxu0 %v2437
        %2439 = vmatprep.subr.mxu0 0.0
        %v2440 = vand.u32 %v1919, 4294901760
        %v2441 = vsub.f32 %v1919, %v2440
        %2442 = vmatpush1.msra.mxu0 %v2441
        %2443 = vmatprep.subr.mxu0 0.0
        %v2444 = vand.u32 %v1979, 4294901760
        %v2445 = vsub.f32 %v1979, %v2444
        %2446 = vmatpush1.msra.mxu0 %v2445
        %2447 = vmatprep.subr.mxu0 0.0
        %2448 = vmatpush1.msra.mxu0 0.0
        %2449 = vmatprep.subr.mxu0 0.0
        %2450 = vmatpush1.msra.mxu0 0.0
        %2451 = vmatprep.subr.mxu0 0.0
        %2452 = vmatpush1.msra.mxu0 0.0
        %2453 = vmatprep.subr.mxu0 0.0
        %2454 = vmatpush1.msra.mxu0 0.0
        %2455 = vmatprep.subr.mxu0 0.0
        %2456 = vmatpush1.msra.mxu0 0.0
        %2457 = vmatprep.subr.mxu0 0.0
        %2458 = vmatpush1.msra.mxu0 0.0
        %2459 = vmatprep.subr.mxu0 0.0
        %2460 = vmatpush1.msra.mxu0 0.0
        %2461 = vmatprep.subr.mxu0 0.0
        %2462 = vmatpush1.msra.mxu0 0.0
        %2463 = vmatprep.subr.mxu0 0.0
        %2464 = vmatpush1.msra.mxu0 0.0
        %2465 = vmatprep.subr.mxu0 0.0
        %2466 = vmatpush1.msra.mxu0 0.0
        %2467 = vmatprep.subr.mxu0 0.0
        %2468 = vmatpush1.msra.mxu0 0.0
        %2469 = vmatprep.subr.mxu0 0.0
        %2470 = vmatpush1.msra.mxu0 0.0
        %2471 = vmatprep.subr.mxu0 0.0
        %2472 = vmatpush1.msra.mxu0 0.0
        %2473 = vmatprep.subr.mxu0 0.0
        %2474 = vmatpush1.msra.mxu0 0.0
        %2475 = vmatprep.subr.mxu0 0.0
        %2476 = vmatpush1.msra.mxu0 0.0
        %2477 = vmatprep.subr.mxu0 0.0
        %2478 = vmatpush1.msra.mxu0 0.0
        %2479 = vmatprep.subr.mxu0 0.0
        %2480 = vmatpush1.msra.mxu0 0.0
        %2481 = vmatprep.subr.mxu0 0.0
        %2482 = vmatpush1.msra.mxu0 0.0
        %2483 = vmatprep.subr.mxu0 0.0
        %2484 = vmatpush1.msra.mxu0 0.0
        %2485 = vmatprep.subr.mxu0 0.0
        %2486 = vmatpush1.msra.mxu0 0.0
        %2487 = vmatprep.subr.mxu0 0.0
        %2488 = vmatpush1.msra.mxu0 0.0
        %2489 = vmatprep.subr.mxu0 0.0
        %2490 = vmatpush1.msra.mxu0 0.0
        %2491 = vmatprep.subr.mxu0 0.0
        %2492 = vmatpush1.msra.mxu0 0.0
        %2493 = vmatprep.subr.mxu0 0.0
        %2494 = vmatpush1.msra.mxu0 0.0
        %2495 = vmatprep.mubr.f32.mxu0 0.0
        %v2496 = vand.u32 %v1930, 4294901760
        %v2497 = vsub.f32 %v1930, %v2496
        %2498 = vmatmul.mubr.f32.gmra.mrb[0].mxu0 %v2497
        %v2499 = vpop.f32.mrb[0].mxu0
        %v2500 = vadd.f32 %v2322, %v2499
        %v2501 = vpop.f32.mrb[0].mxu0
        %2502 = vmatprep.mubr.f32.mxu0 0.0
        %v2503 = vand.u32 %v1933, 4294901760
        %v2504 = vsub.f32 %v1933, %v2503
        %2505 = vmatmul.mubr.f32.gmra.mrb[0].mxu0 %v2504
        %v2506 = vpop.f32.mrb[0].mxu0
        %v2507 = vadd.f32 %v2328, %v2506
        %v2508 = vpop.f32.mrb[0].mxu0
        %2509 = vmatprep.mubr.f32.mxu0 0.0
        %v2510 = vand.u32 %v1936, 4294901760
        %v2511 = vsub.f32 %v1936, %v2510
        %2512 = vmatmul.mubr.f32.gmra.mrb[0].mxu0 %v2511
        %v2513 = vpop.f32.mrb[0].mxu0
        %v2514 = vadd.f32 %v2334, %v2513
        %v2515 = vpop.f32.mrb[0].mxu0
        %2516 = vmatprep.mubr.f32.mxu0 0.0
        %v2517 = vand.u32 %v1939, 4294901760
        %v2518 = vsub.f32 %v1939, %v2517
        %2519 = vmatmul.mubr.f32.gmra.mrb[0].mxu0 %v2518
        %v2520 = vpop.f32.mrb[0].mxu0
        %v2521 = vadd.f32 %v2340, %v2520
        %v2522 = vpop.f32.mrb[0].mxu0
        %2523 = vmatprep.mubr.f32.mxu0 0.0
        %v2524 = vand.u32 %v1942, 4294901760
        %v2525 = vsub.f32 %v1942, %v2524
        %2526 = vmatmul.mubr.f32.gmra.mrb[0].mxu0 %v2525
        %v2527 = vpop.f32.mrb[0].mxu0
        %v2528 = vadd.f32 %v2346, %v2527
        %v2529 = vpop.f32.mrb[0].mxu0
        %2530 = vmatprep.mubr.f32.mxu0 0.0
        %v2531 = vand.u32 %v1945, 4294901760
        %v2532 = vsub.f32 %v1945, %v2531
        %2533 = vmatmul.mubr.f32.gmra.mrb[0].mxu0 %v2532
        %v2534 = vpop.f32.mrb[0].mxu0
        %v2535 = vadd.f32 %v2352, %v2534
        %v2536 = vpop.f32.mrb[0].mxu0
        %2537 = vmatprep.mubr.f32.mxu0 0.0
        %v2538 = vand.u32 %v1948, 4294901760
        %v2539 = vsub.f32 %v1948, %v2538
        %2540 = vmatmul.mubr.f32.gmra.mrb[0].mxu0 %v2539
        %v2541 = vpop.f32.mrb[0].mxu0
        %v2542 = vadd.f32 %v2358, %v2541
        %v2543 = vpop.f32.mrb[0].mxu0
        %2544 = vmatprep.mubr.f32.mxu0 0.0
        %v2545 = vand.u32 %v1951, 4294901760
        %v2546 = vsub.f32 %v1951, %v2545
        %2547 = vmatmul.mubr.f32.gmra.mrb[0].mxu0 %v2546
        %v2548 = vpop.f32.mrb[0].mxu0
        %v2549 = vadd.f32 %v2364, %v2548
        %v2550 = vpop.f32.mrb[0].mxu0
        %2551 = vmatprep.mubr.f32.mxu0 0.0
        %v2552 = vand.u32 %v1954, 4294901760
        %v2553 = vsub.f32 %v1954, %v2552
        %2554 = vmatmul.mubr.f32.gmra.mrb[0].mxu0 %v2553
        %v2555 = vpop.f32.mrb[0].mxu0
        %v2556 = vadd.f32 %v2370, %v2555
        %v2557 = vpop.f32.mrb[0].mxu0
        %2558 = vmatprep.mubr.f32.mxu0 0.0
        %v2559 = vand.u32 %v1957, 4294901760
        %v2560 = vsub.f32 %v1957, %v2559
        %2561 = vmatmul.mubr.f32.gmra.mrb[0].mxu0 %v2560
        %v2562 = vpop.f32.mrb[0].mxu0
        %v2563 = vadd.f32 %v2376, %v2562
        %v2564 = vpop.f32.mrb[0].mxu0
        %2565 = vmatprep.mubr.f32.mxu0 0.0
        %v2566 = vand.u32 %v1960, 4294901760
        %v2567 = vsub.f32 %v1960, %v2566
        %2568 = vmatmul.mubr.f32.gmra.mrb[0].mxu0 %v2567
        %v2569 = vpop.f32.mrb[0].mxu0
        %v2570 = vadd.f32 %v2382, %v2569
        %v2571 = vpop.f32.mrb[0].mxu0
        %2572 = vmatprep.mubr.f32.mxu0 0.0
        %v2573 = vand.u32 %v1963, 4294901760
        %v2574 = vsub.f32 %v1963, %v2573
        %2575 = vmatmul.mubr.f32.gmra.mrb[0].mxu0 %v2574
        %v2576 = vpop.f32.mrb[0].mxu0
        %v2577 = vadd.f32 %v2388, %v2576
        %v2578 = vpop.f32.mrb[0].mxu0
        %2579 = vmatprep.mubr.f32.mxu0 0.0
        %v2580 = vand.u32 %v1966, 4294901760
        %v2581 = vsub.f32 %v1966, %v2580
        %2582 = vmatmul.mubr.f32.gmra.mrb[0].mxu0 %v2581
        %v2583 = vpop.f32.mrb[0].mxu0
        %v2584 = vadd.f32 %v2394, %v2583
        %v2585 = vpop.f32.mrb[0].mxu0
        %2586 = vmatprep.mubr.f32.mxu0 0.0
        %v2587 = vand.u32 %v1969, 4294901760
        %v2588 = vsub.f32 %v1969, %v2587
        %2589 = vmatmul.mubr.f32.gmra.mrb[0].mxu0 %v2588
        %v2590 = vpop.f32.mrb[0].mxu0
        %v2591 = vadd.f32 %v2400, %v2590
        %v2592 = vpop.f32.mrb[0].mxu0
        %2593 = vmatprep.mubr.f32.mxu0 0.0
        %v2594 = vand.u32 %v1972, 4294901760
        %v2595 = vsub.f32 %v1972, %v2594
        %2596 = vmatmul.mubr.f32.gmra.mrb[0].mxu0 %v2595
        %v2597 = vpop.f32.mrb[0].mxu0
        %v2598 = vadd.f32 %v2406, %v2597
        %v2599 = vpop.f32.mrb[0].mxu0
        %2600 = vmatprep.mubr.f32.mxu0 0.0
        %v2601 = vand.u32 %v1975, 4294901760
        %v2602 = vsub.f32 %v1975, %v2601
        %2603 = vmatmul.mubr.f32.gmra.mrb[0].mxu0 %v2602
        %v2604 = vpop.f32.mrb[0].mxu0
        %v2605 = vadd.f32 %v2412, %v2604
        %v2606 = vpop.f32.mrb[0].mxu0
        %2607 = vdwg.mxu0
        %2608 = vmatprep.subr.mxu0 0.0
        %v2609 = vand.u32 %v1913, 4294901760
        %2610 = vmatpush1.msra.mxu0 %v2609
        %2611 = vmatprep.subr.mxu0 0.0
        %v2612 = vand.u32 %v1914, 4294901760
        %2613 = vmatpush1.msra.mxu0 %v2612
        %2614 = vmatprep.subr.mxu0 0.0
        %v2615 = vand.u32 %v1915, 4294901760
        %2616 = vmatpush1.msra.mxu0 %v2615
        %2617 = vmatprep.subr.mxu0 0.0
        %v2618 = vand.u32 %v1916, 4294901760
        %2619 = vmatpush1.msra.mxu0 %v2618
        %2620 = vmatprep.subr.mxu0 0.0
        %v2621 = vand.u32 %v1917, 4294901760
        %2622 = vmatpush1.msra.mxu0 %v2621
        %2623 = vmatprep.subr.mxu0 0.0
        %v2624 = vand.u32 %v1918, 4294901760
        %2625 = vmatpush1.msra.mxu0 %v2624
        %2626 = vmatprep.subr.mxu0 0.0
        %v2627 = vand.u32 %v1919, 4294901760
        %2628 = vmatpush1.msra.mxu0 %v2627
        %2629 = vmatprep.subr.mxu0 0.0
        %v2630 = vand.u32 %v1979, 4294901760
        %2631 = vmatpush1.msra.mxu0 %v2630
        %2632 = vmatprep.subr.mxu0 0.0
        %2633 = vmatpush1.msra.mxu0 0.0
        %2634 = vmatprep.subr.mxu0 0.0
        %2635 = vmatpush1.msra.mxu0 0.0
        %2636 = vmatprep.subr.mxu0 0.0
        %2637 = vmatpush1.msra.mxu0 0.0
        %2638 = vmatprep.subr.mxu0 0.0
        %2639 = vmatpush1.msra.mxu0 0.0
        %2640 = vmatprep.subr.mxu0 0.0
        %2641 = vmatpush1.msra.mxu0 0.0
        %2642 = vmatprep.subr.mxu0 0.0
        %2643 = vmatpush1.msra.mxu0 0.0
        %2644 = vmatprep.subr.mxu0 0.0
        %2645 = vmatpush1.msra.mxu0 0.0
        %2646 = vmatprep.subr.mxu0 0.0
        %2647 = vmatpush1.msra.mxu0 0.0
        %2648 = vmatprep.subr.mxu0 0.0
        %2649 = vmatpush1.msra.mxu0 0.0
        %2650 = vmatprep.subr.mxu0 0.0
        %2651 = vmatpush1.msra.mxu0 0.0
        %2652 = vmatprep.subr.mxu0 0.0
        %2653 = vmatpush1.msra.mxu0 0.0
        %2654 = vmatprep.subr.mxu0 0.0
        %2655 = vmatpush1.msra.mxu0 0.0
        %2656 = vmatprep.subr.mxu0 0.0
        %2657 = vmatpush1.msra.mxu0 0.0
        %2658 = vmatprep.subr.mxu0 0.0
        %2659 = vmatpush1.msra.mxu0 0.0
        %2660 = vmatprep.subr.mxu0 0.0
        %2661 = vmatpush1.msra.mxu0 0.0
        %2662 = vmatprep.subr.mxu0 0.0
        %2663 = vmatpush1.msra.mxu0 0.0
        %2664 = vmatprep.subr.mxu0 0.0
        %2665 = vmatpush1.msra.mxu0 0.0
        %2666 = vmatprep.subr.mxu0 0.0
        %2667 = vmatpush1.msra.mxu0 0.0
        %2668 = vmatprep.subr.mxu0 0.0
        %2669 = vmatpush1.msra.mxu0 0.0
        %2670 = vmatprep.subr.mxu0 0.0
        %2671 = vmatpush1.msra.mxu0 0.0
        %2672 = vmatprep.subr.mxu0 0.0
        %2673 = vmatpush1.msra.mxu0 0.0
        %2674 = vmatprep.subr.mxu0 0.0
        %2675 = vmatpush1.msra.mxu0 0.0
        %2676 = vmatprep.subr.mxu0 0.0
        %2677 = vmatpush1.msra.mxu0 0.0
        %2678 = vmatprep.subr.mxu0 0.0
        %2679 = vmatpush1.msra.mxu0 0.0
        %2680 = vmatprep.mubr.f32.mxu0 0.0
        %v2681 = vand.u32 %v1930, 4294901760
        %v2682 = vsub.f32 %v1930, %v2681
        %v2683 = vand.u32 %v2682, 4294901760
        %2684 = vmatmul.mubr.f32.gmra.mrb[0].mxu0 %v2683
        %v2685 = vpop.f32.mrb[0].mxu0
        %v2686 = vadd.f32 %v2500, %v2685
        %v2687 = vpop.f32.mrb[0].mxu0
        %2688 = vmatprep.mubr.f32.mxu0 0.0
        %v2689 = vand.u32 %v1933, 4294901760
        %v2690 = vsub.f32 %v1933, %v2689
        %v2691 = vand.u32 %v2690, 4294901760
        %2692 = vmatmul.mubr.f32.gmra.mrb[0].mxu0 %v2691
        %v2693 = vpop.f32.mrb[0].mxu0
        %v2694 = vadd.f32 %v2507, %v2693
        %v2695 = vpop.f32.mrb[0].mxu0
        %2696 = vmatprep.mubr.f32.mxu0 0.0
        %v2697 = vand.u32 %v1936, 4294901760
        %v2698 = vsub.f32 %v1936, %v2697
        %v2699 = vand.u32 %v2698, 4294901760
        %2700 = vmatmul.mubr.f32.gmra.mrb[0].mxu0 %v2699
        %v2701 = vpop.f32.mrb[0].mxu0
        %v2702 = vadd.f32 %v2514, %v2701
        %v2703 = vpop.f32.mrb[0].mxu0
        %2704 = vmatprep.mubr.f32.mxu0 0.0
        %v2705 = vand.u32 %v1939, 4294901760
        %v2706 = vsub.f32 %v1939, %v2705
        %v2707 = vand.u32 %v2706, 4294901760
        %2708 = vmatmul.mubr.f32.gmra.mrb[0].mxu0 %v2707
        %v2709 = vpop.f32.mrb[0].mxu0
        %v2710 = vadd.f32 %v2521, %v2709
        %v2711 = vpop.f32.mrb[0].mxu0
        %2712 = vmatprep.mubr.f32.mxu0 0.0
        %v2713 = vand.u32 %v1942, 4294901760
        %v2714 = vsub.f32 %v1942, %v2713
        %v2715 = vand.u32 %v2714, 4294901760
        %2716 = vmatmul.mubr.f32.gmra.mrb[0].mxu0 %v2715
        %v2717 = vpop.f32.mrb[0].mxu0
        %v2718 = vadd.f32 %v2528, %v2717
        %v2719 = vpop.f32.mrb[0].mxu0
        %2720 = vmatprep.mubr.f32.mxu0 0.0
        %v2721 = vand.u32 %v1945, 4294901760
        %v2722 = vsub.f32 %v1945, %v2721
        %v2723 = vand.u32 %v2722, 4294901760
        %2724 = vmatmul.mubr.f32.gmra.mrb[0].mxu0 %v2723
        %v2725 = vpop.f32.mrb[0].mxu0
        %v2726 = vadd.f32 %v2535, %v2725
        %v2727 = vpop.f32.mrb[0].mxu0
        %2728 = vmatprep.mubr.f32.mxu0 0.0
        %v2729 = vand.u32 %v1948, 4294901760
        %v2730 = vsub.f32 %v1948, %v2729
        %v2731 = vand.u32 %v2730, 4294901760
        %2732 = vmatmul.mubr.f32.gmra.mrb[0].mxu0 %v2731
        %v2733 = vpop.f32.mrb[0].mxu0
        %v2734 = vadd.f32 %v2542, %v2733
        %v2735 = vpop.f32.mrb[0].mxu0
        %2736 = vmatprep.mubr.f32.mxu0 0.0
        %v2737 = vand.u32 %v1951, 4294901760
        %v2738 = vsub.f32 %v1951, %v2737
        %v2739 = vand.u32 %v2738, 4294901760
        %2740 = vmatmul.mubr.f32.gmra.mrb[0].mxu0 %v2739
        %v2741 = vpop.f32.mrb[0].mxu0
        %v2742 = vadd.f32 %v2549, %v2741
        %v2743 = vpop.f32.mrb[0].mxu0
        %2744 = vmatprep.mubr.f32.mxu0 0.0
        %v2745 = vand.u32 %v1954, 4294901760
        %v2746 = vsub.f32 %v1954, %v2745
        %v2747 = vand.u32 %v2746, 4294901760
        %2748 = vmatmul.mubr.f32.gmra.mrb[0].mxu0 %v2747
        %v2749 = vpop.f32.mrb[0].mxu0
        %v2750 = vadd.f32 %v2556, %v2749
        %v2751 = vpop.f32.mrb[0].mxu0
        %2752 = vmatprep.mubr.f32.mxu0 0.0
        %v2753 = vand.u32 %v1957, 4294901760
        %v2754 = vsub.f32 %v1957, %v2753
        %v2755 = vand.u32 %v2754, 4294901760
        %2756 = vmatmul.mubr.f32.gmra.mrb[0].mxu0 %v2755
        %v2757 = vpop.f32.mrb[0].mxu0
        %v2758 = vadd.f32 %v2563, %v2757
        %v2759 = vpop.f32.mrb[0].mxu0
        %2760 = vmatprep.mubr.f32.mxu0 0.0
        %v2761 = vand.u32 %v1960, 4294901760
        %v2762 = vsub.f32 %v1960, %v2761
        %v2763 = vand.u32 %v2762, 4294901760
        %2764 = vmatmul.mubr.f32.gmra.mrb[0].mxu0 %v2763
        %v2765 = vpop.f32.mrb[0].mxu0
        %v2766 = vadd.f32 %v2570, %v2765
        %v2767 = vpop.f32.mrb[0].mxu0
        %2768 = vmatprep.mubr.f32.mxu0 0.0
        %v2769 = vand.u32 %v1963, 4294901760
        %v2770 = vsub.f32 %v1963, %v2769
        %v2771 = vand.u32 %v2770, 4294901760
        %2772 = vmatmul.mubr.f32.gmra.mrb[0].mxu0 %v2771
        %v2773 = vpop.f32.mrb[0].mxu0
        %v2774 = vadd.f32 %v2577, %v2773
        %v2775 = vpop.f32.mrb[0].mxu0
        %2776 = vmatprep.mubr.f32.mxu0 0.0
        %v2777 = vand.u32 %v1966, 4294901760
        %v2778 = vsub.f32 %v1966, %v2777
        %v2779 = vand.u32 %v2778, 4294901760
        %2780 = vmatmul.mubr.f32.gmra.mrb[0].mxu0 %v2779
        %v2781 = vpop.f32.mrb[0].mxu0
        %v2782 = vadd.f32 %v2584, %v2781
        %v2783 = vpop.f32.mrb[0].mxu0
        %2784 = vmatprep.mubr.f32.mxu0 0.0
        %v2785 = vand.u32 %v1969, 4294901760
        %v2786 = vsub.f32 %v1969, %v2785
        %v2787 = vand.u32 %v2786, 4294901760
        %2788 = vmatmul.mubr.f32.gmra.mrb[0].mxu0 %v2787
        %v2789 = vpop.f32.mrb[0].mxu0
        %v2790 = vadd.f32 %v2591, %v2789
        %v2791 = vpop.f32.mrb[0].mxu0
        %2792 = vmatprep.mubr.f32.mxu0 0.0
        %v2793 = vand.u32 %v1972, 4294901760
        %v2794 = vsub.f32 %v1972, %v2793
        %v2795 = vand.u32 %v2794, 4294901760
        %2796 = vmatmul.mubr.f32.gmra.mrb[0].mxu0 %v2795
        %v2797 = vpop.f32.mrb[0].mxu0
        %v2798 = vadd.f32 %v2598, %v2797
        %v2799 = vpop.f32.mrb[0].mxu0
        %2800 = vmatprep.mubr.f32.mxu0 0.0
        %v2801 = vand.u32 %v1975, 4294901760
        %v2802 = vsub.f32 %v1975, %v2801
        %v2803 = vand.u32 %v2802, 4294901760
        %2804 = vmatmul.mubr.f32.gmra.mrb[0].mxu0 %v2803
        %v2805 = vpop.f32.mrb[0].mxu0
        %v2806 = vadd.f32 %v2605, %v2805
        %v2807 = vpop.f32.mrb[0].mxu0
        %2808 = vdwg.mxu0
        %2809 = vmatprep.subr.mxu0 0.0
        %v2810 = vand.u32 %v1913, 4294901760
        %v2811 = vsub.f32 %v1913, %v2810
        %v2812 = vand.u32 %v2811, 4294901760
        %2813 = vmatpush1.msra.mxu0 %v2812
        %2814 = vmatprep.subr.mxu0 0.0
        %v2815 = vand.u32 %v1914, 4294901760
        %v2816 = vsub.f32 %v1914, %v2815
        %v2817 = vand.u32 %v2816, 4294901760
        %2818 = vmatpush1.msra.mxu0 %v2817
        %2819 = vmatprep.subr.mxu0 0.0
        %v2820 = vand.u32 %v1915, 4294901760
        %v2821 = vsub.f32 %v1915, %v2820
        %v2822 = vand.u32 %v2821, 4294901760
        %2823 = vmatpush1.msra.mxu0 %v2822
        %2824 = vmatprep.subr.mxu0 0.0
        %v2825 = vand.u32 %v1916, 4294901760
        %v2826 = vsub.f32 %v1916, %v2825
        %v2827 = vand.u32 %v2826, 4294901760
        %2828 = vmatpush1.msra.mxu0 %v2827
        %2829 = vmatprep.subr.mxu0 0.0
        %v2830 = vand.u32 %v1917, 4294901760
        %v2831 = vsub.f32 %v1917, %v2830
        %v2832 = vand.u32 %v2831, 4294901760
        %2833 = vmatpush1.msra.mxu0 %v2832
        %2834 = vmatprep.subr.mxu0 0.0
        %v2835 = vand.u32 %v1918, 4294901760
        %v2836 = vsub.f32 %v1918, %v2835
        %v2837 = vand.u32 %v2836, 4294901760
        %2838 = vmatpush1.msra.mxu0 %v2837
        %2839 = vmatprep.subr.mxu0 0.0
        %v2840 = vand.u32 %v1919, 4294901760
        %v2841 = vsub.f32 %v1919, %v2840
        %v2842 = vand.u32 %v2841, 4294901760
        %2843 = vmatpush1.msra.mxu0 %v2842
        %2844 = vmatprep.subr.mxu0 0.0
        %v2845 = vand.u32 %v1979, 4294901760
        %v2846 = vsub.f32 %v1979, %v2845
        %v2847 = vand.u32 %v2846, 4294901760
        %2848 = vmatpush1.msra.mxu0 %v2847
        %2849 = vmatprep.subr.mxu0 0.0
        %2850 = vmatpush1.msra.mxu0 0.0
        %2851 = vmatprep.subr.mxu0 0.0
        %2852 = vmatpush1.msra.mxu0 0.0
        %2853 = vmatprep.subr.mxu0 0.0
        %2854 = vmatpush1.msra.mxu0 0.0
        %2855 = vmatprep.subr.mxu0 0.0
        %2856 = vmatpush1.msra.mxu0 0.0
        %2857 = vmatprep.subr.mxu0 0.0
        %2858 = vmatpush1.msra.mxu0 0.0
        %2859 = vmatprep.subr.mxu0 0.0
        %2860 = vmatpush1.msra.mxu0 0.0
        %2861 = vmatprep.subr.mxu0 0.0
        %2862 = vmatpush1.msra.mxu0 0.0
        %2863 = vmatprep.subr.mxu0 0.0
        %2864 = vmatpush1.msra.mxu0 0.0
        %2865 = vmatprep.subr.mxu0 0.0
        %2866 = vmatpush1.msra.mxu0 0.0
        %2867 = vmatprep.subr.mxu0 0.0
        %2868 = vmatpush1.msra.mxu0 0.0
        %2869 = vmatprep.subr.mxu0 0.0
        %2870 = vmatpush1.msra.mxu0 0.0
        %2871 = vmatprep.subr.mxu0 0.0
        %2872 = vmatpush1.msra.mxu0 0.0
        %2873 = vmatprep.subr.mxu0 0.0
        %2874 = vmatpush1.msra.mxu0 0.0
        %2875 = vmatprep.subr.mxu0 0.0
        %2876 = vmatpush1.msra.mxu0 0.0
        %2877 = vmatprep.subr.mxu0 0.0
        %2878 = vmatpush1.msra.mxu0 0.0
        %2879 = vmatprep.subr.mxu0 0.0
        %2880 = vmatpush1.msra.mxu0 0.0
        %2881 = vmatprep.subr.mxu0 0.0
        %2882 = vmatpush1.msra.mxu0 0.0
        %2883 = vmatprep.subr.mxu0 0.0
        %2884 = vmatpush1.msra.mxu0 0.0
        %2885 = vmatprep.subr.mxu0 0.0
        %2886 = vmatpush1.msra.mxu0 0.0
        %2887 = vmatprep.subr.mxu0 0.0
        %2888 = vmatpush1.msra.mxu0 0.0
        %2889 = vmatprep.subr.mxu0 0.0
        %2890 = vmatpush1.msra.mxu0 0.0
        %2891 = vmatprep.subr.mxu0 0.0
        %2892 = vmatpush1.msra.mxu0 0.0
        %2893 = vmatprep.subr.mxu0 0.0
        %2894 = vmatpush1.msra.mxu0 0.0
        %2895 = vmatprep.subr.mxu0 0.0
        %2896 = vmatpush1.msra.mxu0 0.0
        %2897 = vmatprep.mubr.f32.mxu0 0.0
        %v2898 = vand.u32 %v1930, 4294901760
        %2899 = vmatmul.mubr.f32.gmra.mrb[0].mxu0 %v2898
        %v2900 = vpop.f32.mrb[0].mxu0
        %v2901 = vadd.f32 %v2686, %v2900
        %v2902 = vpop.f32.mrb[0].mxu0
        %2903 = vmatprep.mubr.f32.mxu0 0.0
        %v2904 = vand.u32 %v1933, 4294901760
        %2905 = vmatmul.mubr.f32.gmra.mrb[0].mxu0 %v2904
        %v2906 = vpop.f32.mrb[0].mxu0
        %v2907 = vadd.f32 %v2694, %v2906
        %v2908 = vpop.f32.mrb[0].mxu0
        %2909 = vmatprep.mubr.f32.mxu0 0.0
        %v2910 = vand.u32 %v1936, 4294901760
        %2911 = vmatmul.mubr.f32.gmra.mrb[0].mxu0 %v2910
        %v2912 = vpop.f32.mrb[0].mxu0
        %v2913 = vadd.f32 %v2702, %v2912
        %v2914 = vpop.f32.mrb[0].mxu0
        %2915 = vmatprep.mubr.f32.mxu0 0.0
        %v2916 = vand.u32 %v1939, 4294901760
        %2917 = vmatmul.mubr.f32.gmra.mrb[0].mxu0 %v2916
        %v2918 = vpop.f32.mrb[0].mxu0
        %v2919 = vadd.f32 %v2710, %v2918
        %v2920 = vpop.f32.mrb[0].mxu0
        %2921 = vmatprep.mubr.f32.mxu0 0.0
        %v2922 = vand.u32 %v1942, 4294901760
        %2923 = vmatmul.mubr.f32.gmra.mrb[0].mxu0 %v2922
        %v2924 = vpop.f32.mrb[0].mxu0
        %v2925 = vadd.f32 %v2718, %v2924
        %v2926 = vpop.f32.mrb[0].mxu0
        %2927 = vmatprep.mubr.f32.mxu0 0.0
        %v2928 = vand.u32 %v1945, 4294901760
        %2929 = vmatmul.mubr.f32.gmra.mrb[0].mxu0 %v2928
        %v2930 = vpop.f32.mrb[0].mxu0
        %v2931 = vadd.f32 %v2726, %v2930
        %v2932 = vpop.f32.mrb[0].mxu0
        %2933 = vmatprep.mubr.f32.mxu0 0.0
        %v2934 = vand.u32 %v1948, 4294901760
        %2935 = vmatmul.mubr.f32.gmra.mrb[0].mxu0 %v2934
        %v2936 = vpop.f32.mrb[0].mxu0
        %v2937 = vadd.f32 %v2734, %v2936
        %v2938 = vpop.f32.mrb[0].mxu0
        %2939 = vmatprep.mubr.f32.mxu0 0.0
        %v2940 = vand.u32 %v1951, 4294901760
        %2941 = vmatmul.mubr.f32.gmra.mrb[0].mxu0 %v2940
        %v2942 = vpop.f32.mrb[0].mxu0
        %v2943 = vadd.f32 %v2742, %v2942
        %v2944 = vpop.f32.mrb[0].mxu0
        %2945 = vmatprep.mubr.f32.mxu0 0.0
        %v2946 = vand.u32 %v1954, 4294901760
        %2947 = vmatmul.mubr.f32.gmra.mrb[0].mxu0 %v2946
        %v2948 = vpop.f32.mrb[0].mxu0
        %v2949 = vadd.f32 %v2750, %v2948
        %v2950 = vpop.f32.mrb[0].mxu0
        %2951 = vmatprep.mubr.f32.mxu0 0.0
        %v2952 = vand.u32 %v1957, 4294901760
        %2953 = vmatmul.mubr.f32.gmra.mrb[0].mxu0 %v2952
        %v2954 = vpop.f32.mrb[0].mxu0
        %v2955 = vadd.f32 %v2758, %v2954
        %v2956 = vpop.f32.mrb[0].mxu0
        %2957 = vmatprep.mubr.f32.mxu0 0.0
        %v2958 = vand.u32 %v1960, 4294901760
        %2959 = vmatmul.mubr.f32.gmra.mrb[0].mxu0 %v2958
        %v2960 = vpop.f32.mrb[0].mxu0
        %v2961 = vadd.f32 %v2766, %v2960
        %v2962 = vpop.f32.mrb[0].mxu0
        %2963 = vmatprep.mubr.f32.mxu0 0.0
        %v2964 = vand.u32 %v1963, 4294901760
        %2965 = vmatmul.mubr.f32.gmra.mrb[0].mxu0 %v2964
        %v2966 = vpop.f32.mrb[0].mxu0
        %v2967 = vadd.f32 %v2774, %v2966
        %v2968 = vpop.f32.mrb[0].mxu0
        %2969 = vmatprep.mubr.f32.mxu0 0.0
        %v2970 = vand.u32 %v1966, 4294901760
        %2971 = vmatmul.mubr.f32.gmra.mrb[0].mxu0 %v2970
        %v2972 = vpop.f32.mrb[0].mxu0
        %v2973 = vadd.f32 %v2782, %v2972
        %v2974 = vpop.f32.mrb[0].mxu0
        %2975 = vmatprep.mubr.f32.mxu0 0.0
        %v2976 = vand.u32 %v1969, 4294901760
        %2977 = vmatmul.mubr.f32.gmra.mrb[0].mxu0 %v2976
        %v2978 = vpop.f32.mrb[0].mxu0
        %v2979 = vadd.f32 %v2790, %v2978
        %v2980 = vpop.f32.mrb[0].mxu0
        %2981 = vmatprep.mubr.f32.mxu0 0.0
        %v2982 = vand.u32 %v1972, 4294901760
        %2983 = vmatmul.mubr.f32.gmra.mrb[0].mxu0 %v2982
        %v2984 = vpop.f32.mrb[0].mxu0
        %v2985 = vadd.f32 %v2798, %v2984
        %v2986 = vpop.f32.mrb[0].mxu0
        %2987 = vmatprep.mubr.f32.mxu0 0.0
        %v2988 = vand.u32 %v1975, 4294901760
        %2989 = vmatmul.mubr.f32.gmra.mrb[0].mxu0 %v2988
        %v2990 = vpop.f32.mrb[0].mxu0
        %v2991 = vadd.f32 %v2806, %v2990
        %v2992 = vpop.f32.mrb[0].mxu0
        %2993 = vdwg.mxu0
        %2994 = vmatprep.subr.mxu0 0.0
        %v2995 = vand.u32 %v1913, 4294901760
        %2996 = vmatpush1.msra.mxu0 %v2995
        %2997 = vmatprep.subr.mxu0 0.0
        %v2998 = vand.u32 %v1914, 4294901760
        %2999 = vmatpush1.msra.mxu0 %v2998
        %3000 = vmatprep.subr.mxu0 0.0
        %v3001 = vand.u32 %v1915, 4294901760
        %3002 = vmatpush1.msra.mxu0 %v3001
        %3003 = vmatprep.subr.mxu0 0.0
        %v3004 = vand.u32 %v1916, 4294901760
        %3005 = vmatpush1.msra.mxu0 %v3004
        %3006 = vmatprep.subr.mxu0 0.0
        %v3007 = vand.u32 %v1917, 4294901760
        %3008 = vmatpush1.msra.mxu0 %v3007
        %3009 = vmatprep.subr.mxu0 0.0
        %v3010 = vand.u32 %v1918, 4294901760
        %3011 = vmatpush1.msra.mxu0 %v3010
        %3012 = vmatprep.subr.mxu0 0.0
        %v3013 = vand.u32 %v1919, 4294901760
        %3014 = vmatpush1.msra.mxu0 %v3013
        %3015 = vmatprep.subr.mxu0 0.0
        %v3016 = vand.u32 %v1979, 4294901760
        %3017 = vmatpush1.msra.mxu0 %v3016
        %3018 = vmatprep.subr.mxu0 0.0
        %3019 = vmatpush1.msra.mxu0 0.0
        %3020 = vmatprep.subr.mxu0 0.0
        %3021 = vmatpush1.msra.mxu0 0.0
        %3022 = vmatprep.subr.mxu0 0.0
        %3023 = vmatpush1.msra.mxu0 0.0
        %3024 = vmatprep.subr.mxu0 0.0
        %3025 = vmatpush1.msra.mxu0 0.0
        %3026 = vmatprep.subr.mxu0 0.0
        %3027 = vmatpush1.msra.mxu0 0.0
        %3028 = vmatprep.subr.mxu0 0.0
        %3029 = vmatpush1.msra.mxu0 0.0
        %3030 = vmatprep.subr.mxu0 0.0
        %3031 = vmatpush1.msra.mxu0 0.0
        %3032 = vmatprep.subr.mxu0 0.0
        %3033 = vmatpush1.msra.mxu0 0.0
        %3034 = vmatprep.subr.mxu0 0.0
        %3035 = vmatpush1.msra.mxu0 0.0
        %3036 = vmatprep.subr.mxu0 0.0
        %3037 = vmatpush1.msra.mxu0 0.0
        %3038 = vmatprep.subr.mxu0 0.0
        %3039 = vmatpush1.msra.mxu0 0.0
        %3040 = vmatprep.subr.mxu0 0.0
        %3041 = vmatpush1.msra.mxu0 0.0
        %3042 = vmatprep.subr.mxu0 0.0
        %3043 = vmatpush1.msra.mxu0 0.0
        %3044 = vmatprep.subr.mxu0 0.0
        %3045 = vmatpush1.msra.mxu0 0.0
        %3046 = vmatprep.subr.mxu0 0.0
        %3047 = vmatpush1.msra.mxu0 0.0
        %3048 = vmatprep.subr.mxu0 0.0
        %3049 = vmatpush1.msra.mxu0 0.0
        %3050 = vmatprep.subr.mxu0 0.0
        %3051 = vmatpush1.msra.mxu0 0.0
        %3052 = vmatprep.subr.mxu0 0.0
        %3053 = vmatpush1.msra.mxu0 0.0
        %3054 = vmatprep.subr.mxu0 0.0
        %3055 = vmatpush1.msra.mxu0 0.0
        %3056 = vmatprep.subr.mxu0 0.0
        %3057 = vmatpush1.msra.mxu0 0.0
        %3058 = vmatprep.subr.mxu0 0.0
        %3059 = vmatpush1.msra.mxu0 0.0
        %3060 = vmatprep.subr.mxu0 0.0
        %3061 = vmatpush1.msra.mxu0 0.0
        %3062 = vmatprep.subr.mxu0 0.0
        %3063 = vmatpush1.msra.mxu0 0.0
        %3064 = vmatprep.subr.mxu0 0.0
        %3065 = vmatpush1.msra.mxu0 0.0
        %3066 = vmatprep.mubr.f32.mxu0 0.0
        %v3067 = vand.u32 %v1930, 4294901760
        %3068 = vmatmul.mubr.f32.gmra.mrb[0].mxu0 %v3067
        %v3069 = vpop.f32.mrb[0].mxu0
        %v3070 = vadd.f32 %v2901, %v3069
        %v3071 = vpop.f32.mrb[0].mxu0
        %3072 = vmatprep.mubr.f32.mxu0 0.0
        %v3073 = vand.u32 %v1933, 4294901760
        %3074 = vmatmul.mubr.f32.gmra.mrb[0].mxu0 %v3073
        %v3075 = vpop.f32.mrb[0].mxu0
        %v3076 = vadd.f32 %v2907, %v3075
        %v3077 = vpop.f32.mrb[0].mxu0
        %3078 = vmatprep.mubr.f32.mxu0 0.0
        %v3079 = vand.u32 %v1936, 4294901760
        %3080 = vmatmul.mubr.f32.gmra.mrb[0].mxu0 %v3079
        %v3081 = vpop.f32.mrb[0].mxu0
        %v3082 = vadd.f32 %v2913, %v3081
        %v3083 = vpop.f32.mrb[0].mxu0
        %3084 = vmatprep.mubr.f32.mxu0 0.0
        %v3085 = vand.u32 %v1939, 4294901760
        %3086 = vmatmul.mubr.f32.gmra.mrb[0].mxu0 %v3085
        %v3087 = vpop.f32.mrb[0].mxu0
        %v3088 = vadd.f32 %v2919, %v3087
        %v3089 = vpop.f32.mrb[0].mxu0
        %3090 = vmatprep.mubr.f32.mxu0 0.0
        %v3091 = vand.u32 %v1942, 4294901760
        %3092 = vmatmul.mubr.f32.gmra.mrb[0].mxu0 %v3091
        %v3093 = vpop.f32.mrb[0].mxu0
        %v3094 = vadd.f32 %v2925, %v3093
        %v3095 = vpop.f32.mrb[0].mxu0
        %3096 = vmatprep.mubr.f32.mxu0 0.0
        %v3097 = vand.u32 %v1945, 4294901760
        %3098 = vmatmul.mubr.f32.gmra.mrb[0].mxu0 %v3097
        %v3099 = vpop.f32.mrb[0].mxu0
        %v3100 = vadd.f32 %v2931, %v3099
        %v3101 = vpop.f32.mrb[0].mxu0
        %3102 = vmatprep.mubr.f32.mxu0 0.0
        %v3103 = vand.u32 %v1948, 4294901760
        %3104 = vmatmul.mubr.f32.gmra.mrb[0].mxu0 %v3103
        %v3105 = vpop.f32.mrb[0].mxu0
        %v3106 = vadd.f32 %v2937, %v3105
        %v3107 = vpop.f32.mrb[0].mxu0
        %3108 = vmatprep.mubr.f32.mxu0 0.0
        %v3109 = vand.u32 %v1951, 4294901760
        %3110 = vmatmul.mubr.f32.gmra.mrb[0].mxu0 %v3109
        %v3111 = vpop.f32.mrb[0].mxu0
        %v3112 = vadd.f32 %v2943, %v3111
        %v3113 = vpop.f32.mrb[0].mxu0
        %3114 = vmatprep.mubr.f32.mxu0 0.0
        %v3115 = vand.u32 %v1954, 4294901760
        %3116 = vmatmul.mubr.f32.gmra.mrb[0].mxu0 %v3115
        %v3117 = vpop.f32.mrb[0].mxu0
        %v3118 = vadd.f32 %v2949, %v3117
        %v3119 = vpop.f32.mrb[0].mxu0
        %3120 = vmatprep.mubr.f32.mxu0 0.0
        %v3121 = vand.u32 %v1957, 4294901760
        %3122 = vmatmul.mubr.f32.gmra.mrb[0].mxu0 %v3121
        %v3123 = vpop.f32.mrb[0].mxu0
        %v3124 = vadd.f32 %v2955, %v3123
        %v3125 = vpop.f32.mrb[0].mxu0
        %3126 = vmatprep.mubr.f32.mxu0 0.0
        %v3127 = vand.u32 %v1960, 4294901760
        %3128 = vmatmul.mubr.f32.gmra.mrb[0].mxu0 %v3127
        %v3129 = vpop.f32.mrb[0].mxu0
        %v3130 = vadd.f32 %v2961, %v3129
        %v3131 = vpop.f32.mrb[0].mxu0
        %3132 = vmatprep.mubr.f32.mxu0 0.0
        %v3133 = vand.u32 %v1963, 4294901760
        %3134 = vmatmul.mubr.f32.gmra.mrb[0].mxu0 %v3133
        %v3135 = vpop.f32.mrb[0].mxu0
        %v3136 = vadd.f32 %v2967, %v3135
        %v3137 = vpop.f32.mrb[0].mxu0
        %3138 = vmatprep.mubr.f32.mxu0 0.0
        %v3139 = vand.u32 %v1966, 4294901760
        %3140 = vmatmul.mubr.f32.gmra.mrb[0].mxu0 %v3139
        %v3141 = vpop.f32.mrb[0].mxu0
        %v3142 = vadd.f32 %v2973, %v3141
        %v3143 = vpop.f32.mrb[0].mxu0
        %3144 = vmatprep.mubr.f32.mxu0 0.0
        %v3145 = vand.u32 %v1969, 4294901760
        %3146 = vmatmul.mubr.f32.gmra.mrb[0].mxu0 %v3145
        %v3147 = vpop.f32.mrb[0].mxu0
        %v3148 = vadd.f32 %v2979, %v3147
        %v3149 = vpop.f32.mrb[0].mxu0
        %3150 = vmatprep.mubr.f32.mxu0 0.0
        %v3151 = vand.u32 %v1972, 4294901760
        %3152 = vmatmul.mubr.f32.gmra.mrb[0].mxu0 %v3151
        %v3153 = vpop.f32.mrb[0].mxu0
        %v3154 = vadd.f32 %v2985, %v3153
        %v3155 = vpop.f32.mrb[0].mxu0
        %3156 = vmatprep.mubr.f32.mxu0 0.0
        %v3157 = vand.u32 %v1975, 4294901760
        %3158 = vmatmul.mubr.f32.gmra.mrb[0].mxu0 %v3157
        %v3159 = vpop.f32.mrb[0].mxu0
        %v3160 = vadd.f32 %v2991, %v3159
        %v3161 = vpop.f32.mrb[0].mxu0
        %3162 = vdwg.mxu0
        %v3163 = vmax.f32 %v3070, 0.0
        %v3164 = vmax.f32 %v3076, 0.0
        %v3165 = vmax.f32 %v3082, 0.0
        %v3166 = vmax.f32 %v3088, 0.0
        %v3167 = vmax.f32 %v3094, 0.0
        %v3168 = vmax.f32 %v3100, 0.0
        %v3169 = vmax.f32 %v3106, 0.0
        %v3170 = vmax.f32 %v3112, 0.0
        %v3171 = vmax.f32 %v3118, 0.0
        %v3172 = vmax.f32 %v3124, 0.0
        %v3173 = vmax.f32 %v3130, 0.0
        %v3174 = vmax.f32 %v3136, 0.0
        %v3175 = vmax.f32 %v3142, 0.0
        %v3176 = vmax.f32 %v3148, 0.0
        %v3177 = vmax.f32 %v3154, 0.0
        %v3178 = vmax.f32 %v3160, 0.0
        %v3179 = vld [vmem:[%s5] sm:$0xff]
        %v3180 = vld [vmem:[%s5 + $0x8] sm:$0xff]
        %v3181 = vld [vmem:[%s5 + $0x10] sm:$0xff]
        %v3182 = vld [vmem:[%s5 + $0x18] sm:$0x3f]
        %v3183 = vld [vmem:[%s6] sm:$0x1]
        %v3185 = vlaneseq
        %v3186 = vshrl.u32 %v3185, 7
        %v3187 = vsub.s32 0, %v3186
        %v3188 = vrot.slane %v3183, %v3187
        %vm3190 = vcmask 244736
        %v3192 = vsel %vm3190, %v3163, 0
        %v3195 = vsel %vm3190, %v3164, 0
        %v3198 = vsel %vm3190, %v3165, 0
        %v3201 = vsel %vm3190, %v3166, 0
        %v3204 = vsel %vm3190, %v3167, 0
        %v3207 = vsel %vm3190, %v3168, 0
        %v3210 = vsel %vm3190, %v3169, 0
        %v3213 = vsel %vm3190, %v3170, 0
        %v3216 = vsel %vm3190, %v3171, 0
        %v3219 = vsel %vm3190, %v3172, 0
        %v3222 = vsel %vm3190, %v3173, 0
        %v3225 = vsel %vm3190, %v3174, 0
        %v3228 = vsel %vm3190, %v3175, 0
        %v3231 = vsel %vm3190, %v3176, 0
        %v3234 = vsel %vm3190, %v3177, 0
        %v3237 = vsel %vm3190, %v3178, 0
        %vm3239 = vcmask 1045504
        %v3241 = vsel %vm3239, %v3182, 0
        %3243 = vmatprep.subr.mxu0 0.0
        %v3244 = vand.u32 %v3179, 4294901760
        %3245 = vmatpush1.msra.mxu0 %v3244
        %3246 = vmatprep.subr.mxu0 0.0
        %v3247 = vand.u32 %v3180, 4294901760
        %3248 = vmatpush1.msra.mxu0 %v3247
        %3249 = vmatprep.subr.mxu0 0.0
        %v3250 = vand.u32 %v3181, 4294901760
        %3251 = vmatpush1.msra.mxu0 %v3250
        %3252 = vmatprep.subr.mxu0 0.0
        %v3253 = vand.u32 %v3241, 4294901760
        %3254 = vmatpush1.msra.mxu0 %v3253
        %3255 = vmatprep.subr.mxu0 0.0
        %3256 = vmatpush1.msra.mxu0 0.0
        %3257 = vmatprep.subr.mxu0 0.0
        %3258 = vmatpush1.msra.mxu0 0.0
        %3259 = vmatprep.subr.mxu0 0.0
        %3260 = vmatpush1.msra.mxu0 0.0
        %3261 = vmatprep.subr.mxu0 0.0
        %3262 = vmatpush1.msra.mxu0 0.0
        %3263 = vmatprep.subr.mxu0 0.0
        %3264 = vmatpush1.msra.mxu0 0.0
        %3265 = vmatprep.subr.mxu0 0.0
        %3266 = vmatpush1.msra.mxu0 0.0
        %3267 = vmatprep.subr.mxu0 0.0
        %3268 = vmatpush1.msra.mxu0 0.0
        %3269 = vmatprep.subr.mxu0 0.0
        %3270 = vmatpush1.msra.mxu0 0.0
        %3271 = vmatprep.subr.mxu0 0.0
        %3272 = vmatpush1.msra.mxu0 0.0
        %3273 = vmatprep.subr.mxu0 0.0
        %3274 = vmatpush1.msra.mxu0 0.0
        %3275 = vmatprep.subr.mxu0 0.0
        %3276 = vmatpush1.msra.mxu0 0.0
        %3277 = vmatprep.subr.mxu0 0.0
        %3278 = vmatpush1.msra.mxu0 0.0
        %3279 = vmatprep.subr.mxu0 0.0
        %3280 = vmatpush1.msra.mxu0 0.0
        %3281 = vmatprep.subr.mxu0 0.0
        %3282 = vmatpush1.msra.mxu0 0.0
        %3283 = vmatprep.subr.mxu0 0.0
        %3284 = vmatpush1.msra.mxu0 0.0
        %3285 = vmatprep.subr.mxu0 0.0
        %3286 = vmatpush1.msra.mxu0 0.0
        %3287 = vmatprep.subr.mxu0 0.0
        %3288 = vmatpush1.msra.mxu0 0.0
        %3289 = vmatprep.subr.mxu0 0.0
        %3290 = vmatpush1.msra.mxu0 0.0
        %3291 = vmatprep.subr.mxu0 0.0
        %3292 = vmatpush1.msra.mxu0 0.0
        %3293 = vmatprep.subr.mxu0 0.0
        %3294 = vmatpush1.msra.mxu0 0.0
        %3295 = vmatprep.subr.mxu0 0.0
        %3296 = vmatpush1.msra.mxu0 0.0
        %3297 = vmatprep.subr.mxu0 0.0
        %3298 = vmatpush1.msra.mxu0 0.0
        %3299 = vmatprep.subr.mxu0 0.0
        %3300 = vmatpush1.msra.mxu0 0.0
        %3301 = vmatprep.subr.mxu0 0.0
        %3302 = vmatpush1.msra.mxu0 0.0
        %3303 = vmatprep.subr.mxu0 0.0
        %3304 = vmatpush1.msra.mxu0 0.0
        %3305 = vmatprep.subr.mxu0 0.0
        %3306 = vmatpush1.msra.mxu0 0.0
        %3307 = vmatprep.subr.mxu0 0.0
        %3308 = vmatpush1.msra.mxu0 0.0
        %3309 = vmatprep.subr.mxu0 0.0
        %3310 = vmatpush1.msra.mxu0 0.0
        %3311 = vmatprep.mubr.f32.mxu0 0.0
        %v3312 = vand.u32 %v3192, 4294901760
        %v3313 = vsub.f32 %v3192, %v3312
        %v3314 = vand.u32 %v3313, 4294901760
        %v3315 = vsub.f32 %v3313, %v3314
        %v3316 = vand.u32 %v3315, 4294901760
        %3317 = vmatmul.mubr.f32.gmra.mrb[0].mxu0 %v3316
        %v3318 = vpop.f32.mrb[0].mxu0
        %v3319 = vadd.f32 %v3188, %v3318
        %v3320 = vpop.f32.mrb[0].mxu0
        %3321 = vmatprep.mubr.f32.mxu0 0.0
        %v3322 = vand.u32 %v3195, 4294901760
        %v3323 = vsub.f32 %v3195, %v3322
        %v3324 = vand.u32 %v3323, 4294901760
        %v3325 = vsub.f32 %v3323, %v3324
        %v3326 = vand.u32 %v3325, 4294901760
        %3327 = vmatmul.mubr.f32.gmra.mrb[0].mxu0 %v3326
        %v3328 = vpop.f32.mrb[0].mxu0
        %v3329 = vadd.f32 %v3188, %v3328
        %v3330 = vpop.f32.mrb[0].mxu0
        %3331 = vmatprep.mubr.f32.mxu0 0.0
        %v3332 = vand.u32 %v3198, 4294901760
        %v3333 = vsub.f32 %v3198, %v3332
        %v3334 = vand.u32 %v3333, 4294901760
        %v3335 = vsub.f32 %v3333, %v3334
        %v3336 = vand.u32 %v3335, 4294901760
        %3337 = vmatmul.mubr.f32.gmra.mrb[0].mxu0 %v3336
        %v3338 = vpop.f32.mrb[0].mxu0
        %v3339 = vadd.f32 %v3188, %v3338
        %v3340 = vpop.f32.mrb[0].mxu0
        %3341 = vmatprep.mubr.f32.mxu0 0.0
        %v3342 = vand.u32 %v3201, 4294901760
        %v3343 = vsub.f32 %v3201, %v3342
        %v3344 = vand.u32 %v3343, 4294901760
        %v3345 = vsub.f32 %v3343, %v3344
        %v3346 = vand.u32 %v3345, 4294901760
        %3347 = vmatmul.mubr.f32.gmra.mrb[0].mxu0 %v3346
        %v3348 = vpop.f32.mrb[0].mxu0
        %v3349 = vadd.f32 %v3188, %v3348
        %v3350 = vpop.f32.mrb[0].mxu0
        %3351 = vmatprep.mubr.f32.mxu0 0.0
        %v3352 = vand.u32 %v3204, 4294901760
        %v3353 = vsub.f32 %v3204, %v3352
        %v3354 = vand.u32 %v3353, 4294901760
        %v3355 = vsub.f32 %v3353, %v3354
        %v3356 = vand.u32 %v3355, 4294901760
        %3357 = vmatmul.mubr.f32.gmra.mrb[0].mxu0 %v3356
        %v3358 = vpop.f32.mrb[0].mxu0
        %v3359 = vadd.f32 %v3188, %v3358
        %v3360 = vpop.f32.mrb[0].mxu0
        %3361 = vmatprep.mubr.f32.mxu0 0.0
        %v3362 = vand.u32 %v3207, 4294901760
        %v3363 = vsub.f32 %v3207, %v3362
        %v3364 = vand.u32 %v3363, 4294901760
        %v3365 = vsub.f32 %v3363, %v3364
        %v3366 = vand.u32 %v3365, 4294901760
        %3367 = vmatmul.mubr.f32.gmra.mrb[0].mxu0 %v3366
        %v3368 = vpop.f32.mrb[0].mxu0
        %v3369 = vadd.f32 %v3188, %v3368
        %v3370 = vpop.f32.mrb[0].mxu0
        %3371 = vmatprep.mubr.f32.mxu0 0.0
        %v3372 = vand.u32 %v3210, 4294901760
        %v3373 = vsub.f32 %v3210, %v3372
        %v3374 = vand.u32 %v3373, 4294901760
        %v3375 = vsub.f32 %v3373, %v3374
        %v3376 = vand.u32 %v3375, 4294901760
        %3377 = vmatmul.mubr.f32.gmra.mrb[0].mxu0 %v3376
        %v3378 = vpop.f32.mrb[0].mxu0
        %v3379 = vadd.f32 %v3188, %v3378
        %v3380 = vpop.f32.mrb[0].mxu0
        %3381 = vmatprep.mubr.f32.mxu0 0.0
        %v3382 = vand.u32 %v3213, 4294901760
        %v3383 = vsub.f32 %v3213, %v3382
        %v3384 = vand.u32 %v3383, 4294901760
        %v3385 = vsub.f32 %v3383, %v3384
        %v3386 = vand.u32 %v3385, 4294901760
        %3387 = vmatmul.mubr.f32.gmra.mrb[0].mxu0 %v3386
        %v3388 = vpop.f32.mrb[0].mxu0
        %v3389 = vadd.f32 %v3188, %v3388
        %v3390 = vpop.f32.mrb[0].mxu0
        %3391 = vmatprep.mubr.f32.mxu0 0.0
        %v3392 = vand.u32 %v3216, 4294901760
        %v3393 = vsub.f32 %v3216, %v3392
        %v3394 = vand.u32 %v3393, 4294901760
        %v3395 = vsub.f32 %v3393, %v3394
        %v3396 = vand.u32 %v3395, 4294901760
        %3397 = vmatmul.mubr.f32.gmra.mrb[0].mxu0 %v3396
        %v3398 = vpop.f32.mrb[0].mxu0
        %v3399 = vadd.f32 %v3188, %v3398
        %v3400 = vpop.f32.mrb[0].mxu0
        %3401 = vmatprep.mubr.f32.mxu0 0.0
        %v3402 = vand.u32 %v3219, 4294901760
        %v3403 = vsub.f32 %v3219, %v3402
        %v3404 = vand.u32 %v3403, 4294901760
        %v3405 = vsub.f32 %v3403, %v3404
        %v3406 = vand.u32 %v3405, 4294901760
        %3407 = vmatmul.mubr.f32.gmra.mrb[0].mxu0 %v3406
        %v3408 = vpop.f32.mrb[0].mxu0
        %v3409 = vadd.f32 %v3188, %v3408
        %v3410 = vpop.f32.mrb[0].mxu0
        %3411 = vmatprep.mubr.f32.mxu0 0.0
        %v3412 = vand.u32 %v3222, 4294901760
        %v3413 = vsub.f32 %v3222, %v3412
        %v3414 = vand.u32 %v3413, 4294901760
        %v3415 = vsub.f32 %v3413, %v3414
        %v3416 = vand.u32 %v3415, 4294901760
        %3417 = vmatmul.mubr.f32.gmra.mrb[0].mxu0 %v3416
        %v3418 = vpop.f32.mrb[0].mxu0
        %v3419 = vadd.f32 %v3188, %v3418
        %v3420 = vpop.f32.mrb[0].mxu0
        %3421 = vmatprep.mubr.f32.mxu0 0.0
        %v3422 = vand.u32 %v3225, 4294901760
        %v3423 = vsub.f32 %v3225, %v3422
        %v3424 = vand.u32 %v3423, 4294901760
        %v3425 = vsub.f32 %v3423, %v3424
        %v3426 = vand.u32 %v3425, 4294901760
        %3427 = vmatmul.mubr.f32.gmra.mrb[0].mxu0 %v3426
        %v3428 = vpop.f32.mrb[0].mxu0
        %v3429 = vadd.f32 %v3188, %v3428
        %v3430 = vpop.f32.mrb[0].mxu0
        %3431 = vmatprep.mubr.f32.mxu0 0.0
        %v3432 = vand.u32 %v3228, 4294901760
        %v3433 = vsub.f32 %v3228, %v3432
        %v3434 = vand.u32 %v3433, 4294901760
        %v3435 = vsub.f32 %v3433, %v3434
        %v3436 = vand.u32 %v3435, 4294901760
        %3437 = vmatmul.mubr.f32.gmra.mrb[0].mxu0 %v3436
        %v3438 = vpop.f32.mrb[0].mxu0
        %v3439 = vadd.f32 %v3188, %v3438
        %v3440 = vpop.f32.mrb[0].mxu0
        %3441 = vmatprep.mubr.f32.mxu0 0.0
        %v3442 = vand.u32 %v3231, 4294901760
        %v3443 = vsub.f32 %v3231, %v3442
        %v3444 = vand.u32 %v3443, 4294901760
        %v3445 = vsub.f32 %v3443, %v3444
        %v3446 = vand.u32 %v3445, 4294901760
        %3447 = vmatmul.mubr.f32.gmra.mrb[0].mxu0 %v3446
        %v3448 = vpop.f32.mrb[0].mxu0
        %v3449 = vadd.f32 %v3188, %v3448
        %v3450 = vpop.f32.mrb[0].mxu0
        %3451 = vmatprep.mubr.f32.mxu0 0.0
        %v3452 = vand.u32 %v3234, 4294901760
        %v3453 = vsub.f32 %v3234, %v3452
        %v3454 = vand.u32 %v3453, 4294901760
        %v3455 = vsub.f32 %v3453, %v3454
        %v3456 = vand.u32 %v3455, 4294901760
        %3457 = vmatmul.mubr.f32.gmra.mrb[0].mxu0 %v3456
        %v3458 = vpop.f32.mrb[0].mxu0
        %v3459 = vadd.f32 %v3188, %v3458
        %v3460 = vpop.f32.mrb[0].mxu0
        %3461 = vmatprep.mubr.f32.mxu0 0.0
        %v3462 = vand.u32 %v3237, 4294901760
        %v3463 = vsub.f32 %v3237, %v3462
        %v3464 = vand.u32 %v3463, 4294901760
        %v3465 = vsub.f32 %v3463, %v3464
        %v3466 = vand.u32 %v3465, 4294901760
        %3467 = vmatmul.mubr.f32.gmra.mrb[0].mxu0 %v3466
        %v3468 = vpop.f32.mrb[0].mxu0
        %v3469 = vadd.f32 %v3188, %v3468
        %v3470 = vpop.f32.mrb[0].mxu0
        %3471 = vdwg.mxu0
        %3472 = vmatprep.subr.mxu0 0.0
        %v3473 = vand.u32 %v3179, 4294901760
        %v3474 = vsub.f32 %v3179, %v3473
        %v3475 = vand.u32 %v3474, 4294901760
        %v3476 = vsub.f32 %v3474, %v3475
        %v3477 = vand.u32 %v3476, 4294901760
        %3478 = vmatpush1.msra.mxu0 %v3477
        %3479 = vmatprep.subr.mxu0 0.0
        %v3480 = vand.u32 %v3180, 4294901760
        %v3481 = vsub.f32 %v3180, %v3480
        %v3482 = vand.u32 %v3481, 4294901760
        %v3483 = vsub.f32 %v3481, %v3482
        %v3484 = vand.u32 %v3483, 4294901760
        %3485 = vmatpush1.msra.mxu0 %v3484
        %3486 = vmatprep.subr.mxu0 0.0
        %v3487 = vand.u32 %v3181, 4294901760
        %v3488 = vsub.f32 %v3181, %v3487
        %v3489 = vand.u32 %v3488, 4294901760
        %v3490 = vsub.f32 %v3488, %v3489
        %v3491 = vand.u32 %v3490, 4294901760
        %3492 = vmatpush1.msra.mxu0 %v3491
        %3493 = vmatprep.subr.mxu0 0.0
        %v3494 = vand.u32 %v3241, 4294901760
        %v3495 = vsub.f32 %v3241, %v3494
        %v3496 = vand.u32 %v3495, 4294901760
        %v3497 = vsub.f32 %v3495, %v3496
        %v3498 = vand.u32 %v3497, 4294901760
        %3499 = vmatpush1.msra.mxu0 %v3498
        %3500 = vmatprep.subr.mxu0 0.0
        %3501 = vmatpush1.msra.mxu0 0.0
        %3502 = vmatprep.subr.mxu0 0.0
        %3503 = vmatpush1.msra.mxu0 0.0
        %3504 = vmatprep.subr.mxu0 0.0
        %3505 = vmatpush1.msra.mxu0 0.0
        %3506 = vmatprep.subr.mxu0 0.0
        %3507 = vmatpush1.msra.mxu0 0.0
        %3508 = vmatprep.subr.mxu0 0.0
        %3509 = vmatpush1.msra.mxu0 0.0
        %3510 = vmatprep.subr.mxu0 0.0
        %3511 = vmatpush1.msra.mxu0 0.0
        %3512 = vmatprep.subr.mxu0 0.0
        %3513 = vmatpush1.msra.mxu0 0.0
        %3514 = vmatprep.subr.mxu0 0.0
        %3515 = vmatpush1.msra.mxu0 0.0
        %3516 = vmatprep.subr.mxu0 0.0
        %3517 = vmatpush1.msra.mxu0 0.0
        %3518 = vmatprep.subr.mxu0 0.0
        %3519 = vmatpush1.msra.mxu0 0.0
        %3520 = vmatprep.subr.mxu0 0.0
        %3521 = vmatpush1.msra.mxu0 0.0
        %3522 = vmatprep.subr.mxu0 0.0
        %3523 = vmatpush1.msra.mxu0 0.0
        %3524 = vmatprep.subr.mxu0 0.0
        %3525 = vmatpush1.msra.mxu0 0.0
        %3526 = vmatprep.subr.mxu0 0.0
        %3527 = vmatpush1.msra.mxu0 0.0
        %3528 = vmatprep.subr.mxu0 0.0
        %3529 = vmatpush1.msra.mxu0 0.0
        %3530 = vmatprep.subr.mxu0 0.0
        %3531 = vmatpush1.msra.mxu0 0.0
        %3532 = vmatprep.subr.mxu0 0.0
        %3533 = vmatpush1.msra.mxu0 0.0
        %3534 = vmatprep.subr.mxu0 0.0
        %3535 = vmatpush1.msra.mxu0 0.0
        %3536 = vmatprep.subr.mxu0 0.0
        %3537 = vmatpush1.msra.mxu0 0.0
        %3538 = vmatprep.subr.mxu0 0.0
        %3539 = vmatpush1.msra.mxu0 0.0
        %3540 = vmatprep.subr.mxu0 0.0
        %3541 = vmatpush1.msra.mxu0 0.0
        %3542 = vmatprep.subr.mxu0 0.0
        %3543 = vmatpush1.msra.mxu0 0.0
        %3544 = vmatprep.subr.mxu0 0.0
        %3545 = vmatpush1.msra.mxu0 0.0
        %3546 = vmatprep.subr.mxu0 0.0
        %3547 = vmatpush1.msra.mxu0 0.0
        %3548 = vmatprep.subr.mxu0 0.0
        %3549 = vmatpush1.msra.mxu0 0.0
        %3550 = vmatprep.subr.mxu0 0.0
        %3551 = vmatpush1.msra.mxu0 0.0
        %3552 = vmatprep.subr.mxu0 0.0
        %3553 = vmatpush1.msra.mxu0 0.0
        %3554 = vmatprep.subr.mxu0 0.0
        %3555 = vmatpush1.msra.mxu0 0.0
        %3556 = vmatprep.mubr.f32.mxu0 0.0
        %v3557 = vand.u32 %v3192, 4294901760
        %3558 = vmatmul.mubr.f32.gmra.mrb[0].mxu0 %v3557
        %v3559 = vpop.f32.mrb[0].mxu0
        %v3560 = vadd.f32 %v3319, %v3559
        %v3561 = vpop.f32.mrb[0].mxu0
        %3562 = vmatprep.mubr.f32.mxu0 0.0
        %v3563 = vand.u32 %v3195, 4294901760
        %3564 = vmatmul.mubr.f32.gmra.mrb[0].mxu0 %v3563
        %v3565 = vpop.f32.mrb[0].mxu0
        %v3566 = vadd.f32 %v3329, %v3565
        %v3567 = vpop.f32.mrb[0].mxu0
        %3568 = vmatprep.mubr.f32.mxu0 0.0
        %v3569 = vand.u32 %v3198, 4294901760
        %3570 = vmatmul.mubr.f32.gmra.mrb[0].mxu0 %v3569
        %v3571 = vpop.f32.mrb[0].mxu0
        %v3572 = vadd.f32 %v3339, %v3571
        %v3573 = vpop.f32.mrb[0].mxu0
        %3574 = vmatprep.mubr.f32.mxu0 0.0
        %v3575 = vand.u32 %v3201, 4294901760
        %3576 = vmatmul.mubr.f32.gmra.mrb[0].mxu0 %v3575
        %v3577 = vpop.f32.mrb[0].mxu0
        %v3578 = vadd.f32 %v3349, %v3577
        %v3579 = vpop.f32.mrb[0].mxu0
        %3580 = vmatprep.mubr.f32.mxu0 0.0
        %v3581 = vand.u32 %v3204, 4294901760
        %3582 = vmatmul.mubr.f32.gmra.mrb[0].mxu0 %v3581
        %v3583 = vpop.f32.mrb[0].mxu0
        %v3584 = vadd.f32 %v3359, %v3583
        %v3585 = vpop.f32.mrb[0].mxu0
        %3586 = vmatprep.mubr.f32.mxu0 0.0
        %v3587 = vand.u32 %v3207, 4294901760
        %3588 = vmatmul.mubr.f32.gmra.mrb[0].mxu0 %v3587
        %v3589 = vpop.f32.mrb[0].mxu0
        %v3590 = vadd.f32 %v3369, %v3589
        %v3591 = vpop.f32.mrb[0].mxu0
        %3592 = vmatprep.mubr.f32.mxu0 0.0
        %v3593 = vand.u32 %v3210, 4294901760
        %3594 = vmatmul.mubr.f32.gmra.mrb[0].mxu0 %v3593
        %v3595 = vpop.f32.mrb[0].mxu0
        %v3596 = vadd.f32 %v3379, %v3595
        %v3597 = vpop.f32.mrb[0].mxu0
        %3598 = vmatprep.mubr.f32.mxu0 0.0
        %v3599 = vand.u32 %v3213, 4294901760
        %3600 = vmatmul.mubr.f32.gmra.mrb[0].mxu0 %v3599
        %v3601 = vpop.f32.mrb[0].mxu0
        %v3602 = vadd.f32 %v3389, %v3601
        %v3603 = vpop.f32.mrb[0].mxu0
        %3604 = vmatprep.mubr.f32.mxu0 0.0
        %v3605 = vand.u32 %v3216, 4294901760
        %3606 = vmatmul.mubr.f32.gmra.mrb[0].mxu0 %v3605
        %v3607 = vpop.f32.mrb[0].mxu0
        %v3608 = vadd.f32 %v3399, %v3607
        %v3609 = vpop.f32.mrb[0].mxu0
        %3610 = vmatprep.mubr.f32.mxu0 0.0
        %v3611 = vand.u32 %v3219, 4294901760
        %3612 = vmatmul.mubr.f32.gmra.mrb[0].mxu0 %v3611
        %v3613 = vpop.f32.mrb[0].mxu0
        %v3614 = vadd.f32 %v3409, %v3613
        %v3615 = vpop.f32.mrb[0].mxu0
        %3616 = vmatprep.mubr.f32.mxu0 0.0
        %v3617 = vand.u32 %v3222, 4294901760
        %3618 = vmatmul.mubr.f32.gmra.mrb[0].mxu0 %v3617
        %v3619 = vpop.f32.mrb[0].mxu0
        %v3620 = vadd.f32 %v3419, %v3619
        %v3621 = vpop.f32.mrb[0].mxu0
        %3622 = vmatprep.mubr.f32.mxu0 0.0
        %v3623 = vand.u32 %v3225, 4294901760
        %3624 = vmatmul.mubr.f32.gmra.mrb[0].mxu0 %v3623
        %v3625 = vpop.f32.mrb[0].mxu0
        %v3626 = vadd.f32 %v3429, %v3625
        %v3627 = vpop.f32.mrb[0].mxu0
        %3628 = vmatprep.mubr.f32.mxu0 0.0
        %v3629 = vand.u32 %v3228, 4294901760
        %3630 = vmatmul.mubr.f32.gmra.mrb[0].mxu0 %v3629
        %v3631 = vpop.f32.mrb[0].mxu0
        %v3632 = vadd.f32 %v3439, %v3631
        %v3633 = vpop.f32.mrb[0].mxu0
        %3634 = vmatprep.mubr.f32.mxu0 0.0
        %v3635 = vand.u32 %v3231, 4294901760
        %3636 = vmatmul.mubr.f32.gmra.mrb[0].mxu0 %v3635
        %v3637 = vpop.f32.mrb[0].mxu0
        %v3638 = vadd.f32 %v3449, %v3637
        %v3639 = vpop.f32.mrb[0].mxu0
        %3640 = vmatprep.mubr.f32.mxu0 0.0
        %v3641 = vand.u32 %v3234, 4294901760
        %3642 = vmatmul.mubr.f32.gmra.mrb[0].mxu0 %v3641
        %v3643 = vpop.f32.mrb[0].mxu0
        %v3644 = vadd.f32 %v3459, %v3643
        %v3645 = vpop.f32.mrb[0].mxu0
        %3646 = vmatprep.mubr.f32.mxu0 0.0
        %v3647 = vand.u32 %v3237, 4294901760
        %3648 = vmatmul.mubr.f32.gmra.mrb[0].mxu0 %v3647
        %v3649 = vpop.f32.mrb[0].mxu0
        %v3650 = vadd.f32 %v3469, %v3649
        %v3651 = vpop.f32.mrb[0].mxu0
        %3652 = vdwg.mxu0
        %3653 = vmatprep.subr.mxu0 0.0
        %v3654 = vand.u32 %v3179, 4294901760
        %v3655 = vsub.f32 %v3179, %v3654
        %3656 = vmatpush1.msra.mxu0 %v3655
        %3657 = vmatprep.subr.mxu0 0.0
        %v3658 = vand.u32 %v3180, 4294901760
        %v3659 = vsub.f32 %v3180, %v3658
        %3660 = vmatpush1.msra.mxu0 %v3659
        %3661 = vmatprep.subr.mxu0 0.0
        %v3662 = vand.u32 %v3181, 4294901760
        %v3663 = vsub.f32 %v3181, %v3662
        %3664 = vmatpush1.msra.mxu0 %v3663
        %3665 = vmatprep.subr.mxu0 0.0
        %v3666 = vand.u32 %v3241, 4294901760
        %v3667 = vsub.f32 %v3241, %v3666
        %3668 = vmatpush1.msra.mxu0 %v3667
        %3669 = vmatprep.subr.mxu0 0.0
        %3670 = vmatpush1.msra.mxu0 0.0
        %3671 = vmatprep.subr.mxu0 0.0
        %3672 = vmatpush1.msra.mxu0 0.0
        %3673 = vmatprep.subr.mxu0 0.0
        %3674 = vmatpush1.msra.mxu0 0.0
        %3675 = vmatprep.subr.mxu0 0.0
        %3676 = vmatpush1.msra.mxu0 0.0
        %3677 = vmatprep.subr.mxu0 0.0
        %3678 = vmatpush1.msra.mxu0 0.0
        %3679 = vmatprep.subr.mxu0 0.0
        %3680 = vmatpush1.msra.mxu0 0.0
        %3681 = vmatprep.subr.mxu0 0.0
        %3682 = vmatpush1.msra.mxu0 0.0
        %3683 = vmatprep.subr.mxu0 0.0
        %3684 = vmatpush1.msra.mxu0 0.0
        %3685 = vmatprep.subr.mxu0 0.0
        %3686 = vmatpush1.msra.mxu0 0.0
        %3687 = vmatprep.subr.mxu0 0.0
        %3688 = vmatpush1.msra.mxu0 0.0
        %3689 = vmatprep.subr.mxu0 0.0
        %3690 = vmatpush1.msra.mxu0 0.0
        %3691 = vmatprep.subr.mxu0 0.0
        %3692 = vmatpush1.msra.mxu0 0.0
        %3693 = vmatprep.subr.mxu0 0.0
        %3694 = vmatpush1.msra.mxu0 0.0
        %3695 = vmatprep.subr.mxu0 0.0
        %3696 = vmatpush1.msra.mxu0 0.0
        %3697 = vmatprep.subr.mxu0 0.0
        %3698 = vmatpush1.msra.mxu0 0.0
        %3699 = vmatprep.subr.mxu0 0.0
        %3700 = vmatpush1.msra.mxu0 0.0
        %3701 = vmatprep.subr.mxu0 0.0
        %3702 = vmatpush1.msra.mxu0 0.0
        %3703 = vmatprep.subr.mxu0 0.0
        %3704 = vmatpush1.msra.mxu0 0.0
        %3705 = vmatprep.subr.mxu0 0.0
        %3706 = vmatpush1.msra.mxu0 0.0
        %3707 = vmatprep.subr.mxu0 0.0
        %3708 = vmatpush1.msra.mxu0 0.0
        %3709 = vmatprep.subr.mxu0 0.0
        %3710 = vmatpush1.msra.mxu0 0.0
        %3711 = vmatprep.subr.mxu0 0.0
        %3712 = vmatpush1.msra.mxu0 0.0
        %3713 = vmatprep.subr.mxu0 0.0
        %3714 = vmatpush1.msra.mxu0 0.0
        %3715 = vmatprep.subr.mxu0 0.0
        %3716 = vmatpush1.msra.mxu0 0.0
        %3717 = vmatprep.subr.mxu0 0.0
        %3718 = vmatpush1.msra.mxu0 0.0
        %3719 = vmatprep.subr.mxu0 0.0
        %3720 = vmatpush1.msra.mxu0 0.0
        %3721 = vmatprep.subr.mxu0 0.0
        %3722 = vmatpush1.msra.mxu0 0.0
        %3723 = vmatprep.subr.mxu0 0.0
        %3724 = vmatpush1.msra.mxu0 0.0
        %3725 = vmatprep.mubr.f32.mxu0 0.0
        %v3726 = vand.u32 %v3192, 4294901760
        %v3727 = vsub.f32 %v3192, %v3726
        %3728 = vmatmul.mubr.f32.gmra.mrb[0].mxu0 %v3727
        %v3729 = vpop.f32.mrb[0].mxu0
        %v3730 = vadd.f32 %v3560, %v3729
        %v3731 = vpop.f32.mrb[0].mxu0
        %3732 = vmatprep.mubr.f32.mxu0 0.0
        %v3733 = vand.u32 %v3195, 4294901760
        %v3734 = vsub.f32 %v3195, %v3733
        %3735 = vmatmul.mubr.f32.gmra.mrb[0].mxu0 %v3734
        %v3736 = vpop.f32.mrb[0].mxu0
        %v3737 = vadd.f32 %v3566, %v3736
        %v3738 = vpop.f32.mrb[0].mxu0
        %3739 = vmatprep.mubr.f32.mxu0 0.0
        %v3740 = vand.u32 %v3198, 4294901760
        %v3741 = vsub.f32 %v3198, %v3740
        %3742 = vmatmul.mubr.f32.gmra.mrb[0].mxu0 %v3741
        %v3743 = vpop.f32.mrb[0].mxu0
        %v3744 = vadd.f32 %v3572, %v3743
        %v3745 = vpop.f32.mrb[0].mxu0
        %3746 = vmatprep.mubr.f32.mxu0 0.0
        %v3747 = vand.u32 %v3201, 4294901760
        %v3748 = vsub.f32 %v3201, %v3747
        %3749 = vmatmul.mubr.f32.gmra.mrb[0].mxu0 %v3748
        %v3750 = vpop.f32.mrb[0].mxu0
        %v3751 = vadd.f32 %v3578, %v3750
        %v3752 = vpop.f32.mrb[0].mxu0
        %3753 = vmatprep.mubr.f32.mxu0 0.0
        %v3754 = vand.u32 %v3204, 4294901760
        %v3755 = vsub.f32 %v3204, %v3754
        %3756 = vmatmul.mubr.f32.gmra.mrb[0].mxu0 %v3755
        %v3757 = vpop.f32.mrb[0].mxu0
        %v3758 = vadd.f32 %v3584, %v3757
        %v3759 = vpop.f32.mrb[0].mxu0
        %3760 = vmatprep.mubr.f32.mxu0 0.0
        %v3761 = vand.u32 %v3207, 4294901760
        %v3762 = vsub.f32 %v3207, %v3761
        %3763 = vmatmul.mubr.f32.gmra.mrb[0].mxu0 %v3762
        %v3764 = vpop.f32.mrb[0].mxu0
        %v3765 = vadd.f32 %v3590, %v3764
        %v3766 = vpop.f32.mrb[0].mxu0
        %3767 = vmatprep.mubr.f32.mxu0 0.0
        %v3768 = vand.u32 %v3210, 4294901760
        %v3769 = vsub.f32 %v3210, %v3768
        %3770 = vmatmul.mubr.f32.gmra.mrb[0].mxu0 %v3769
        %v3771 = vpop.f32.mrb[0].mxu0
        %v3772 = vadd.f32 %v3596, %v3771
        %v3773 = vpop.f32.mrb[0].mxu0
        %3774 = vmatprep.mubr.f32.mxu0 0.0
        %v3775 = vand.u32 %v3213, 4294901760
        %v3776 = vsub.f32 %v3213, %v3775
        %3777 = vmatmul.mubr.f32.gmra.mrb[0].mxu0 %v3776
        %v3778 = vpop.f32.mrb[0].mxu0
        %v3779 = vadd.f32 %v3602, %v3778
        %v3780 = vpop.f32.mrb[0].mxu0
        %3781 = vmatprep.mubr.f32.mxu0 0.0
        %v3782 = vand.u32 %v3216, 4294901760
        %v3783 = vsub.f32 %v3216, %v3782
        %3784 = vmatmul.mubr.f32.gmra.mrb[0].mxu0 %v3783
        %v3785 = vpop.f32.mrb[0].mxu0
        %v3786 = vadd.f32 %v3608, %v3785
        %v3787 = vpop.f32.mrb[0].mxu0
        %3788 = vmatprep.mubr.f32.mxu0 0.0
        %v3789 = vand.u32 %v3219, 4294901760
        %v3790 = vsub.f32 %v3219, %v3789
        %3791 = vmatmul.mubr.f32.gmra.mrb[0].mxu0 %v3790
        %v3792 = vpop.f32.mrb[0].mxu0
        %v3793 = vadd.f32 %v3614, %v3792
        %v3794 = vpop.f32.mrb[0].mxu0
        %3795 = vmatprep.mubr.f32.mxu0 0.0
        %v3796 = vand.u32 %v3222, 4294901760
        %v3797 = vsub.f32 %v3222, %v3796
        %3798 = vmatmul.mubr.f32.gmra.mrb[0].mxu0 %v3797
        %v3799 = vpop.f32.mrb[0].mxu0
        %v3800 = vadd.f32 %v3620, %v3799
        %v3801 = vpop.f32.mrb[0].mxu0
        %3802 = vmatprep.mubr.f32.mxu0 0.0
        %v3803 = vand.u32 %v3225, 4294901760
        %v3804 = vsub.f32 %v3225, %v3803
        %3805 = vmatmul.mubr.f32.gmra.mrb[0].mxu0 %v3804
        %v3806 = vpop.f32.mrb[0].mxu0
        %v3807 = vadd.f32 %v3626, %v3806
        %v3808 = vpop.f32.mrb[0].mxu0
        %3809 = vmatprep.mubr.f32.mxu0 0.0
        %v3810 = vand.u32 %v3228, 4294901760
        %v3811 = vsub.f32 %v3228, %v3810
        %3812 = vmatmul.mubr.f32.gmra.mrb[0].mxu0 %v3811
        %v3813 = vpop.f32.mrb[0].mxu0
        %v3814 = vadd.f32 %v3632, %v3813
        %v3815 = vpop.f32.mrb[0].mxu0
        %3816 = vmatprep.mubr.f32.mxu0 0.0
        %v3817 = vand.u32 %v3231, 4294901760
        %v3818 = vsub.f32 %v3231, %v3817
        %3819 = vmatmul.mubr.f32.gmra.mrb[0].mxu0 %v3818
        %v3820 = vpop.f32.mrb[0].mxu0
        %v3821 = vadd.f32 %v3638, %v3820
        %v3822 = vpop.f32.mrb[0].mxu0
        %3823 = vmatprep.mubr.f32.mxu0 0.0
        %v3824 = vand.u32 %v3234, 4294901760
        %v3825 = vsub.f32 %v3234, %v3824
        %3826 = vmatmul.mubr.f32.gmra.mrb[0].mxu0 %v3825
        %v3827 = vpop.f32.mrb[0].mxu0
        %v3828 = vadd.f32 %v3644, %v3827
        %v3829 = vpop.f32.mrb[0].mxu0
        %3830 = vmatprep.mubr.f32.mxu0 0.0
        %v3831 = vand.u32 %v3237, 4294901760
        %v3832 = vsub.f32 %v3237, %v3831
        %3833 = vmatmul.mubr.f32.gmra.mrb[0].mxu0 %v3832
        %v3834 = vpop.f32.mrb[0].mxu0
        %v3835 = vadd.f32 %v3650, %v3834
        %v3836 = vpop.f32.mrb[0].mxu0
        %3837 = vdwg.mxu0
        %3838 = vmatprep.subr.mxu0 0.0
        %v3839 = vand.u32 %v3179, 4294901760
        %3840 = vmatpush1.msra.mxu0 %v3839
        %3841 = vmatprep.subr.mxu0 0.0
        %v3842 = vand.u32 %v3180, 4294901760
        %3843 = vmatpush1.msra.mxu0 %v3842
        %3844 = vmatprep.subr.mxu0 0.0
        %v3845 = vand.u32 %v3181, 4294901760
        %3846 = vmatpush1.msra.mxu0 %v3845
        %3847 = vmatprep.subr.mxu0 0.0
        %v3848 = vand.u32 %v3241, 4294901760
        %3849 = vmatpush1.msra.mxu0 %v3848
        %3850 = vmatprep.subr.mxu0 0.0
        %3851 = vmatpush1.msra.mxu0 0.0
        %3852 = vmatprep.subr.mxu0 0.0
        %3853 = vmatpush1.msra.mxu0 0.0
        %3854 = vmatprep.subr.mxu0 0.0
        %3855 = vmatpush1.msra.mxu0 0.0
        %3856 = vmatprep.subr.mxu0 0.0
        %3857 = vmatpush1.msra.mxu0 0.0
        %3858 = vmatprep.subr.mxu0 0.0
        %3859 = vmatpush1.msra.mxu0 0.0
        %3860 = vmatprep.subr.mxu0 0.0
        %3861 = vmatpush1.msra.mxu0 0.0
        %3862 = vmatprep.subr.mxu0 0.0
        %3863 = vmatpush1.msra.mxu0 0.0
        %3864 = vmatprep.subr.mxu0 0.0
        %3865 = vmatpush1.msra.mxu0 0.0
        %3866 = vmatprep.subr.mxu0 0.0
        %3867 = vmatpush1.msra.mxu0 0.0
        %3868 = vmatprep.subr.mxu0 0.0
        %3869 = vmatpush1.msra.mxu0 0.0
        %3870 = vmatprep.subr.mxu0 0.0
        %3871 = vmatpush1.msra.mxu0 0.0
        %3872 = vmatprep.subr.mxu0 0.0
        %3873 = vmatpush1.msra.mxu0 0.0
        %3874 = vmatprep.subr.mxu0 0.0
        %3875 = vmatpush1.msra.mxu0 0.0
        %3876 = vmatprep.subr.mxu0 0.0
        %3877 = vmatpush1.msra.mxu0 0.0
        %3878 = vmatprep.subr.mxu0 0.0
        %3879 = vmatpush1.msra.mxu0 0.0
        %3880 = vmatprep.subr.mxu0 0.0
        %3881 = vmatpush1.msra.mxu0 0.0
        %3882 = vmatprep.subr.mxu0 0.0
        %3883 = vmatpush1.msra.mxu0 0.0
        %3884 = vmatprep.subr.mxu0 0.0
        %3885 = vmatpush1.msra.mxu0 0.0
        %3886 = vmatprep.subr.mxu0 0.0
        %3887 = vmatpush1.msra.mxu0 0.0
        %3888 = vmatprep.subr.mxu0 0.0
        %3889 = vmatpush1.msra.mxu0 0.0
        %3890 = vmatprep.subr.mxu0 0.0
        %3891 = vmatpush1.msra.mxu0 0.0
        %3892 = vmatprep.subr.mxu0 0.0
        %3893 = vmatpush1.msra.mxu0 0.0
        %3894 = vmatprep.subr.mxu0 0.0
        %3895 = vmatpush1.msra.mxu0 0.0
        %3896 = vmatprep.subr.mxu0 0.0
        %3897 = vmatpush1.msra.mxu0 0.0
        %3898 = vmatprep.subr.mxu0 0.0
        %3899 = vmatpush1.msra.mxu0 0.0
        %3900 = vmatprep.subr.mxu0 0.0
        %3901 = vmatpush1.msra.mxu0 0.0
        %3902 = vmatprep.subr.mxu0 0.0
        %3903 = vmatpush1.msra.mxu0 0.0
        %3904 = vmatprep.subr.mxu0 0.0
        %3905 = vmatpush1.msra.mxu0 0.0
        %3906 = vmatprep.mubr.f32.mxu0 0.0
        %v3907 = vand.u32 %v3192, 4294901760
        %v3908 = vsub.f32 %v3192, %v3907
        %v3909 = vand.u32 %v3908, 4294901760
        %3910 = vmatmul.mubr.f32.gmra.mrb[0].mxu0 %v3909
        %v3911 = vpop.f32.mrb[0].mxu0
        %v3912 = vadd.f32 %v3730, %v3911
        %v3913 = vpop.f32.mrb[0].mxu0
        %3914 = vmatprep.mubr.f32.mxu0 0.0
        %v3915 = vand.u32 %v3195, 4294901760
        %v3916 = vsub.f32 %v3195, %v3915
        %v3917 = vand.u32 %v3916, 4294901760
        %3918 = vmatmul.mubr.f32.gmra.mrb[0].mxu0 %v3917
        %v3919 = vpop.f32.mrb[0].mxu0
        %v3920 = vadd.f32 %v3737, %v3919
        %v3921 = vpop.f32.mrb[0].mxu0
        %3922 = vmatprep.mubr.f32.mxu0 0.0
        %v3923 = vand.u32 %v3198, 4294901760
        %v3924 = vsub.f32 %v3198, %v3923
        %v3925 = vand.u32 %v3924, 4294901760
        %3926 = vmatmul.mubr.f32.gmra.mrb[0].mxu0 %v3925
        %v3927 = vpop.f32.mrb[0].mxu0
        %v3928 = vadd.f32 %v3744, %v3927
        %v3929 = vpop.f32.mrb[0].mxu0
        %3930 = vmatprep.mubr.f32.mxu0 0.0
        %v3931 = vand.u32 %v3201, 4294901760
        %v3932 = vsub.f32 %v3201, %v3931
        %v3933 = vand.u32 %v3932, 4294901760
        %3934 = vmatmul.mubr.f32.gmra.mrb[0].mxu0 %v3933
        %v3935 = vpop.f32.mrb[0].mxu0
        %v3936 = vadd.f32 %v3751, %v3935
        %v3937 = vpop.f32.mrb[0].mxu0
        %3938 = vmatprep.mubr.f32.mxu0 0.0
        %v3939 = vand.u32 %v3204, 4294901760
        %v3940 = vsub.f32 %v3204, %v3939
        %v3941 = vand.u32 %v3940, 4294901760
        %3942 = vmatmul.mubr.f32.gmra.mrb[0].mxu0 %v3941
        %v3943 = vpop.f32.mrb[0].mxu0
        %v3944 = vadd.f32 %v3758, %v3943
        %v3945 = vpop.f32.mrb[0].mxu0
        %3946 = vmatprep.mubr.f32.mxu0 0.0
        %v3947 = vand.u32 %v3207, 4294901760
        %v3948 = vsub.f32 %v3207, %v3947
        %v3949 = vand.u32 %v3948, 4294901760
        %3950 = vmatmul.mubr.f32.gmra.mrb[0].mxu0 %v3949
        %v3951 = vpop.f32.mrb[0].mxu0
        %v3952 = vadd.f32 %v3765, %v3951
        %v3953 = vpop.f32.mrb[0].mxu0
        %3954 = vmatprep.mubr.f32.mxu0 0.0
        %v3955 = vand.u32 %v3210, 4294901760
        %v3956 = vsub.f32 %v3210, %v3955
        %v3957 = vand.u32 %v3956, 4294901760
        %3958 = vmatmul.mubr.f32.gmra.mrb[0].mxu0 %v3957
        %v3959 = vpop.f32.mrb[0].mxu0
        %v3960 = vadd.f32 %v3772, %v3959
        %v3961 = vpop.f32.mrb[0].mxu0
        %3962 = vmatprep.mubr.f32.mxu0 0.0
        %v3963 = vand.u32 %v3213, 4294901760
        %v3964 = vsub.f32 %v3213, %v3963
        %v3965 = vand.u32 %v3964, 4294901760
        %3966 = vmatmul.mubr.f32.gmra.mrb[0].mxu0 %v3965
        %v3967 = vpop.f32.mrb[0].mxu0
        %v3968 = vadd.f32 %v3779, %v3967
        %v3969 = vpop.f32.mrb[0].mxu0
        %3970 = vmatprep.mubr.f32.mxu0 0.0
        %v3971 = vand.u32 %v3216, 4294901760
        %v3972 = vsub.f32 %v3216, %v3971
        %v3973 = vand.u32 %v3972, 4294901760
        %3974 = vmatmul.mubr.f32.gmra.mrb[0].mxu0 %v3973
        %v3975 = vpop.f32.mrb[0].mxu0
        %v3976 = vadd.f32 %v3786, %v3975
        %v3977 = vpop.f32.mrb[0].mxu0
        %3978 = vmatprep.mubr.f32.mxu0 0.0
        %v3979 = vand.u32 %v3219, 4294901760
        %v3980 = vsub.f32 %v3219, %v3979
        %v3981 = vand.u32 %v3980, 4294901760
        %3982 = vmatmul.mubr.f32.gmra.mrb[0].mxu0 %v3981
        %v3983 = vpop.f32.mrb[0].mxu0
        %v3984 = vadd.f32 %v3793, %v3983
        %v3985 = vpop.f32.mrb[0].mxu0
        %3986 = vmatprep.mubr.f32.mxu0 0.0
        %v3987 = vand.u32 %v3222, 4294901760
        %v3988 = vsub.f32 %v3222, %v3987
        %v3989 = vand.u32 %v3988, 4294901760
        %3990 = vmatmul.mubr.f32.gmra.mrb[0].mxu0 %v3989
        %v3991 = vpop.f32.mrb[0].mxu0
        %v3992 = vadd.f32 %v3800, %v3991
        %v3993 = vpop.f32.mrb[0].mxu0
        %3994 = vmatprep.mubr.f32.mxu0 0.0
        %v3995 = vand.u32 %v3225, 4294901760
        %v3996 = vsub.f32 %v3225, %v3995
        %v3997 = vand.u32 %v3996, 4294901760
        %3998 = vmatmul.mubr.f32.gmra.mrb[0].mxu0 %v3997
        %v3999 = vpop.f32.mrb[0].mxu0
        %v4000 = vadd.f32 %v3807, %v3999
        %v4001 = vpop.f32.mrb[0].mxu0
        %4002 = vmatprep.mubr.f32.mxu0 0.0
        %v4003 = vand.u32 %v3228, 4294901760
        %v4004 = vsub.f32 %v3228, %v4003
        %v4005 = vand.u32 %v4004, 4294901760
        %4006 = vmatmul.mubr.f32.gmra.mrb[0].mxu0 %v4005
        %v4007 = vpop.f32.mrb[0].mxu0
        %v4008 = vadd.f32 %v3814, %v4007
        %v4009 = vpop.f32.mrb[0].mxu0
        %4010 = vmatprep.mubr.f32.mxu0 0.0
        %v4011 = vand.u32 %v3231, 4294901760
        %v4012 = vsub.f32 %v3231, %v4011
        %v4013 = vand.u32 %v4012, 4294901760
        %4014 = vmatmul.mubr.f32.gmra.mrb[0].mxu0 %v4013
        %v4015 = vpop.f32.mrb[0].mxu0
        %v4016 = vadd.f32 %v3821, %v4015
        %v4017 = vpop.f32.mrb[0].mxu0
        %4018 = vmatprep.mubr.f32.mxu0 0.0
        %v4019 = vand.u32 %v3234, 4294901760
        %v4020 = vsub.f32 %v3234, %v4019
        %v4021 = vand.u32 %v4020, 4294901760
        %4022 = vmatmul.mubr.f32.gmra.mrb[0].mxu0 %v4021
        %v4023 = vpop.f32.mrb[0].mxu0
        %v4024 = vadd.f32 %v3828, %v4023
        %v4025 = vpop.f32.mrb[0].mxu0
        %4026 = vmatprep.mubr.f32.mxu0 0.0
        %v4027 = vand.u32 %v3237, 4294901760
        %v4028 = vsub.f32 %v3237, %v4027
        %v4029 = vand.u32 %v4028, 4294901760
        %4030 = vmatmul.mubr.f32.gmra.mrb[0].mxu0 %v4029
        %v4031 = vpop.f32.mrb[0].mxu0
        %v4032 = vadd.f32 %v3835, %v4031
        %v4033 = vpop.f32.mrb[0].mxu0
        %4034 = vdwg.mxu0
        %4035 = vmatprep.subr.mxu0 0.0
        %v4036 = vand.u32 %v3179, 4294901760
        %v4037 = vsub.f32 %v3179, %v4036
        %v4038 = vand.u32 %v4037, 4294901760
        %4039 = vmatpush1.msra.mxu0 %v4038
        %4040 = vmatprep.subr.mxu0 0.0
        %v4041 = vand.u32 %v3180, 4294901760
        %v4042 = vsub.f32 %v3180, %v4041
        %v4043 = vand.u32 %v4042, 4294901760
        %4044 = vmatpush1.msra.mxu0 %v4043
        %4045 = vmatprep.subr.mxu0 0.0
        %v4046 = vand.u32 %v3181, 4294901760
        %v4047 = vsub.f32 %v3181, %v4046
        %v4048 = vand.u32 %v4047, 4294901760
        %4049 = vmatpush1.msra.mxu0 %v4048
        %4050 = vmatprep.subr.mxu0 0.0
        %v4051 = vand.u32 %v3241, 4294901760
        %v4052 = vsub.f32 %v3241, %v4051
        %v4053 = vand.u32 %v4052, 4294901760
        %4054 = vmatpush1.msra.mxu0 %v4053
        %4055 = vmatprep.subr.mxu0 0.0
        %4056 = vmatpush1.msra.mxu0 0.0
        %4057 = vmatprep.subr.mxu0 0.0
        %4058 = vmatpush1.msra.mxu0 0.0
        %4059 = vmatprep.subr.mxu0 0.0
        %4060 = vmatpush1.msra.mxu0 0.0
        %4061 = vmatprep.subr.mxu0 0.0
        %4062 = vmatpush1.msra.mxu0 0.0
        %4063 = vmatprep.subr.mxu0 0.0
        %4064 = vmatpush1.msra.mxu0 0.0
        %4065 = vmatprep.subr.mxu0 0.0
        %4066 = vmatpush1.msra.mxu0 0.0
        %4067 = vmatprep.subr.mxu0 0.0
        %4068 = vmatpush1.msra.mxu0 0.0
        %4069 = vmatprep.subr.mxu0 0.0
        %4070 = vmatpush1.msra.mxu0 0.0
        %4071 = vmatprep.subr.mxu0 0.0
        %4072 = vmatpush1.msra.mxu0 0.0
        %4073 = vmatprep.subr.mxu0 0.0
        %4074 = vmatpush1.msra.mxu0 0.0
        %4075 = vmatprep.subr.mxu0 0.0
        %4076 = vmatpush1.msra.mxu0 0.0
        %4077 = vmatprep.subr.mxu0 0.0
        %4078 = vmatpush1.msra.mxu0 0.0
        %4079 = vmatprep.subr.mxu0 0.0
        %4080 = vmatpush1.msra.mxu0 0.0
        %4081 = vmatprep.subr.mxu0 0.0
        %4082 = vmatpush1.msra.mxu0 0.0
        %4083 = vmatprep.subr.mxu0 0.0
        %4084 = vmatpush1.msra.mxu0 0.0
        %4085 = vmatprep.subr.mxu0 0.0
        %4086 = vmatpush1.msra.mxu0 0.0
        %4087 = vmatprep.subr.mxu0 0.0
        %4088 = vmatpush1.msra.mxu0 0.0
        %4089 = vmatprep.subr.mxu0 0.0
        %4090 = vmatpush1.msra.mxu0 0.0
        %4091 = vmatprep.subr.mxu0 0.0
        %4092 = vmatpush1.msra.mxu0 0.0
        %4093 = vmatprep.subr.mxu0 0.0
        %4094 = vmatpush1.msra.mxu0 0.0
        %4095 = vmatprep.subr.mxu0 0.0
        %4096 = vmatpush1.msra.mxu0 0.0
        %4097 = vmatprep.subr.mxu0 0.0
        %4098 = vmatpush1.msra.mxu0 0.0
        %4099 = vmatprep.subr.mxu0 0.0
        %4100 = vmatpush1.msra.mxu0 0.0
        %4101 = vmatprep.subr.mxu0 0.0
        %4102 = vmatpush1.msra.mxu0 0.0
        %4103 = vmatprep.subr.mxu0 0.0
        %4104 = vmatpush1.msra.mxu0 0.0
        %4105 = vmatprep.subr.mxu0 0.0
        %4106 = vmatpush1.msra.mxu0 0.0
        %4107 = vmatprep.subr.mxu0 0.0
        %4108 = vmatpush1.msra.mxu0 0.0
        %4109 = vmatprep.subr.mxu0 0.0
        %4110 = vmatpush1.msra.mxu0 0.0
        %4111 = vmatprep.mubr.f32.mxu0 0.0
        %v4112 = vand.u32 %v3192, 4294901760
        %4113 = vmatmul.mubr.f32.gmra.mrb[0].mxu0 %v4112
        %v4114 = vpop.f32.mrb[0].mxu0
        %v4115 = vadd.f32 %v3912, %v4114
        %v4116 = vpop.f32.mrb[0].mxu0
        %4117 = vmatprep.mubr.f32.mxu0 0.0
        %v4118 = vand.u32 %v3195, 4294901760
        %4119 = vmatmul.mubr.f32.gmra.mrb[0].mxu0 %v4118
        %v4120 = vpop.f32.mrb[0].mxu0
        %v4121 = vadd.f32 %v3920, %v4120
        %v4122 = vpop.f32.mrb[0].mxu0
        %4123 = vmatprep.mubr.f32.mxu0 0.0
        %v4124 = vand.u32 %v3198, 4294901760
        %4125 = vmatmul.mubr.f32.gmra.mrb[0].mxu0 %v4124
        %v4126 = vpop.f32.mrb[0].mxu0
        %v4127 = vadd.f32 %v3928, %v4126
        %v4128 = vpop.f32.mrb[0].mxu0
        %4129 = vmatprep.mubr.f32.mxu0 0.0
        %v4130 = vand.u32 %v3201, 4294901760
        %4131 = vmatmul.mubr.f32.gmra.mrb[0].mxu0 %v4130
        %v4132 = vpop.f32.mrb[0].mxu0
        %v4133 = vadd.f32 %v3936, %v4132
        %v4134 = vpop.f32.mrb[0].mxu0
        %4135 = vmatprep.mubr.f32.mxu0 0.0
        %v4136 = vand.u32 %v3204, 4294901760
        %4137 = vmatmul.mubr.f32.gmra.mrb[0].mxu0 %v4136
        %v4138 = vpop.f32.mrb[0].mxu0
        %v4139 = vadd.f32 %v3944, %v4138
        %v4140 = vpop.f32.mrb[0].mxu0
        %4141 = vmatprep.mubr.f32.mxu0 0.0
        %v4142 = vand.u32 %v3207, 4294901760
        %4143 = vmatmul.mubr.f32.gmra.mrb[0].mxu0 %v4142
        %v4144 = vpop.f32.mrb[0].mxu0
        %v4145 = vadd.f32 %v3952, %v4144
        %v4146 = vpop.f32.mrb[0].mxu0
        %4147 = vmatprep.mubr.f32.mxu0 0.0
        %v4148 = vand.u32 %v3210, 4294901760
        %4149 = vmatmul.mubr.f32.gmra.mrb[0].mxu0 %v4148
        %v4150 = vpop.f32.mrb[0].mxu0
        %v4151 = vadd.f32 %v3960, %v4150
        %v4152 = vpop.f32.mrb[0].mxu0
        %4153 = vmatprep.mubr.f32.mxu0 0.0
        %v4154 = vand.u32 %v3213, 4294901760
        %4155 = vmatmul.mubr.f32.gmra.mrb[0].mxu0 %v4154
        %v4156 = vpop.f32.mrb[0].mxu0
        %v4157 = vadd.f32 %v3968, %v4156
        %v4158 = vpop.f32.mrb[0].mxu0
        %4159 = vmatprep.mubr.f32.mxu0 0.0
        %v4160 = vand.u32 %v3216, 4294901760
        %4161 = vmatmul.mubr.f32.gmra.mrb[0].mxu0 %v4160
        %v4162 = vpop.f32.mrb[0].mxu0
        %v4163 = vadd.f32 %v3976, %v4162
        %v4164 = vpop.f32.mrb[0].mxu0
        %4165 = vmatprep.mubr.f32.mxu0 0.0
        %v4166 = vand.u32 %v3219, 4294901760
        %4167 = vmatmul.mubr.f32.gmra.mrb[0].mxu0 %v4166
        %v4168 = vpop.f32.mrb[0].mxu0
        %v4169 = vadd.f32 %v3984, %v4168
        %v4170 = vpop.f32.mrb[0].mxu0
        %4171 = vmatprep.mubr.f32.mxu0 0.0
        %v4172 = vand.u32 %v3222, 4294901760
        %4173 = vmatmul.mubr.f32.gmra.mrb[0].mxu0 %v4172
        %v4174 = vpop.f32.mrb[0].mxu0
        %v4175 = vadd.f32 %v3992, %v4174
        %v4176 = vpop.f32.mrb[0].mxu0
        %4177 = vmatprep.mubr.f32.mxu0 0.0
        %v4178 = vand.u32 %v3225, 4294901760
        %4179 = vmatmul.mubr.f32.gmra.mrb[0].mxu0 %v4178
        %v4180 = vpop.f32.mrb[0].mxu0
        %v4181 = vadd.f32 %v4000, %v4180
        %v4182 = vpop.f32.mrb[0].mxu0
        %4183 = vmatprep.mubr.f32.mxu0 0.0
        %v4184 = vand.u32 %v3228, 4294901760
        %4185 = vmatmul.mubr.f32.gmra.mrb[0].mxu0 %v4184
        %v4186 = vpop.f32.mrb[0].mxu0
        %v4187 = vadd.f32 %v4008, %v4186
        %v4188 = vpop.f32.mrb[0].mxu0
        %4189 = vmatprep.mubr.f32.mxu0 0.0
        %v4190 = vand.u32 %v3231, 4294901760
        %4191 = vmatmul.mubr.f32.gmra.mrb[0].mxu0 %v4190
        %v4192 = vpop.f32.mrb[0].mxu0
        %v4193 = vadd.f32 %v4016, %v4192
        %v4194 = vpop.f32.mrb[0].mxu0
        %4195 = vmatprep.mubr.f32.mxu0 0.0
        %v4196 = vand.u32 %v3234, 4294901760
        %4197 = vmatmul.mubr.f32.gmra.mrb[0].mxu0 %v4196
        %v4198 = vpop.f32.mrb[0].mxu0
        %v4199 = vadd.f32 %v4024, %v4198
        %v4200 = vpop.f32.mrb[0].mxu0
        %4201 = vmatprep.mubr.f32.mxu0 0.0
        %v4202 = vand.u32 %v3237, 4294901760
        %4203 = vmatmul.mubr.f32.gmra.mrb[0].mxu0 %v4202
        %v4204 = vpop.f32.mrb[0].mxu0
        %v4205 = vadd.f32 %v4032, %v4204
        %v4206 = vpop.f32.mrb[0].mxu0
        %4207 = vdwg.mxu0
        %4208 = vmatprep.subr.mxu0 0.0
        %v4209 = vand.u32 %v3179, 4294901760
        %4210 = vmatpush1.msra.mxu0 %v4209
        %4211 = vmatprep.subr.mxu0 0.0
        %v4212 = vand.u32 %v3180, 4294901760
        %4213 = vmatpush1.msra.mxu0 %v4212
        %4214 = vmatprep.subr.mxu0 0.0
        %v4215 = vand.u32 %v3181, 4294901760
        %4216 = vmatpush1.msra.mxu0 %v4215
        %4217 = vmatprep.subr.mxu0 0.0
        %v4218 = vand.u32 %v3241, 4294901760
        %4219 = vmatpush1.msra.mxu0 %v4218
        %4220 = vmatprep.subr.mxu0 0.0
        %4221 = vmatpush1.msra.mxu0 0.0
        %4222 = vmatprep.subr.mxu0 0.0
        %4223 = vmatpush1.msra.mxu0 0.0
        %4224 = vmatprep.subr.mxu0 0.0
        %4225 = vmatpush1.msra.mxu0 0.0
        %4226 = vmatprep.subr.mxu0 0.0
        %4227 = vmatpush1.msra.mxu0 0.0
        %4228 = vmatprep.subr.mxu0 0.0
        %4229 = vmatpush1.msra.mxu0 0.0
        %4230 = vmatprep.subr.mxu0 0.0
        %4231 = vmatpush1.msra.mxu0 0.0
        %4232 = vmatprep.subr.mxu0 0.0
        %4233 = vmatpush1.msra.mxu0 0.0
        %4234 = vmatprep.subr.mxu0 0.0
        %4235 = vmatpush1.msra.mxu0 0.0
        %4236 = vmatprep.subr.mxu0 0.0
        %4237 = vmatpush1.msra.mxu0 0.0
        %4238 = vmatprep.subr.mxu0 0.0
        %4239 = vmatpush1.msra.mxu0 0.0
        %4240 = vmatprep.subr.mxu0 0.0
        %4241 = vmatpush1.msra.mxu0 0.0
        %4242 = vmatprep.subr.mxu0 0.0
        %4243 = vmatpush1.msra.mxu0 0.0
        %4244 = vmatprep.subr.mxu0 0.0
        %4245 = vmatpush1.msra.mxu0 0.0
        %4246 = vmatprep.subr.mxu0 0.0
        %4247 = vmatpush1.msra.mxu0 0.0
        %4248 = vmatprep.subr.mxu0 0.0
        %4249 = vmatpush1.msra.mxu0 0.0
        %4250 = vmatprep.subr.mxu0 0.0
        %4251 = vmatpush1.msra.mxu0 0.0
        %4252 = vmatprep.subr.mxu0 0.0
        %4253 = vmatpush1.msra.mxu0 0.0
        %4254 = vmatprep.subr.mxu0 0.0
        %4255 = vmatpush1.msra.mxu0 0.0
        %4256 = vmatprep.subr.mxu0 0.0
        %4257 = vmatpush1.msra.mxu0 0.0
        %4258 = vmatprep.subr.mxu0 0.0
        %4259 = vmatpush1.msra.mxu0 0.0
        %4260 = vmatprep.subr.mxu0 0.0
        %4261 = vmatpush1.msra.mxu0 0.0
        %4262 = vmatprep.subr.mxu0 0.0
        %4263 = vmatpush1.msra.mxu0 0.0
        %4264 = vmatprep.subr.mxu0 0.0
        %4265 = vmatpush1.msra.mxu0 0.0
        %4266 = vmatprep.subr.mxu0 0.0
        %4267 = vmatpush1.msra.mxu0 0.0
        %4268 = vmatprep.subr.mxu0 0.0
        %4269 = vmatpush1.msra.mxu0 0.0
        %4270 = vmatprep.subr.mxu0 0.0
        %4271 = vmatpush1.msra.mxu0 0.0
        %4272 = vmatprep.subr.mxu0 0.0
        %4273 = vmatpush1.msra.mxu0 0.0
        %4274 = vmatprep.subr.mxu0 0.0
        %4275 = vmatpush1.msra.mxu0 0.0
        %4276 = vmatprep.mubr.f32.mxu0 0.0
        %v4277 = vand.u32 %v3192, 4294901760
        %4278 = vmatmul.mubr.f32.gmra.mrb[0].mxu0 %v4277
        %v4279 = vpop.f32.mrb[0].mxu0
        %v4280 = vadd.f32 %v4115, %v4279
        %v4281 = vpop.f32.mrb[0].mxu0
        %4282 = vmatprep.mubr.f32.mxu0 0.0
        %v4283 = vand.u32 %v3195, 4294901760
        %4284 = vmatmul.mubr.f32.gmra.mrb[0].mxu0 %v4283
        %v4285 = vpop.f32.mrb[0].mxu0
        %v4286 = vadd.f32 %v4121, %v4285
        %v4287 = vpop.f32.mrb[0].mxu0
        %4288 = vmatprep.mubr.f32.mxu0 0.0
        %v4289 = vand.u32 %v3198, 4294901760
        %4290 = vmatmul.mubr.f32.gmra.mrb[0].mxu0 %v4289
        %v4291 = vpop.f32.mrb[0].mxu0
        %v4292 = vadd.f32 %v4127, %v4291
        %v4293 = vpop.f32.mrb[0].mxu0
        %4294 = vmatprep.mubr.f32.mxu0 0.0
        %v4295 = vand.u32 %v3201, 4294901760
        %4296 = vmatmul.mubr.f32.gmra.mrb[0].mxu0 %v4295
        %v4297 = vpop.f32.mrb[0].mxu0
        %v4298 = vadd.f32 %v4133, %v4297
        %v4299 = vpop.f32.mrb[0].mxu0
        %4300 = vmatprep.mubr.f32.mxu0 0.0
        %v4301 = vand.u32 %v3204, 4294901760
        %4302 = vmatmul.mubr.f32.gmra.mrb[0].mxu0 %v4301
        %v4303 = vpop.f32.mrb[0].mxu0
        %v4304 = vadd.f32 %v4139, %v4303
        %v4305 = vpop.f32.mrb[0].mxu0
        %4306 = vmatprep.mubr.f32.mxu0 0.0
        %v4307 = vand.u32 %v3207, 4294901760
        %4308 = vmatmul.mubr.f32.gmra.mrb[0].mxu0 %v4307
        %v4309 = vpop.f32.mrb[0].mxu0
        %v4310 = vadd.f32 %v4145, %v4309
        %v4311 = vpop.f32.mrb[0].mxu0
        %4312 = vmatprep.mubr.f32.mxu0 0.0
        %v4313 = vand.u32 %v3210, 4294901760
        %4314 = vmatmul.mubr.f32.gmra.mrb[0].mxu0 %v4313
        %v4315 = vpop.f32.mrb[0].mxu0
        %v4316 = vadd.f32 %v4151, %v4315
        %v4317 = vpop.f32.mrb[0].mxu0
        %4318 = vmatprep.mubr.f32.mxu0 0.0
        %v4319 = vand.u32 %v3213, 4294901760
        %4320 = vmatmul.mubr.f32.gmra.mrb[0].mxu0 %v4319
        %v4321 = vpop.f32.mrb[0].mxu0
        %v4322 = vadd.f32 %v4157, %v4321
        %v4323 = vpop.f32.mrb[0].mxu0
        %4324 = vmatprep.mubr.f32.mxu0 0.0
        %v4325 = vand.u32 %v3216, 4294901760
        %4326 = vmatmul.mubr.f32.gmra.mrb[0].mxu0 %v4325
        %v4327 = vpop.f32.mrb[0].mxu0
        %v4328 = vadd.f32 %v4163, %v4327
        %v4329 = vpop.f32.mrb[0].mxu0
        %4330 = vmatprep.mubr.f32.mxu0 0.0
        %v4331 = vand.u32 %v3219, 4294901760
        %4332 = vmatmul.mubr.f32.gmra.mrb[0].mxu0 %v4331
        %v4333 = vpop.f32.mrb[0].mxu0
        %v4334 = vadd.f32 %v4169, %v4333
        %v4335 = vpop.f32.mrb[0].mxu0
        %4336 = vmatprep.mubr.f32.mxu0 0.0
        %v4337 = vand.u32 %v3222, 4294901760
        %4338 = vmatmul.mubr.f32.gmra.mrb[0].mxu0 %v4337
        %v4339 = vpop.f32.mrb[0].mxu0
        %v4340 = vadd.f32 %v4175, %v4339
        %v4341 = vpop.f32.mrb[0].mxu0
        %4342 = vmatprep.mubr.f32.mxu0 0.0
        %v4343 = vand.u32 %v3225, 4294901760
        %4344 = vmatmul.mubr.f32.gmra.mrb[0].mxu0 %v4343
        %v4345 = vpop.f32.mrb[0].mxu0
        %v4346 = vadd.f32 %v4181, %v4345
        %v4347 = vpop.f32.mrb[0].mxu0
        %4348 = vmatprep.mubr.f32.mxu0 0.0
        %v4349 = vand.u32 %v3228, 4294901760
        %4350 = vmatmul.mubr.f32.gmra.mrb[0].mxu0 %v4349
        %v4351 = vpop.f32.mrb[0].mxu0
        %v4352 = vadd.f32 %v4187, %v4351
        %v4353 = vpop.f32.mrb[0].mxu0
        %4354 = vmatprep.mubr.f32.mxu0 0.0
        %v4355 = vand.u32 %v3231, 4294901760
        %4356 = vmatmul.mubr.f32.gmra.mrb[0].mxu0 %v4355
        %v4357 = vpop.f32.mrb[0].mxu0
        %v4358 = vadd.f32 %v4193, %v4357
        %v4359 = vpop.f32.mrb[0].mxu0
        %4360 = vmatprep.mubr.f32.mxu0 0.0
        %v4361 = vand.u32 %v3234, 4294901760
        %4362 = vmatmul.mubr.f32.gmra.mrb[0].mxu0 %v4361
        %v4363 = vpop.f32.mrb[0].mxu0
        %v4364 = vadd.f32 %v4199, %v4363
        %v4365 = vpop.f32.mrb[0].mxu0
        %4366 = vmatprep.mubr.f32.mxu0 0.0
        %v4367 = vand.u32 %v3237, 4294901760
        %4368 = vmatmul.mubr.f32.gmra.mrb[0].mxu0 %v4367
        %v4369 = vpop.f32.mrb[0].mxu0
        %v4370 = vadd.f32 %v4205, %v4369
        %v4371 = vpop.f32.mrb[0].mxu0
        %4372 = vdwg.mxu0
        %v4373 = vmax.f32 %v4280, 0.0
        %v4374 = vmax.f32 %v4286, 0.0
        %v4375 = vmax.f32 %v4292, 0.0
        %v4376 = vmax.f32 %v4298, 0.0
        %v4377 = vmax.f32 %v4304, 0.0
        %v4378 = vmax.f32 %v4310, 0.0
        %v4379 = vmax.f32 %v4316, 0.0
        %v4380 = vmax.f32 %v4322, 0.0
        %v4381 = vmax.f32 %v4328, 0.0
        %v4382 = vmax.f32 %v4334, 0.0
        %v4383 = vmax.f32 %v4340, 0.0
        %v4384 = vmax.f32 %v4346, 0.0
        %v4385 = vmax.f32 %v4352, 0.0
        %v4386 = vmax.f32 %v4358, 0.0
        %v4387 = vmax.f32 %v4364, 0.0
        %v4388 = vmax.f32 %v4370, 0.0
        %v4389 = vld [vmem:[%s7] sm:$0x3]
        %v4390 = vld [vmem:[%s8] sm:$0x3]
        %4392 = vset.pattern.permute.xlu0 0
        %4393 = vperm.xlu0 %4392, %v4390
        %v4394 = vpop.permute.xlu0 %4393
        %vm4396 = vcmask 80896
        %v4398 = vsel %vm4396, %v4389, 0
        %v4401 = vsel %vm4396, %v4373, 0
        %v4404 = vsel %vm4396, %v4374, 0
        %v4407 = vsel %vm4396, %v4375, 0
        %v4410 = vsel %vm4396, %v4376, 0
        %v4413 = vsel %vm4396, %v4377, 0
        %v4416 = vsel %vm4396, %v4378, 0
        %v4419 = vsel %vm4396, %v4379, 0
        %v4422 = vsel %vm4396, %v4380, 0
        %v4425 = vsel %vm4396, %v4381, 0
        %v4428 = vsel %vm4396, %v4382, 0
        %v4431 = vsel %vm4396, %v4383, 0
        %v4434 = vsel %vm4396, %v4384, 0
        %v4437 = vsel %vm4396, %v4385, 0
        %v4440 = vsel %vm4396, %v4386, 0
        %v4443 = vsel %vm4396, %v4387, 0
        %v4446 = vsel %vm4396, %v4388, 0
        %4448 = vmatprep.subr.mxu0 0.0
        %v4449 = vand.u32 %v4401, 4294901760
        %4450 = vmatpush1.xpose.msra.mxu0 %v4449
        %4451 = vmatprep.subr.mxu0 0.0
        %v4452 = vand.u32 %v4404, 4294901760
        %4453 = vmatpush1.xpose.msra.mxu0 %v4452
        %4454 = vmatprep.subr.mxu0 0.0
        %v4455 = vand.u32 %v4407, 4294901760
        %4456 = vmatpush1.xpose.msra.mxu0 %v4455
        %4457 = vmatprep.subr.mxu0 0.0
        %v4458 = vand.u32 %v4410, 4294901760
        %4459 = vmatpush1.xpose.msra.mxu0 %v4458
        %4460 = vmatprep.subr.mxu0 0.0
        %v4461 = vand.u32 %v4413, 4294901760
        %4462 = vmatpush1.xpose.msra.mxu0 %v4461
        %4463 = vmatprep.subr.mxu0 0.0
        %v4464 = vand.u32 %v4416, 4294901760
        %4465 = vmatpush1.xpose.msra.mxu0 %v4464
        %4466 = vmatprep.subr.mxu0 0.0
        %v4467 = vand.u32 %v4419, 4294901760
        %4468 = vmatpush1.xpose.msra.mxu0 %v4467
        %4469 = vmatprep.subr.mxu0 0.0
        %v4470 = vand.u32 %v4422, 4294901760
        %4471 = vmatpush1.xpose.msra.mxu0 %v4470
        %4472 = vmatprep.subr.mxu0 0.0
        %v4473 = vand.u32 %v4425, 4294901760
        %4474 = vmatpush1.xpose.msra.mxu0 %v4473
        %4475 = vmatprep.subr.mxu0 0.0
        %v4476 = vand.u32 %v4428, 4294901760
        %4477 = vmatpush1.xpose.msra.mxu0 %v4476
        %4478 = vmatprep.subr.mxu0 0.0
        %v4479 = vand.u32 %v4431, 4294901760
        %4480 = vmatpush1.xpose.msra.mxu0 %v4479
        %4481 = vmatprep.subr.mxu0 0.0
        %v4482 = vand.u32 %v4434, 4294901760
        %4483 = vmatpush1.xpose.msra.mxu0 %v4482
        %4484 = vmatprep.subr.mxu0 0.0
        %v4485 = vand.u32 %v4437, 4294901760
        %4486 = vmatpush1.xpose.msra.mxu0 %v4485
        %4487 = vmatprep.subr.mxu0 0.0
        %v4488 = vand.u32 %v4440, 4294901760
        %4489 = vmatpush1.xpose.msra.mxu0 %v4488
        %4490 = vmatprep.subr.mxu0 0.0
        %v4491 = vand.u32 %v4443, 4294901760
        %4492 = vmatpush1.xpose.msra.mxu0 %v4491
        %4493 = vmatprep.subr.mxu0 0.0
        %v4494 = vand.u32 %v4446, 4294901760
        %4495 = vmatpush1.xpose.msra.mxu0 %v4494
        %4496 = vmatprep.subr.mxu0 0.0
        %4497 = vmatpush1.xpose.msra.mxu0 0.0
        %4498 = vmatprep.subr.mxu0 0.0
        %4499 = vmatpush1.xpose.msra.mxu0 0.0
        %4500 = vmatprep.subr.mxu0 0.0
        %4501 = vmatpush1.xpose.msra.mxu0 0.0
        %4502 = vmatprep.subr.mxu0 0.0
        %4503 = vmatpush1.xpose.msra.mxu0 0.0
        %4504 = vmatprep.subr.mxu0 0.0
        %4505 = vmatpush1.xpose.msra.mxu0 0.0
        %4506 = vmatprep.subr.mxu0 0.0
        %4507 = vmatpush1.xpose.msra.mxu0 0.0
        %4508 = vmatprep.subr.mxu0 0.0
        %4509 = vmatpush1.xpose.msra.mxu0 0.0
        %4510 = vmatprep.subr.mxu0 0.0
        %4511 = vmatpush1.xpose.msra.mxu0 0.0
        %4512 = vmatprep.subr.mxu0 0.0
        %4513 = vmatpush1.xpose.msra.mxu0 0.0
        %4514 = vmatprep.subr.mxu0 0.0
        %4515 = vmatpush1.xpose.msra.mxu0 0.0
        %4516 = vmatprep.subr.mxu0 0.0
        %4517 = vmatpush1.xpose.msra.mxu0 0.0
        %4518 = vmatprep.subr.mxu0 0.0
        %4519 = vmatpush1.xpose.msra.mxu0 0.0
        %4520 = vmatprep.subr.mxu0 0.0
        %4521 = vmatpush1.xpose.msra.mxu0 0.0
        %4522 = vmatprep.subr.mxu0 0.0
        %4523 = vmatpush1.xpose.msra.mxu0 0.0
        %4524 = vmatprep.subr.mxu0 0.0
        %4525 = vmatpush1.xpose.msra.mxu0 0.0
        %4526 = vmatprep.subr.mxu0 0.0
        %4527 = vmatpush1.xpose.msra.mxu0 0.0
        %4528 = vmatprep.mubr.f32.mxu0 0.0
        %v4529 = vand.u32 %v4398, 4294901760
        %v4530 = vsub.f32 %v4398, %v4529
        %v4531 = vand.u32 %v4530, 4294901760
        %v4532 = vsub.f32 %v4530, %v4531
        %v4533 = vand.u32 %v4532, 4294901760
        %4534 = vmatmul.mubr.f32.gmra.mrb[0].mxu0 %v4533
        %v4535 = vpop.f32.mrb[0].mxu0
        %v4536 = vadd.f32 %v4394, %v4535
        %v4537 = vpop.f32.mrb[0].mxu0
        %4538 = vdwg.mxu0
        %4539 = vmatprep.subr.mxu0 0.0
        %v4540 = vand.u32 %v4401, 4294901760
        %v4541 = vsub.f32 %v4401, %v4540
        %v4542 = vand.u32 %v4541, 4294901760
        %v4543 = vsub.f32 %v4541, %v4542
        %v4544 = vand.u32 %v4543, 4294901760
        %4545 = vmatpush1.xpose.msra.mxu0 %v4544
        %4546 = vmatprep.subr.mxu0 0.0
        %v4547 = vand.u32 %v4404, 4294901760
        %v4548 = vsub.f32 %v4404, %v4547
        %v4549 = vand.u32 %v4548, 4294901760
        %v4550 = vsub.f32 %v4548, %v4549
        %v4551 = vand.u32 %v4550, 4294901760
        %4552 = vmatpush1.xpose.msra.mxu0 %v4551
        %4553 = vmatprep.subr.mxu0 0.0
        %v4554 = vand.u32 %v4407, 4294901760
        %v4555 = vsub.f32 %v4407, %v4554
        %v4556 = vand.u32 %v4555, 4294901760
        %v4557 = vsub.f32 %v4555, %v4556
        %v4558 = vand.u32 %v4557, 4294901760
        %4559 = vmatpush1.xpose.msra.mxu0 %v4558
        %4560 = vmatprep.subr.mxu0 0.0
        %v4561 = vand.u32 %v4410, 4294901760
        %v4562 = vsub.f32 %v4410, %v4561
        %v4563 = vand.u32 %v4562, 4294901760
        %v4564 = vsub.f32 %v4562, %v4563
        %v4565 = vand.u32 %v4564, 4294901760
        %4566 = vmatpush1.xpose.msra.mxu0 %v4565
        %4567 = vmatprep.subr.mxu0 0.0
        %v4568 = vand.u32 %v4413, 4294901760
        %v4569 = vsub.f32 %v4413, %v4568
        %v4570 = vand.u32 %v4569, 4294901760
        %v4571 = vsub.f32 %v4569, %v4570
        %v4572 = vand.u32 %v4571, 4294901760
        %4573 = vmatpush1.xpose.msra.mxu0 %v4572
        %4574 = vmatprep.subr.mxu0 0.0
        %v4575 = vand.u32 %v4416, 4294901760
        %v4576 = vsub.f32 %v4416, %v4575
        %v4577 = vand.u32 %v4576, 4294901760
        %v4578 = vsub.f32 %v4576, %v4577
        %v4579 = vand.u32 %v4578, 4294901760
        %4580 = vmatpush1.xpose.msra.mxu0 %v4579
        %4581 = vmatprep.subr.mxu0 0.0
        %v4582 = vand.u32 %v4419, 4294901760
        %v4583 = vsub.f32 %v4419, %v4582
        %v4584 = vand.u32 %v4583, 4294901760
        %v4585 = vsub.f32 %v4583, %v4584
        %v4586 = vand.u32 %v4585, 4294901760
        %4587 = vmatpush1.xpose.msra.mxu0 %v4586
        %4588 = vmatprep.subr.mxu0 0.0
        %v4589 = vand.u32 %v4422, 4294901760
        %v4590 = vsub.f32 %v4422, %v4589
        %v4591 = vand.u32 %v4590, 4294901760
        %v4592 = vsub.f32 %v4590, %v4591
        %v4593 = vand.u32 %v4592, 4294901760
        %4594 = vmatpush1.xpose.msra.mxu0 %v4593
        %4595 = vmatprep.subr.mxu0 0.0
        %v4596 = vand.u32 %v4425, 4294901760
        %v4597 = vsub.f32 %v4425, %v4596
        %v4598 = vand.u32 %v4597, 4294901760
        %v4599 = vsub.f32 %v4597, %v4598
        %v4600 = vand.u32 %v4599, 4294901760
        %4601 = vmatpush1.xpose.msra.mxu0 %v4600
        %4602 = vmatprep.subr.mxu0 0.0
        %v4603 = vand.u32 %v4428, 4294901760
        %v4604 = vsub.f32 %v4428, %v4603
        %v4605 = vand.u32 %v4604, 4294901760
        %v4606 = vsub.f32 %v4604, %v4605
        %v4607 = vand.u32 %v4606, 4294901760
        %4608 = vmatpush1.xpose.msra.mxu0 %v4607
        %4609 = vmatprep.subr.mxu0 0.0
        %v4610 = vand.u32 %v4431, 4294901760
        %v4611 = vsub.f32 %v4431, %v4610
        %v4612 = vand.u32 %v4611, 4294901760
        %v4613 = vsub.f32 %v4611, %v4612
        %v4614 = vand.u32 %v4613, 4294901760
        %4615 = vmatpush1.xpose.msra.mxu0 %v4614
        %4616 = vmatprep.subr.mxu0 0.0
        %v4617 = vand.u32 %v4434, 4294901760
        %v4618 = vsub.f32 %v4434, %v4617
        %v4619 = vand.u32 %v4618, 4294901760
        %v4620 = vsub.f32 %v4618, %v4619
        %v4621 = vand.u32 %v4620, 4294901760
        %4622 = vmatpush1.xpose.msra.mxu0 %v4621
        %4623 = vmatprep.subr.mxu0 0.0
        %v4624 = vand.u32 %v4437, 4294901760
        %v4625 = vsub.f32 %v4437, %v4624
        %v4626 = vand.u32 %v4625, 4294901760
        %v4627 = vsub.f32 %v4625, %v4626
        %v4628 = vand.u32 %v4627, 4294901760
        %4629 = vmatpush1.xpose.msra.mxu0 %v4628
        %4630 = vmatprep.subr.mxu0 0.0
        %v4631 = vand.u32 %v4440, 4294901760
        %v4632 = vsub.f32 %v4440, %v4631
        %v4633 = vand.u32 %v4632, 4294901760
        %v4634 = vsub.f32 %v4632, %v4633
        %v4635 = vand.u32 %v4634, 4294901760
        %4636 = vmatpush1.xpose.msra.mxu0 %v4635
        %4637 = vmatprep.subr.mxu0 0.0
        %v4638 = vand.u32 %v4443, 4294901760
        %v4639 = vsub.f32 %v4443, %v4638
        %v4640 = vand.u32 %v4639, 4294901760
        %v4641 = vsub.f32 %v4639, %v4640
        %v4642 = vand.u32 %v4641, 4294901760
        %4643 = vmatpush1.xpose.msra.mxu0 %v4642
        %4644 = vmatprep.subr.mxu0 0.0
        %v4645 = vand.u32 %v4446, 4294901760
        %v4646 = vsub.f32 %v4446, %v4645
        %v4647 = vand.u32 %v4646, 4294901760
        %v4648 = vsub.f32 %v4646, %v4647
        %v4649 = vand.u32 %v4648, 4294901760
        %4650 = vmatpush1.xpose.msra.mxu0 %v4649
        %4651 = vmatprep.subr.mxu0 0.0
        %4652 = vmatpush1.xpose.msra.mxu0 0.0
        %4653 = vmatprep.subr.mxu0 0.0
        %4654 = vmatpush1.xpose.msra.mxu0 0.0
        %4655 = vmatprep.subr.mxu0 0.0
        %4656 = vmatpush1.xpose.msra.mxu0 0.0
        %4657 = vmatprep.subr.mxu0 0.0
        %4658 = vmatpush1.xpose.msra.mxu0 0.0
        %4659 = vmatprep.subr.mxu0 0.0
        %4660 = vmatpush1.xpose.msra.mxu0 0.0
        %4661 = vmatprep.subr.mxu0 0.0
        %4662 = vmatpush1.xpose.msra.mxu0 0.0
        %4663 = vmatprep.subr.mxu0 0.0
        %4664 = vmatpush1.xpose.msra.mxu0 0.0
        %4665 = vmatprep.subr.mxu0 0.0
        %4666 = vmatpush1.xpose.msra.mxu0 0.0
        %4667 = vmatprep.subr.mxu0 0.0
        %4668 = vmatpush1.xpose.msra.mxu0 0.0
        %4669 = vmatprep.subr.mxu0 0.0
        %4670 = vmatpush1.xpose.msra.mxu0 0.0
        %4671 = vmatprep.subr.mxu0 0.0
        %4672 = vmatpush1.xpose.msra.mxu0 0.0
        %4673 = vmatprep.subr.mxu0 0.0
        %4674 = vmatpush1.xpose.msra.mxu0 0.0
        %4675 = vmatprep.subr.mxu0 0.0
        %4676 = vmatpush1.xpose.msra.mxu0 0.0
        %4677 = vmatprep.subr.mxu0 0.0
        %4678 = vmatpush1.xpose.msra.mxu0 0.0
        %4679 = vmatprep.subr.mxu0 0.0
        %4680 = vmatpush1.xpose.msra.mxu0 0.0
        %4681 = vmatprep.subr.mxu0 0.0
        %4682 = vmatpush1.xpose.msra.mxu0 0.0
        %4683 = vmatprep.mubr.f32.mxu0 0.0
        %v4684 = vand.u32 %v4398, 4294901760
        %4685 = vmatmul.mubr.f32.gmra.mrb[0].mxu0 %v4684
        %v4686 = vpop.f32.mrb[0].mxu0
        %v4687 = vadd.f32 %v4536, %v4686
        %v4688 = vpop.f32.mrb[0].mxu0
        %4689 = vdwg.mxu0
        %4690 = vmatprep.subr.mxu0 0.0
        %v4691 = vand.u32 %v4401, 4294901760
        %v4692 = vsub.f32 %v4401, %v4691
        %4693 = vmatpush1.xpose.msra.mxu0 %v4692
        %4694 = vmatprep.subr.mxu0 0.0
        %v4695 = vand.u32 %v4404, 4294901760
        %v4696 = vsub.f32 %v4404, %v4695
        %4697 = vmatpush1.xpose.msra.mxu0 %v4696
        %4698 = vmatprep.subr.mxu0 0.0
        %v4699 = vand.u32 %v4407, 4294901760
        %v4700 = vsub.f32 %v4407, %v4699
        %4701 = vmatpush1.xpose.msra.mxu0 %v4700
        %4702 = vmatprep.subr.mxu0 0.0
        %v4703 = vand.u32 %v4410, 4294901760
        %v4704 = vsub.f32 %v4410, %v4703
        %4705 = vmatpush1.xpose.msra.mxu0 %v4704
        %4706 = vmatprep.subr.mxu0 0.0
        %v4707 = vand.u32 %v4413, 4294901760
        %v4708 = vsub.f32 %v4413, %v4707
        %4709 = vmatpush1.xpose.msra.mxu0 %v4708
        %4710 = vmatprep.subr.mxu0 0.0
        %v4711 = vand.u32 %v4416, 4294901760
        %v4712 = vsub.f32 %v4416, %v4711
        %4713 = vmatpush1.xpose.msra.mxu0 %v4712
        %4714 = vmatprep.subr.mxu0 0.0
        %v4715 = vand.u32 %v4419, 4294901760
        %v4716 = vsub.f32 %v4419, %v4715
        %4717 = vmatpush1.xpose.msra.mxu0 %v4716
        %4718 = vmatprep.subr.mxu0 0.0
        %v4719 = vand.u32 %v4422, 4294901760
        %v4720 = vsub.f32 %v4422, %v4719
        %4721 = vmatpush1.xpose.msra.mxu0 %v4720
        %4722 = vmatprep.subr.mxu0 0.0
        %v4723 = vand.u32 %v4425, 4294901760
        %v4724 = vsub.f32 %v4425, %v4723
        %4725 = vmatpush1.xpose.msra.mxu0 %v4724
        %4726 = vmatprep.subr.mxu0 0.0
        %v4727 = vand.u32 %v4428, 4294901760
        %v4728 = vsub.f32 %v4428, %v4727
        %4729 = vmatpush1.xpose.msra.mxu0 %v4728
        %4730 = vmatprep.subr.mxu0 0.0
        %v4731 = vand.u32 %v4431, 4294901760
        %v4732 = vsub.f32 %v4431, %v4731
        %4733 = vmatpush1.xpose.msra.mxu0 %v4732
        %4734 = vmatprep.subr.mxu0 0.0
        %v4735 = vand.u32 %v4434, 4294901760
        %v4736 = vsub.f32 %v4434, %v4735
        %4737 = vmatpush1.xpose.msra.mxu0 %v4736
        %4738 = vmatprep.subr.mxu0 0.0
        %v4739 = vand.u32 %v4437, 4294901760
        %v4740 = vsub.f32 %v4437, %v4739
        %4741 = vmatpush1.xpose.msra.mxu0 %v4740
        %4742 = vmatprep.subr.mxu0 0.0
        %v4743 = vand.u32 %v4440, 4294901760
        %v4744 = vsub.f32 %v4440, %v4743
        %4745 = vmatpush1.xpose.msra.mxu0 %v4744
        %4746 = vmatprep.subr.mxu0 0.0
        %v4747 = vand.u32 %v4443, 4294901760
        %v4748 = vsub.f32 %v4443, %v4747
        %4749 = vmatpush1.xpose.msra.mxu0 %v4748
        %4750 = vmatprep.subr.mxu0 0.0
        %v4751 = vand.u32 %v4446, 4294901760
        %v4752 = vsub.f32 %v4446, %v4751
        %4753 = vmatpush1.xpose.msra.mxu0 %v4752
        %4754 = vmatprep.subr.mxu0 0.0
        %4755 = vmatpush1.xpose.msra.mxu0 0.0
        %4756 = vmatprep.subr.mxu0 0.0
        %4757 = vmatpush1.xpose.msra.mxu0 0.0
        %4758 = vmatprep.subr.mxu0 0.0
        %4759 = vmatpush1.xpose.msra.mxu0 0.0
        %4760 = vmatprep.subr.mxu0 0.0
        %4761 = vmatpush1.xpose.msra.mxu0 0.0
        %4762 = vmatprep.subr.mxu0 0.0
        %4763 = vmatpush1.xpose.msra.mxu0 0.0
        %4764 = vmatprep.subr.mxu0 0.0
        %4765 = vmatpush1.xpose.msra.mxu0 0.0
        %4766 = vmatprep.subr.mxu0 0.0
        %4767 = vmatpush1.xpose.msra.mxu0 0.0
        %4768 = vmatprep.subr.mxu0 0.0
        %4769 = vmatpush1.xpose.msra.mxu0 0.0
        %4770 = vmatprep.subr.mxu0 0.0
        %4771 = vmatpush1.xpose.msra.mxu0 0.0
        %4772 = vmatprep.subr.mxu0 0.0
        %4773 = vmatpush1.xpose.msra.mxu0 0.0
        %4774 = vmatprep.subr.mxu0 0.0
        %4775 = vmatpush1.xpose.msra.mxu0 0.0
        %4776 = vmatprep.subr.mxu0 0.0
        %4777 = vmatpush1.xpose.msra.mxu0 0.0
        %4778 = vmatprep.subr.mxu0 0.0
        %4779 = vmatpush1.xpose.msra.mxu0 0.0
        %4780 = vmatprep.subr.mxu0 0.0
        %4781 = vmatpush1.xpose.msra.mxu0 0.0
        %4782 = vmatprep.subr.mxu0 0.0
        %4783 = vmatpush1.xpose.msra.mxu0 0.0
        %4784 = vmatprep.subr.mxu0 0.0
        %4785 = vmatpush1.xpose.msra.mxu0 0.0
        %4786 = vmatprep.mubr.f32.mxu0 0.0
        %v4787 = vand.u32 %v4398, 4294901760
        %v4788 = vsub.f32 %v4398, %v4787
        %4789 = vmatmul.mubr.f32.gmra.mrb[0].mxu0 %v4788
        %v4790 = vpop.f32.mrb[0].mxu0
        %v4791 = vadd.f32 %v4687, %v4790
        %v4792 = vpop.f32.mrb[0].mxu0
        %4793 = vdwg.mxu0
        %4794 = vmatprep.subr.mxu0 0.0
        %v4795 = vand.u32 %v4401, 4294901760
        %4796 = vmatpush1.xpose.msra.mxu0 %v4795
        %4797 = vmatprep.subr.mxu0 0.0
        %v4798 = vand.u32 %v4404, 4294901760
        %4799 = vmatpush1.xpose.msra.mxu0 %v4798
        %4800 = vmatprep.subr.mxu0 0.0
        %v4801 = vand.u32 %v4407, 4294901760
        %4802 = vmatpush1.xpose.msra.mxu0 %v4801
        %4803 = vmatprep.subr.mxu0 0.0
        %v4804 = vand.u32 %v4410, 4294901760
        %4805 = vmatpush1.xpose.msra.mxu0 %v4804
        %4806 = vmatprep.subr.mxu0 0.0
        %v4807 = vand.u32 %v4413, 4294901760
        %4808 = vmatpush1.xpose.msra.mxu0 %v4807
        %4809 = vmatprep.subr.mxu0 0.0
        %v4810 = vand.u32 %v4416, 4294901760
        %4811 = vmatpush1.xpose.msra.mxu0 %v4810
        %4812 = vmatprep.subr.mxu0 0.0
        %v4813 = vand.u32 %v4419, 4294901760
        %4814 = vmatpush1.xpose.msra.mxu0 %v4813
        %4815 = vmatprep.subr.mxu0 0.0
        %v4816 = vand.u32 %v4422, 4294901760
        %4817 = vmatpush1.xpose.msra.mxu0 %v4816
        %4818 = vmatprep.subr.mxu0 0.0
        %v4819 = vand.u32 %v4425, 4294901760
        %4820 = vmatpush1.xpose.msra.mxu0 %v4819
        %4821 = vmatprep.subr.mxu0 0.0
        %v4822 = vand.u32 %v4428, 4294901760
        %4823 = vmatpush1.xpose.msra.mxu0 %v4822
        %4824 = vmatprep.subr.mxu0 0.0
        %v4825 = vand.u32 %v4431, 4294901760
        %4826 = vmatpush1.xpose.msra.mxu0 %v4825
        %4827 = vmatprep.subr.mxu0 0.0
        %v4828 = vand.u32 %v4434, 4294901760
        %4829 = vmatpush1.xpose.msra.mxu0 %v4828
        %4830 = vmatprep.subr.mxu0 0.0
        %v4831 = vand.u32 %v4437, 4294901760
        %4832 = vmatpush1.xpose.msra.mxu0 %v4831
        %4833 = vmatprep.subr.mxu0 0.0
        %v4834 = vand.u32 %v4440, 4294901760
        %4835 = vmatpush1.xpose.msra.mxu0 %v4834
        %4836 = vmatprep.subr.mxu0 0.0
        %v4837 = vand.u32 %v4443, 4294901760
        %4838 = vmatpush1.xpose.msra.mxu0 %v4837
        %4839 = vmatprep.subr.mxu0 0.0
        %v4840 = vand.u32 %v4446, 4294901760
        %4841 = vmatpush1.xpose.msra.mxu0 %v4840
        %4842 = vmatprep.subr.mxu0 0.0
        %4843 = vmatpush1.xpose.msra.mxu0 0.0
        %4844 = vmatprep.subr.mxu0 0.0
        %4845 = vmatpush1.xpose.msra.mxu0 0.0
        %4846 = vmatprep.subr.mxu0 0.0
        %4847 = vmatpush1.xpose.msra.mxu0 0.0
        %4848 = vmatprep.subr.mxu0 0.0
        %4849 = vmatpush1.xpose.msra.mxu0 0.0
        %4850 = vmatprep.subr.mxu0 0.0
        %4851 = vmatpush1.xpose.msra.mxu0 0.0
        %4852 = vmatprep.subr.mxu0 0.0
        %4853 = vmatpush1.xpose.msra.mxu0 0.0
        %4854 = vmatprep.subr.mxu0 0.0
        %4855 = vmatpush1.xpose.msra.mxu0 0.0
        %4856 = vmatprep.subr.mxu0 0.0
        %4857 = vmatpush1.xpose.msra.mxu0 0.0
        %4858 = vmatprep.subr.mxu0 0.0
        %4859 = vmatpush1.xpose.msra.mxu0 0.0
        %4860 = vmatprep.subr.mxu0 0.0
        %4861 = vmatpush1.xpose.msra.mxu0 0.0
        %4862 = vmatprep.subr.mxu0 0.0
        %4863 = vmatpush1.xpose.msra.mxu0 0.0
        %4864 = vmatprep.subr.mxu0 0.0
        %4865 = vmatpush1.xpose.msra.mxu0 0.0
        %4866 = vmatprep.subr.mxu0 0.0
        %4867 = vmatpush1.xpose.msra.mxu0 0.0
        %4868 = vmatprep.subr.mxu0 0.0
        %4869 = vmatpush1.xpose.msra.mxu0 0.0
        %4870 = vmatprep.subr.mxu0 0.0
        %4871 = vmatpush1.xpose.msra.mxu0 0.0
        %4872 = vmatprep.subr.mxu0 0.0
        %4873 = vmatpush1.xpose.msra.mxu0 0.0
        %4874 = vmatprep.mubr.f32.mxu0 0.0
        %v4875 = vand.u32 %v4398, 4294901760
        %v4876 = vsub.f32 %v4398, %v4875
        %v4877 = vand.u32 %v4876, 4294901760
        %4878 = vmatmul.mubr.f32.gmra.mrb[0].mxu0 %v4877
        %v4879 = vpop.f32.mrb[0].mxu0
        %v4880 = vadd.f32 %v4791, %v4879
        %v4881 = vpop.f32.mrb[0].mxu0
        %4882 = vdwg.mxu0
        %4883 = vmatprep.subr.mxu0 0.0
        %v4884 = vand.u32 %v4401, 4294901760
        %v4885 = vsub.f32 %v4401, %v4884
        %v4886 = vand.u32 %v4885, 4294901760
        %4887 = vmatpush1.xpose.msra.mxu0 %v4886
        %4888 = vmatprep.subr.mxu0 0.0
        %v4889 = vand.u32 %v4404, 4294901760
        %v4890 = vsub.f32 %v4404, %v4889
        %v4891 = vand.u32 %v4890, 4294901760
        %4892 = vmatpush1.xpose.msra.mxu0 %v4891
        %4893 = vmatprep.subr.mxu0 0.0
        %v4894 = vand.u32 %v4407, 4294901760
        %v4895 = vsub.f32 %v4407, %v4894
        %v4896 = vand.u32 %v4895, 4294901760
        %4897 = vmatpush1.xpose.msra.mxu0 %v4896
        %4898 = vmatprep.subr.mxu0 0.0
        %v4899 = vand.u32 %v4410, 4294901760
        %v4900 = vsub.f32 %v4410, %v4899
        %v4901 = vand.u32 %v4900, 4294901760
        %4902 = vmatpush1.xpose.msra.mxu0 %v4901
        %4903 = vmatprep.subr.mxu0 0.0
        %v4904 = vand.u32 %v4413, 4294901760
        %v4905 = vsub.f32 %v4413, %v4904
        %v4906 = vand.u32 %v4905, 4294901760
        %4907 = vmatpush1.xpose.msra.mxu0 %v4906
        %4908 = vmatprep.subr.mxu0 0.0
        %v4909 = vand.u32 %v4416, 4294901760
        %v4910 = vsub.f32 %v4416, %v4909
        %v4911 = vand.u32 %v4910, 4294901760
        %4912 = vmatpush1.xpose.msra.mxu0 %v4911
        %4913 = vmatprep.subr.mxu0 0.0
        %v4914 = vand.u32 %v4419, 4294901760
        %v4915 = vsub.f32 %v4419, %v4914
        %v4916 = vand.u32 %v4915, 4294901760
        %4917 = vmatpush1.xpose.msra.mxu0 %v4916
        %4918 = vmatprep.subr.mxu0 0.0
        %v4919 = vand.u32 %v4422, 4294901760
        %v4920 = vsub.f32 %v4422, %v4919
        %v4921 = vand.u32 %v4920, 4294901760
        %4922 = vmatpush1.xpose.msra.mxu0 %v4921
        %4923 = vmatprep.subr.mxu0 0.0
        %v4924 = vand.u32 %v4425, 4294901760
        %v4925 = vsub.f32 %v4425, %v4924
        %v4926 = vand.u32 %v4925, 4294901760
        %4927 = vmatpush1.xpose.msra.mxu0 %v4926
        %4928 = vmatprep.subr.mxu0 0.0
        %v4929 = vand.u32 %v4428, 4294901760
        %v4930 = vsub.f32 %v4428, %v4929
        %v4931 = vand.u32 %v4930, 4294901760
        %4932 = vmatpush1.xpose.msra.mxu0 %v4931
        %4933 = vmatprep.subr.mxu0 0.0
        %v4934 = vand.u32 %v4431, 4294901760
        %v4935 = vsub.f32 %v4431, %v4934
        %v4936 = vand.u32 %v4935, 4294901760
        %4937 = vmatpush1.xpose.msra.mxu0 %v4936
        %4938 = vmatprep.subr.mxu0 0.0
        %v4939 = vand.u32 %v4434, 4294901760
        %v4940 = vsub.f32 %v4434, %v4939
        %v4941 = vand.u32 %v4940, 4294901760
        %4942 = vmatpush1.xpose.msra.mxu0 %v4941
        %4943 = vmatprep.subr.mxu0 0.0
        %v4944 = vand.u32 %v4437, 4294901760
        %v4945 = vsub.f32 %v4437, %v4944
        %v4946 = vand.u32 %v4945, 4294901760
        %4947 = vmatpush1.xpose.msra.mxu0 %v4946
        %4948 = vmatprep.subr.mxu0 0.0
        %v4949 = vand.u32 %v4440, 4294901760
        %v4950 = vsub.f32 %v4440, %v4949
        %v4951 = vand.u32 %v4950, 4294901760
        %4952 = vmatpush1.xpose.msra.mxu0 %v4951
        %4953 = vmatprep.subr.mxu0 0.0
        %v4954 = vand.u32 %v4443, 4294901760
        %v4955 = vsub.f32 %v4443, %v4954
        %v4956 = vand.u32 %v4955, 4294901760
        %4957 = vmatpush1.xpose.msra.mxu0 %v4956
        %4958 = vmatprep.subr.mxu0 0.0
        %v4959 = vand.u32 %v4446, 4294901760
        %v4960 = vsub.f32 %v4446, %v4959
        %v4961 = vand.u32 %v4960, 4294901760
        %4962 = vmatpush1.xpose.msra.mxu0 %v4961
        %4963 = vmatprep.subr.mxu0 0.0
        %4964 = vmatpush1.xpose.msra.mxu0 0.0
        %4965 = vmatprep.subr.mxu0 0.0
        %4966 = vmatpush1.xpose.msra.mxu0 0.0
        %4967 = vmatprep.subr.mxu0 0.0
        %4968 = vmatpush1.xpose.msra.mxu0 0.0
        %4969 = vmatprep.subr.mxu0 0.0
        %4970 = vmatpush1.xpose.msra.mxu0 0.0
        %4971 = vmatprep.subr.mxu0 0.0
        %4972 = vmatpush1.xpose.msra.mxu0 0.0
        %4973 = vmatprep.subr.mxu0 0.0
        %4974 = vmatpush1.xpose.msra.mxu0 0.0
        %4975 = vmatprep.subr.mxu0 0.0
        %4976 = vmatpush1.xpose.msra.mxu0 0.0
        %4977 = vmatprep.subr.mxu0 0.0
        %4978 = vmatpush1.xpose.msra.mxu0 0.0
        %4979 = vmatprep.subr.mxu0 0.0
        %4980 = vmatpush1.xpose.msra.mxu0 0.0
        %4981 = vmatprep.subr.mxu0 0.0
        %4982 = vmatpush1.xpose.msra.mxu0 0.0
        %4983 = vmatprep.subr.mxu0 0.0
        %4984 = vmatpush1.xpose.msra.mxu0 0.0
        %4985 = vmatprep.subr.mxu0 0.0
        %4986 = vmatpush1.xpose.msra.mxu0 0.0
        %4987 = vmatprep.subr.mxu0 0.0
        %4988 = vmatpush1.xpose.msra.mxu0 0.0
        %4989 = vmatprep.subr.mxu0 0.0
        %4990 = vmatpush1.xpose.msra.mxu0 0.0
        %4991 = vmatprep.subr.mxu0 0.0
        %4992 = vmatpush1.xpose.msra.mxu0 0.0
        %4993 = vmatprep.subr.mxu0 0.0
        %4994 = vmatpush1.xpose.msra.mxu0 0.0
        %4995 = vmatprep.mubr.f32.mxu0 0.0
        %v4996 = vand.u32 %v4398, 4294901760
        %4997 = vmatmul.mubr.f32.gmra.mrb[0].mxu0 %v4996
        %v4998 = vpop.f32.mrb[0].mxu0
        %v4999 = vadd.f32 %v4880, %v4998
        %v5000 = vpop.f32.mrb[0].mxu0
        %5001 = vdwg.mxu0
        %5002 = vmatprep.subr.mxu0 0.0
        %v5003 = vand.u32 %v4401, 4294901760
        %5004 = vmatpush1.xpose.msra.mxu0 %v5003
        %5005 = vmatprep.subr.mxu0 0.0
        %v5006 = vand.u32 %v4404, 4294901760
        %5007 = vmatpush1.xpose.msra.mxu0 %v5006
        %5008 = vmatprep.subr.mxu0 0.0
        %v5009 = vand.u32 %v4407, 4294901760
        %5010 = vmatpush1.xpose.msra.mxu0 %v5009
        %5011 = vmatprep.subr.mxu0 0.0
        %v5012 = vand.u32 %v4410, 4294901760
        %5013 = vmatpush1.xpose.msra.mxu0 %v5012
        %5014 = vmatprep.subr.mxu0 0.0
        %v5015 = vand.u32 %v4413, 4294901760
        %5016 = vmatpush1.xpose.msra.mxu0 %v5015
        %5017 = vmatprep.subr.mxu0 0.0
        %v5018 = vand.u32 %v4416, 4294901760
        %5019 = vmatpush1.xpose.msra.mxu0 %v5018
        %5020 = vmatprep.subr.mxu0 0.0
        %v5021 = vand.u32 %v4419, 4294901760
        %5022 = vmatpush1.xpose.msra.mxu0 %v5021
        %5023 = vmatprep.subr.mxu0 0.0
        %v5024 = vand.u32 %v4422, 4294901760
        %5025 = vmatpush1.xpose.msra.mxu0 %v5024
        %5026 = vmatprep.subr.mxu0 0.0
        %v5027 = vand.u32 %v4425, 4294901760
        %5028 = vmatpush1.xpose.msra.mxu0 %v5027
        %5029 = vmatprep.subr.mxu0 0.0
        %v5030 = vand.u32 %v4428, 4294901760
        %5031 = vmatpush1.xpose.msra.mxu0 %v5030
        %5032 = vmatprep.subr.mxu0 0.0
        %v5033 = vand.u32 %v4431, 4294901760
        %5034 = vmatpush1.xpose.msra.mxu0 %v5033
        %5035 = vmatprep.subr.mxu0 0.0
        %v5036 = vand.u32 %v4434, 4294901760
        %5037 = vmatpush1.xpose.msra.mxu0 %v5036
        %5038 = vmatprep.subr.mxu0 0.0
        %v5039 = vand.u32 %v4437, 4294901760
        %5040 = vmatpush1.xpose.msra.mxu0 %v5039
        %5041 = vmatprep.subr.mxu0 0.0
        %v5042 = vand.u32 %v4440, 4294901760
        %5043 = vmatpush1.xpose.msra.mxu0 %v5042
        %5044 = vmatprep.subr.mxu0 0.0
        %v5045 = vand.u32 %v4443, 4294901760
        %5046 = vmatpush1.xpose.msra.mxu0 %v5045
        %5047 = vmatprep.subr.mxu0 0.0
        %v5048 = vand.u32 %v4446, 4294901760
        %5049 = vmatpush1.xpose.msra.mxu0 %v5048
        %5050 = vmatprep.subr.mxu0 0.0
        %5051 = vmatpush1.xpose.msra.mxu0 0.0
        %5052 = vmatprep.subr.mxu0 0.0
        %5053 = vmatpush1.xpose.msra.mxu0 0.0
        %5054 = vmatprep.subr.mxu0 0.0
        %5055 = vmatpush1.xpose.msra.mxu0 0.0
        %5056 = vmatprep.subr.mxu0 0.0
        %5057 = vmatpush1.xpose.msra.mxu0 0.0
        %5058 = vmatprep.subr.mxu0 0.0
        %5059 = vmatpush1.xpose.msra.mxu0 0.0
        %5060 = vmatprep.subr.mxu0 0.0
        %5061 = vmatpush1.xpose.msra.mxu0 0.0
        %5062 = vmatprep.subr.mxu0 0.0
        %5063 = vmatpush1.xpose.msra.mxu0 0.0
        %5064 = vmatprep.subr.mxu0 0.0
        %5065 = vmatpush1.xpose.msra.mxu0 0.0
        %5066 = vmatprep.subr.mxu0 0.0
        %5067 = vmatpush1.xpose.msra.mxu0 0.0
        %5068 = vmatprep.subr.mxu0 0.0
        %5069 = vmatpush1.xpose.msra.mxu0 0.0
        %5070 = vmatprep.subr.mxu0 0.0
        %5071 = vmatpush1.xpose.msra.mxu0 0.0
        %5072 = vmatprep.subr.mxu0 0.0
        %5073 = vmatpush1.xpose.msra.mxu0 0.0
        %5074 = vmatprep.subr.mxu0 0.0
        %5075 = vmatpush1.xpose.msra.mxu0 0.0
        %5076 = vmatprep.subr.mxu0 0.0
        %5077 = vmatpush1.xpose.msra.mxu0 0.0
        %5078 = vmatprep.subr.mxu0 0.0
        %5079 = vmatpush1.xpose.msra.mxu0 0.0
        %5080 = vmatprep.subr.mxu0 0.0
        %5081 = vmatpush1.xpose.msra.mxu0 0.0
        %5082 = vmatprep.mubr.f32.mxu0 0.0
        %v5083 = vand.u32 %v4398, 4294901760
        %5084 = vmatmul.mubr.f32.gmra.mrb[0].mxu0 %v5083
        %v5085 = vpop.f32.mrb[0].mxu0
        %v5086 = vadd.f32 %v4999, %v5085
        %v5087 = vpop.f32.mrb[0].mxu0
        %5088 = vdwg.mxu0
        %v5089 = vxor.u32 %v5086, 2147483648
        %v5090 = vmul.f32 %v5089, 1.442695
        %v5091 = vpow.pop %v5090
        %v5092 = vadd.f32 %v5091, 1.0
        %v5093 = vrcp.pop %v5092
        %v5094 = vmul.f32 1.0, %v5093
        %5095 = vst [vmem:[%s343] sm:$0x3] %v5094
        %s5096 = sand.u32 %s225, 1
        %s5097 = scalar_lea.sflag [#allocation3], %s5096
        %s5098 = sand.u32 %s225, 1
        %s5099 = smul.addr %s5098, 2
        %s5100 = scalar_lea.vmem [#allocation2], %s5099
        // Predicated region
        $region57: #{tpu_custom_call.1} parent=55 // pred_check
          %p5101 = pneg %p235
        $region58: #{tpu_custom_call.1} parent=55 // pred_check_branch
          %5103 = sbr.rel (%p5101) target = $region60
        $region59: #{tpu_custom_call.1} parent=55 // pred_region
          %s5105 = ssub.s32 32, 32
          %5106 = vsyncadd %s5097, %s5105
          %s5107 = smul.addr %s23, 32
          %s5108 = scalar_lea.hbm %s9, %s5107
          %s5110 = sshll.u32 %s5100, 4
          %s5111 = int_to_ptr.vmem [resolvable:$true] %s5110
          %5113 = dma.vmem_to_hbm [thread:$0]  %s5111, 32, %s5108, %s5097
        $region60: #{tpu_custom_call.1} parent=55 // pred_fallthru
          _
      $region56: #{tpu_custom_call.1} parent=5 // pred_fallthru
        _
      %p5114 = scmp.le.s32.totalorder 2, %s18
      // Predicated region
      $region61: #{tpu_custom_call.1} parent=5 // pred_check
        %p5115 = pneg %p5114
      $region62: #{tpu_custom_call.1} parent=5 // pred_check_branch
        %5117 = sbr.rel (%p5115) target = $region64
      $region63: #{tpu_custom_call.1} parent=5 // pred_region
        %s5118 = ssub.s32 %s18, 2
        // Predicated region
        $region65: #{tpu_custom_call.1} parent=63 // pred_check
          %p5119 = pneg %p241
        $region66: #{tpu_custom_call.1} parent=63 // pred_check_branch
          %5121 = sbr.rel (%p5119) target = $region68
        $region67: #{tpu_custom_call.1} parent=63 // pred_region
          %s5122 = sand.u32 %s226, 1
          %s5123 = scalar_lea.sflag [#allocation3], %s5122
          %s5124 = sand.u32 %s226, 1
          %s5125 = smul.addr %s5124, 2
          %s5126 = scalar_lea.vmem [#allocation2], %s5125
          %5127 = dma.done %s5123, 32
        $region68: #{tpu_custom_call.1} parent=63 // pred_fallthru
          _
      $region64: #{tpu_custom_call.1} parent=5 // pred_fallthru
        _
    $region6: #{tpu_custom_call.1} parent=1 // loop_footer
      %s22 = sadd.s32 1, %s18
    $region7: #{tpu_custom_call.1} parent=1 // loop_footer_branch
      %17 = sbr.rel target = $region3
    $region8: #{tpu_custom_call.1} parent=1 // loop_exit
      _
    %5128 = vsyncpa [#allocation3], 1
    %s5129 = scalar_lea.sflag [#allocation3], 1
    %5130 = vsyncpa %s5129, 1

</llo_original>
